<compile_context>
chip_gen: v6e
topology: v6e:2x2x1
jax: 0.10.0
libtpu: 0.0.40
codegen_flags: <defaults>
</compile_context>

<pallas_src>
import functools

import jax
import jax.numpy as jnp
from jax.experimental import pallas as pl
from jax.experimental.pallas import tpu as pltpu

N_BATCH = 2
H = W = 32
C_IN = 3
C1 = 64                 # conv1 output channels
N_POOL = 256            # 16*16 pooled spatial positions
K_PATCH = 32            # 27 (3*3*3) + 1 bias tap, padded up to 32
FC_IN = C1 * N_POOL     # 16384
HIDDEN = 500
HID_PAD = 512           # 500 padded to a lane-dense multiple of 128
HID_HALF = 256          # hidden split for the "parallel" grid axis
N_J = HID_PAD // HID_HALF   # 2  (one half per TensorCore on v7x)
OUT_DIM = 10
CC = 16                 # channels per fc1 K-step  (TK = CC*256 = 4096)
NK = C1 // CC           # 4 K-steps


# ----------------------------------------------------------------------------
# Fused kernel: conv1(matmul) + relu + 2x2 maxpool  (k == 0, into VMEM scratch)
#               fc1 K-partial accumulation          (every k)
#               + bias + leaky_relu + fc2 partial   (k == last)
# Grid = (N_J "parallel" hidden halves, NK "arbitrary" fc1 K-steps).
# ----------------------------------------------------------------------------
def fused_cnn_kernel(pt_ref, wc_ref, w1_ref, b1_ref, w2_ref,
                     o_ref, feats_ref, acc_ref, *, n):
    k = pl.program_id(1)

    @pl.when(k == 0)
    def _():
        acc_ref[...] = jnp.zeros_like(acc_ref)
        # conv1 as channels-major im2col matmul; the 2x2 pool taps live in
        # contiguous 256-column blocks, and bias (ones-row tap) commutes with
        # the max, relu is applied after the max (equivalent since monotonic).
        for b in range(n):                                   # static unroll
            pooled = None
            for wdw in range(4):                             # pool-window taps
                c = jnp.dot(
                    wc_ref[...],
                    pt_ref[:, pl.ds(b * 1024 + wdw * N_POOL, N_POOL)],
                    preferred_element_type=jnp.float32)      # (C1, 256)
                pooled = c if pooled is None else jnp.maximum(pooled, c)
            pooled = jnp.maximum(pooled, 0.0)                # (C1, 256)
            # Store already chunked by the fc1 K-grid (channel-major = NCHW
            # flatten order), so later reads are plain first-axis indexing.
            for kk in range(NK):
                feats_ref[kk, b] = pooled[kk * CC:(kk + 1) * CC, :]

    # fc1 partial: channels [k*CC, (k+1)*CC), hidden half j (via BlockSpec).
    x_chunk = feats_ref[k]                                   # (n, CC, 256)
    acc = acc_ref[...]
    for i in range(CC):                                      # static unroll
        acc = acc + jnp.dot(x_chunk[:, i, :], w1_ref[i],
                            preferred_element_type=jnp.float32)
    acc_ref[...] = acc

    @pl.when(k == pl.num_programs(1) - 1)
    def _():
        h = acc_ref[...] + b1_ref[...]
        h = jnp.where(h > 0.0, h, 0.01 * h)                  # F.leaky_relu
        o_ref[0] = jnp.dot(h, w2_ref[...],
                           preferred_element_type=jnp.float32).astype(o_ref.dtype)


def fused_forward(patches_t, wc, w1r, b1p, w2p, n):
    kernel = functools.partial(fused_cnn_kernel, n=n)
    return pl.pallas_call(
        kernel,
        out_shape=jax.ShapeDtypeStruct((N_J, n, OUT_DIM), jnp.float32),
        grid_spec=pltpu.PrefetchScalarGridSpec(
            num_scalar_prefetch=0,
            grid=(N_J, NK),
            in_specs=[
                pl.BlockSpec((K_PATCH, n * 1024), lambda j, k: (0, 0)),
                pl.BlockSpec((C1, K_PATCH), lambda j, k: (0, 0)),
                pl.BlockSpec((CC, N_POOL, HID_HALF), lambda j, k: (k, 0, j)),
                pl.BlockSpec((1, HID_HALF), lambda j, k: (0, j)),
                pl.BlockSpec((HID_HALF, OUT_DIM), lambda j, k: (j, 0)),
            ],
            out_specs=pl.BlockSpec((1, n, OUT_DIM), lambda j, k: (j, 0, 0)),
            scratch_shapes=[
                pltpu.VMEM((NK, n, CC, N_POOL), jnp.float32),   # pooled feats
                pltpu.VMEM((n, HID_HALF), jnp.float32),         # fc1 accumulator
            ],
        ),
        compiler_params=pltpu.CompilerParams(
            dimension_semantics=("parallel", "arbitrary"),
            vmem_limit_bytes=48 * 1024 * 1024),
    )(patches_t, wc, w1r, b1p, w2p)


# ----------------------------------------------------------------------------
# Glue: transposed im2col patches (pure pad/reshape/transpose) + weight prep.
# ----------------------------------------------------------------------------
def build_patches_t(x):
    """x: (N, 32, 32, 3) NHWC -> (K_PATCH, N*1024) transposed im2col patches.

    Row r < 27 holds xpad[b, h+kh, w+kw, ci] with r = ci*9 + kh*3 + kw
    (matches PyTorch Conv2d weight flattening); row 27 is all-ones (bias tap);
    rows 28..31 are zero padding.
    Column = b*1024 + window*256 + (ph*16 + pw), window = (h%2)*2 + (w%2),
    so each 2x2 pool window's taps sit in contiguous 256-column blocks.
    """
    n = x.shape[0]
    xp = jnp.pad(x, ((0, 0), (1, 1), (1, 1), (0, 0)))
    taps = [xp[:, kh:kh + H, kw:kw + W, :] for kh in range(3) for kw in range(3)]
    p = jnp.stack(taps, axis=-1)                          # (n, 32, 32, 3, 9)
    p = p.reshape(n, H, W, 27)                            # col = ci*9+kh*3+kw
    p = p.reshape(n, 16, 2, 16, 2, 27).transpose(0, 2, 4, 1, 3, 5)
    p = p.reshape(n * 1024, 27).T                         # (27, n*1024)
    ones = jnp.ones((1, n * 1024), p.dtype)
    zeros = jnp.zeros((K_PATCH - 28, n * 1024), p.dtype)
    return jnp.concatenate([p, ones, zeros], axis=0)      # (32, n*1024)


def prepare_params(conv_w, conv_b, fc1_w, fc1_b, fc2_w, fc2_b):
    """One-time weight re-layout (run eagerly, outside the jitted forward)."""
    # conv: (Cout, Cin, 3, 3) -> (Cout, K_PATCH), bias folded into column 27.
    wc = conv_w.reshape(C1, 27)
    wc = jnp.concatenate(
        [wc, conv_b.reshape(C1, 1), jnp.zeros((C1, K_PATCH - 28), conv_w.dtype)],
        axis=1)
    # fc1: fold the NCHW flatten (idx = c*256 + p) into the weight layout.
    w1r = fc1_w.reshape(HIDDEN, C1, N_POOL).transpose(1, 2, 0)   # (C1,256,500)
    w1r = jnp.pad(w1r, ((0, 0), (0, 0), (0, HID_PAD - HIDDEN)))  # (C1,256,512)
    b1p = jnp.pad(fc1_b, (0, HID_PAD - HIDDEN)).reshape(1, HID_PAD)
    # fc2: (OUT, HIDDEN) -> (HID_PAD, OUT); padded rows are zero (inert).
    w2p = jnp.pad(fc2_w.T, ((0, HID_PAD - HIDDEN), (0, 0)))
    return wc, w1r, b1p, w2p, fc2_b


@jax.jit
def cnn_forward(x, wc, w1r, b1p, w2p, fc2_b):
    n = x.shape[0]
    patches_t = build_patches_t(x)
    # TODO(synk): dropout(0.5) is identity here (eval-mode semantics).
    partials = fused_forward(patches_t, wc, w1r, b1p, w2p, n)   # (N_J, n, OUT)
    return partials.sum(axis=0) + fc2_b.reshape(1, OUT_DIM)


def reference_forward(x, conv_w, conv_b, fc1_w, fc1_b, fc2_w, fc2_b):
    n = x.shape[0]
    w_hwio = jnp.transpose(conv_w, (2, 3, 1, 0))
    y = jax.lax.conv_general_dilated(
        x, w_hwio, window_strides=(1, 1), padding=((1, 1), (1, 1)),
        dimension_numbers=("NHWC", "HWIO", "NHWC"))
    y = jnp.maximum(y + conv_b, 0.0)
    y = y.reshape(n, 16, 2, 16, 2, C1).max(axis=(2, 4))          # (N,16,16,64)
    f = jnp.transpose(y, (0, 3, 1, 2)).reshape(n, FC_IN)
    h = f @ fc1_w.T + fc1_b
    h = jnp.where(h > 0, h, 0.01 * h)
    return h @ fc2_w.T + fc2_b


if __name__ == "__main__":
    key = jax.random.PRNGKey(0)
    kx, k1, k2, k3, k4, k5, k6 = jax.random.split(key, 7)

    # spatial must be 32x32x3 so that 64*16*16 matches the fc1 reshape
    x = jax.random.normal(kx, (N_BATCH, H, W, C_IN), jnp.float32)

    conv_w = jax.random.normal(k1, (C1, C_IN, 3, 3), jnp.float32) * 0.1
    conv_b = jax.random.normal(k2, (C1,), jnp.float32) * 0.1
    fc1_w = jax.random.normal(k3, (HIDDEN, FC_IN), jnp.float32) * 0.02
    fc1_b = jax.random.normal(k4, (HIDDEN,), jnp.float32) * 0.02
    fc2_w = jax.random.normal(k5, (OUT_DIM, HIDDEN), jnp.float32) * 0.05
    fc2_b = jax.random.normal(k6, (OUT_DIM,), jnp.float32) * 0.05

    params = prepare_params(conv_w, conv_b, fc1_w, fc1_b, fc2_w, fc2_b)
    out = jax.block_until_ready(cnn_forward(x, *params))

    ref = jax.block_until_ready(
        reference_forward(x, conv_w, conv_b, fc1_w, fc1_b, fc2_w, fc2_b))

    assert out.shape == (N_BATCH, OUT_DIM), out.shape
    assert jnp.allclose(out, ref, rtol=1e-3, atol=1e-3), (
        f"max abs diff {jnp.max(jnp.abs(out - ref))}")

    print("KERNEL_OK")
</pallas_src>

<mosaic_0001>
module attributes {stable_mosaic.version = 11 : i64} {
  func.func @fused_cnn_kernel(%arg0: i32, %arg1: i32, %arg2: memref<32x2048xf32, #tpu.memory_space<vmem>>, %arg3: memref<64x32xf32, #tpu.memory_space<vmem>>, %arg4: memref<16x256x256xf32, #tpu.memory_space<vmem>>, %arg5: memref<1x256xf32, #tpu.memory_space<vmem>>, %arg6: memref<256x10xf32, #tpu.memory_space<vmem>>, %arg7: memref<1x2x10xf32, #tpu.memory_space<vmem>>, %arg8: memref<4x2x16x256xf32, #tpu.memory_space<vmem>>, %arg9: memref<2x256xf32, #tpu.memory_space<vmem>>) attributes {dimension_semantics = [#tpu.dimension_semantics<parallel>, #tpu.dimension_semantics<arbitrary>], iteration_bounds = array<i64: 2, 4>, scalar_prefetch = 0 : i64, scratch_operands = 2 : i64, tpu.core_type = #tpu.core_type<tc>, window_params = [{pipeline_mode = #tpu.pipeline_mode<synchronous>, transform_indices = @transform_0, window_bounds = array<i64: 32, 2048>}, {pipeline_mode = #tpu.pipeline_mode<synchronous>, transform_indices = @transform_1, window_bounds = array<i64: 64, 32>}, {transform_indices = @transform_2, window_bounds = array<i64: 16, 256, 256>}, {transform_indices = @transform_3, window_bounds = array<i64: 1, 256>}, {transform_indices = @transform_4, window_bounds = array<i64: 256, 10>}, {transform_indices = @transform_5, window_bounds = array<i64: 1, 2, 10>}]} {
    %c0_i32 = arith.constant 0 : i32
    %0 = arith.cmpi eq, %arg1, %c0_i32 : i32
    %1 = arith.extui %0 : i1 to i32
    %c0_i32_0 = arith.constant 0 : i32
    %2 = arith.cmpi ne, %1, %c0_i32_0 : i32
    scf.if %2 {
      %cst_56 = arith.constant 0.000000e+00 : f32
      %107 = vector.broadcast %cst_56 : f32 to vector<2x256xf32>
      %c0_57 = arith.constant 0 : index
      %c0_58 = arith.constant 0 : index
      %108 = vector.load %arg9[%c0_57, %c0_58] : memref<2x256xf32, #tpu.memory_space<vmem>>, vector<2x256xf32>
      tpu.vector_store %arg9[%c0_57, %c0_58], %107 {strides = array<i32>} : memref<2x256xf32, #tpu.memory_space<vmem>>, vector<2x256xf32>,
      %c0_59 = arith.constant 0 : index
      %c0_60 = arith.constant 0 : index
      %109 = vector.load %arg3[%c0_59, %c0_60] : memref<64x32xf32, #tpu.memory_space<vmem>>, vector<64x32xf32>
      %c0_61 = arith.constant 0 : index
      %c0_62 = arith.constant 0 : index
      %110 = vector.load %arg2[%c0_61, %c0_62] : memref<32x2048xf32, #tpu.memory_space<vmem>>, vector<32x256xf32>
      %cst_63 = arith.constant dense<0.000000e+00> : vector<64x256xf32>
      %111 = tpu.matmul %109, %110, %cst_63 {dimension_numbers = #tpu.dot_dimension_numbers<[1], [0], [0], [1], [0, 0, 1, 1], [], []>} : vector<64x32xf32>, vector<32x256xf32>, vector<64x256xf32> -> vector<64x256xf32>
      %c0_64 = arith.constant 0 : index
      %c0_65 = arith.constant 0 : index
      %112 = vector.load %arg3[%c0_64, %c0_65] : memref<64x32xf32, #tpu.memory_space<vmem>>, vector<64x32xf32>
      %c0_66 = arith.constant 0 : index
      %c256 = arith.constant 256 : index
      %113 = vector.load %arg2[%c0_66, %c256] : memref<32x2048xf32, #tpu.memory_space<vmem>>, vector<32x256xf32>
      %cst_67 = arith.constant dense<0.000000e+00> : vector<64x256xf32>
      %114 = tpu.matmul %112, %113, %cst_67 {dimension_numbers = #tpu.dot_dimension_numbers<[1], [0], [0], [1], [0, 0, 1, 1], [], []>} : vector<64x32xf32>, vector<32x256xf32>, vector<64x256xf32> -> vector<64x256xf32>
      %115 = arith.maximumf %111, %114 : vector<64x256xf32>
      %c0_68 = arith.constant 0 : index
      %c0_69 = arith.constant 0 : index
      %116 = vector.load %arg3[%c0_68, %c0_69] : memref<64x32xf32, #tpu.memory_space<vmem>>, vector<64x32xf32>
      %c0_70 = arith.constant 0 : index
      %c512 = arith.constant 512 : index
      %117 = vector.load %arg2[%c0_70, %c512] : memref<32x2048xf32, #tpu.memory_space<vmem>>, vector<32x256xf32>
      %cst_71 = arith.constant dense<0.000000e+00> : vector<64x256xf32>
      %118 = tpu.matmul %116, %117, %cst_71 {dimension_numbers = #tpu.dot_dimension_numbers<[1], [0], [0], [1], [0, 0, 1, 1], [], []>} : vector<64x32xf32>, vector<32x256xf32>, vector<64x256xf32> -> vector<64x256xf32>
      %119 = arith.maximumf %115, %118 : vector<64x256xf32>
      %c0_72 = arith.constant 0 : index
      %c0_73 = arith.constant 0 : index
      %120 = vector.load %arg3[%c0_72, %c0_73] : memref<64x32xf32, #tpu.memory_space<vmem>>, vector<64x32xf32>
      %c0_74 = arith.constant 0 : index
      %c768 = arith.constant 768 : index
      %121 = vector.load %arg2[%c0_74, %c768] : memref<32x2048xf32, #tpu.memory_space<vmem>>, vector<32x256xf32>
      %cst_75 = arith.constant dense<0.000000e+00> : vector<64x256xf32>
      %122 = tpu.matmul %120, %121, %cst_75 {dimension_numbers = #tpu.dot_dimension_numbers<[1], [0], [0], [1], [0, 0, 1, 1], [], []>} : vector<64x32xf32>, vector<32x256xf32>, vector<64x256xf32> -> vector<64x256xf32>
      %123 = arith.maximumf %119, %122 : vector<64x256xf32>
      %cst_76 = arith.constant 0.000000e+00 : f32
      %124 = vector.broadcast %cst_76 : f32 to vector<64x256xf32>
      %125 = arith.maximumf %123, %124 : vector<64x256xf32>
      %126 = vector.extract_strided_slice %125 {offsets = [0, 0], sizes = [16, 256], strides = [1, 1]} : vector<64x256xf32> to vector<16x256xf32>
      %c0_77 = arith.constant 0 : index
      %c0_78 = arith.constant 0 : index
      %c0_79 = arith.constant 0 : index
      %c0_80 = arith.constant 0 : index
      %127 = vector.load %arg8[%c0_77, %c0_78, %c0_79, %c0_80] : memref<4x2x16x256xf32, #tpu.memory_space<vmem>>, vector<1x1x16x256xf32>
      %128 = vector.shape_cast %127 : vector<1x1x16x256xf32> to vector<16x256xf32>
      %129 = vector.shape_cast %126 : vector<16x256xf32> to vector<1x1x16x256xf32>
      tpu.vector_store %arg8[%c0_77, %c0_78, %c0_79, %c0_80], %129 {strides = array<i32>} : memref<4x2x16x256xf32, #tpu.memory_space<vmem>>, vector<1x1x16x256xf32>,
      %130 = vector.extract_strided_slice %125 {offsets = [16, 0], sizes = [16, 256], strides = [1, 1]} : vector<64x256xf32> to vector<16x256xf32>
      %c1_81 = arith.constant 1 : index
      %c0_82 = arith.constant 0 : index
      %c0_83 = arith.constant 0 : index
      %c0_84 = arith.constant 0 : index
      %131 = vector.load %arg8[%c1_81, %c0_82, %c0_83, %c0_84] : memref<4x2x16x256xf32, #tpu.memory_space<vmem>>, vector<1x1x16x256xf32>
      %132 = vector.shape_cast %131 : vector<1x1x16x256xf32> to vector<16x256xf32>
      %133 = vector.shape_cast %130 : vector<16x256xf32> to vector<1x1x16x256xf32>
      tpu.vector_store %arg8[%c1_81, %c0_82, %c0_83, %c0_84], %133 {strides = array<i32>} : memref<4x2x16x256xf32, #tpu.memory_space<vmem>>, vector<1x1x16x256xf32>,
      %134 = vector.extract_strided_slice %125 {offsets = [32, 0], sizes = [16, 256], strides = [1, 1]} : vector<64x256xf32> to vector<16x256xf32>
      %c2_85 = arith.constant 2 : index
      %c0_86 = arith.constant 0 : index
      %c0_87 = arith.constant 0 : index
      %c0_88 = arith.constant 0 : index
      %135 = vector.load %arg8[%c2_85, %c0_86, %c0_87, %c0_88] : memref<4x2x16x256xf32, #tpu.memory_space<vmem>>, vector<1x1x16x256xf32>
      %136 = vector.shape_cast %135 : vector<1x1x16x256xf32> to vector<16x256xf32>
      %137 = vector.shape_cast %134 : vector<16x256xf32> to vector<1x1x16x256xf32>
      tpu.vector_store %arg8[%c2_85, %c0_86, %c0_87, %c0_88], %137 {strides = array<i32>} : memref<4x2x16x256xf32, #tpu.memory_space<vmem>>, vector<1x1x16x256xf32>,
      %138 = vector.extract_strided_slice %125 {offsets = [48, 0], sizes = [16, 256], strides = [1, 1]} : vector<64x256xf32> to vector<16x256xf32>
      %c3_89 = arith.constant 3 : index
      %c0_90 = arith.constant 0 : index
      %c0_91 = arith.constant 0 : index
      %c0_92 = arith.constant 0 : index
      %139 = vector.load %arg8[%c3_89, %c0_90, %c0_91, %c0_92] : memref<4x2x16x256xf32, #tpu.memory_space<vmem>>, vector<1x1x16x256xf32>
      %140 = vector.shape_cast %139 : vector<1x1x16x256xf32> to vector<16x256xf32>
      %141 = vector.shape_cast %138 : vector<16x256xf32> to vector<1x1x16x256xf32>
      tpu.vector_store %arg8[%c3_89, %c0_90, %c0_91, %c0_92], %141 {strides = array<i32>} : memref<4x2x16x256xf32, #tpu.memory_space<vmem>>, vector<1x1x16x256xf32>,
      %c0_93 = arith.constant 0 : index
      %c0_94 = arith.constant 0 : index
      %142 = vector.load %arg3[%c0_93, %c0_94] : memref<64x32xf32, #tpu.memory_space<vmem>>, vector<64x32xf32>
      %c0_95 = arith.constant 0 : index
      %c1024 = arith.constant 1024 : index
      %143 = vector.load %arg2[%c0_95, %c1024] : memref<32x2048xf32, #tpu.memory_space<vmem>>, vector<32x256xf32>
      %cst_96 = arith.constant dense<0.000000e+00> : vector<64x256xf32>
      %144 = tpu.matmul %142, %143, %cst_96 {dimension_numbers = #tpu.dot_dimension_numbers<[1], [0], [0], [1], [0, 0, 1, 1], [], []>} : vector<64x32xf32>, vector<32x256xf32>, vector<64x256xf32> -> vector<64x256xf32>
      %c0_97 = arith.constant 0 : index
      %c0_98 = arith.constant 0 : index
      %145 = vector.load %arg3[%c0_97, %c0_98] : memref<64x32xf32, #tpu.memory_space<vmem>>, vector<64x32xf32>
      %c0_99 = arith.constant 0 : index
      %c1280 = arith.constant 1280 : index
      %146 = vector.load %arg2[%c0_99, %c1280] : memref<32x2048xf32, #tpu.memory_space<vmem>>, vector<32x256xf32>
      %cst_100 = arith.constant dense<0.000000e+00> : vector<64x256xf32>
      %147 = tpu.matmul %145, %146, %cst_100 {dimension_numbers = #tpu.dot_dimension_numbers<[1], [0], [0], [1], [0, 0, 1, 1], [], []>} : vector<64x32xf32>, vector<32x256xf32>, vector<64x256xf32> -> vector<64x256xf32>
      %148 = arith.maximumf %144, %147 : vector<64x256xf32>
      %c0_101 = arith.constant 0 : index
      %c0_102 = arith.constant 0 : index
      %149 = vector.load %arg3[%c0_101, %c0_102] : memref<64x32xf32, #tpu.memory_space<vmem>>, vector<64x32xf32>
      %c0_103 = arith.constant 0 : index
      %c1536 = arith.constant 1536 : index
      %150 = vector.load %arg2[%c0_103, %c1536] : memref<32x2048xf32, #tpu.memory_space<vmem>>, vector<32x256xf32>
      %cst_104 = arith.constant dense<0.000000e+00> : vector<64x256xf32>
      %151 = tpu.matmul %149, %150, %cst_104 {dimension_numbers = #tpu.dot_dimension_numbers<[1], [0], [0], [1], [0, 0, 1, 1], [], []>} : vector<64x32xf32>, vector<32x256xf32>, vector<64x256xf32> -> vector<64x256xf32>
      %152 = arith.maximumf %148, %151 : vector<64x256xf32>
      %c0_105 = arith.constant 0 : index
      %c0_106 = arith.constant 0 : index
      %153 = vector.load %arg3[%c0_105, %c0_106] : memref<64x32xf32, #tpu.memory_space<vmem>>, vector<64x32xf32>
      %c0_107 = arith.constant 0 : index
      %c1792 = arith.constant 1792 : index
      %154 = vector.load %arg2[%c0_107, %c1792] : memref<32x2048xf32, #tpu.memory_space<vmem>>, vector<32x256xf32>
      %cst_108 = arith.constant dense<0.000000e+00> : vector<64x256xf32>
      %155 = tpu.matmul %153, %154, %cst_108 {dimension_numbers = #tpu.dot_dimension_numbers<[1], [0], [0], [1], [0, 0, 1, 1], [], []>} : vector<64x32xf32>, vector<32x256xf32>, vector<64x256xf32> -> vector<64x256xf32>
      %156 = arith.maximumf %152, %155 : vector<64x256xf32>
      %cst_109 = arith.constant 0.000000e+00 : f32
      %157 = vector.broadcast %cst_109 : f32 to vector<64x256xf32>
      %158 = arith.maximumf %156, %157 : vector<64x256xf32>
      %159 = vector.extract_strided_slice %158 {offsets = [0, 0], sizes = [16, 256], strides = [1, 1]} : vector<64x256xf32> to vector<16x256xf32>
      %c0_110 = arith.constant 0 : index
      %c1_111 = arith.constant 1 : index
      %c0_112 = arith.constant 0 : index
      %c0_113 = arith.constant 0 : index
      %160 = vector.load %arg8[%c0_110, %c1_111, %c0_112, %c0_113] : memref<4x2x16x256xf32, #tpu.memory_space<vmem>>, vector<1x1x16x256xf32>
      %161 = vector.shape_cast %160 : vector<1x1x16x256xf32> to vector<16x256xf32>
      %162 = vector.shape_cast %159 : vector<16x256xf32> to vector<1x1x16x256xf32>
      tpu.vector_store %arg8[%c0_110, %c1_111, %c0_112, %c0_113], %162 {strides = array<i32>} : memref<4x2x16x256xf32, #tpu.memory_space<vmem>>, vector<1x1x16x256xf32>,
      %163 = vector.extract_strided_slice %158 {offsets = [16, 0], sizes = [16, 256], strides = [1, 1]} : vector<64x256xf32> to vector<16x256xf32>
      %c1_114 = arith.constant 1 : index
      %c1_115 = arith.constant 1 : index
      %c0_116 = arith.constant 0 : index
      %c0_117 = arith.constant 0 : index
      %164 = vector.load %arg8[%c1_114, %c1_115, %c0_116, %c0_117] : memref<4x2x16x256xf32, #tpu.memory_space<vmem>>, vector<1x1x16x256xf32>
      %165 = vector.shape_cast %164 : vector<1x1x16x256xf32> to vector<16x256xf32>
      %166 = vector.shape_cast %163 : vector<16x256xf32> to vector<1x1x16x256xf32>
      tpu.vector_store %arg8[%c1_114, %c1_115, %c0_116, %c0_117], %166 {strides = array<i32>} : memref<4x2x16x256xf32, #tpu.memory_space<vmem>>, vector<1x1x16x256xf32>,
      %167 = vector.extract_strided_slice %158 {offsets = [32, 0], sizes = [16, 256], strides = [1, 1]} : vector<64x256xf32> to vector<16x256xf32>
      %c2_118 = arith.constant 2 : index
      %c1_119 = arith.constant 1 : index
      %c0_120 = arith.constant 0 : index
      %c0_121 = arith.constant 0 : index
      %168 = vector.load %arg8[%c2_118, %c1_119, %c0_120, %c0_121] : memref<4x2x16x256xf32, #tpu.memory_space<vmem>>, vector<1x1x16x256xf32>
      %169 = vector.shape_cast %168 : vector<1x1x16x256xf32> to vector<16x256xf32>
      %170 = vector.shape_cast %167 : vector<16x256xf32> to vector<1x1x16x256xf32>
      tpu.vector_store %arg8[%c2_118, %c1_119, %c0_120, %c0_121], %170 {strides = array<i32>} : memref<4x2x16x256xf32, #tpu.memory_space<vmem>>, vector<1x1x16x256xf32>,
      %171 = vector.extract_strided_slice %158 {offsets = [48, 0], sizes = [16, 256], strides = [1, 1]} : vector<64x256xf32> to vector<16x256xf32>
      %c3_122 = arith.constant 3 : index
      %c1_123 = arith.constant 1 : index
      %c0_124 = arith.constant 0 : index
      %c0_125 = arith.constant 0 : index
      %172 = vector.load %arg8[%c3_122, %c1_123, %c0_124, %c0_125] : memref<4x2x16x256xf32, #tpu.memory_space<vmem>>, vector<1x1x16x256xf32>
      %173 = vector.shape_cast %172 : vector<1x1x16x256xf32> to vector<16x256xf32>
      %174 = vector.shape_cast %171 : vector<16x256xf32> to vector<1x1x16x256xf32>
      tpu.vector_store %arg8[%c3_122, %c1_123, %c0_124, %c0_125], %174 {strides = array<i32>} : memref<4x2x16x256xf32, #tpu.memory_space<vmem>>, vector<1x1x16x256xf32>,
    } else {
    }
    %3 = arith.index_cast %arg1 : i32 to index
    %c0 = arith.constant 0 : index
    %c0_1 = arith.constant 0 : index
    %c0_2 = arith.constant 0 : index
    %4 = vector.load %arg8[%3, %c0, %c0_1, %c0_2] : memref<4x2x16x256xf32, #tpu.memory_space<vmem>>, vector<1x2x16x256xf32>
    %5 = vector.shape_cast %4 : vector<1x2x16x256xf32> to vector<2x16x256xf32>
    %c0_3 = arith.constant 0 : index
    %c0_4 = arith.constant 0 : index
    %6 = vector.load %arg9[%c0_3, %c0_4] : memref<2x256xf32, #tpu.memory_space<vmem>>, vector<2x256xf32>
    %7 = vector.extract_strided_slice %5 {offsets = [0, 0, 0], sizes = [2, 1, 256], strides = [1, 1, 1]} : vector<2x16x256xf32> to vector<2x1x256xf32>
    %8 = vector.shape_cast %7 : vector<2x1x256xf32> to vector<2x256xf32>
    %c0_5 = arith.constant 0 : index
    %c0_6 = arith.constant 0 : index
    %c0_7 = arith.constant 0 : index
    %9 = vector.load %arg4[%c0_5, %c0_6, %c0_7] : memref<16x256x256xf32, #tpu.memory_space<vmem>>, vector<1x256x256xf32>
    %10 = vector.shape_cast %9 : vector<1x256x256xf32> to vector<256x256xf32>
    %cst = arith.constant dense<0.000000e+00> : vector<2x256xf32>
    %11 = tpu.matmul %8, %10, %cst {dimension_numbers = #tpu.dot_dimension_numbers<[1], [0], [0], [1], [0, 0, 1, 1], [], []>} : vector<2x256xf32>, vector<256x256xf32>, vector<2x256xf32> -> vector<2x256xf32>
    %12 = arith.addf %6, %11 : vector<2x256xf32>
    %13 = vector.extract_strided_slice %5 {offsets = [0, 1, 0], sizes = [2, 1, 256], strides = [1, 1, 1]} : vector<2x16x256xf32> to vector<2x1x256xf32>
    %14 = vector.shape_cast %13 : vector<2x1x256xf32> to vector<2x256xf32>
    %c1 = arith.constant 1 : index
    %c0_8 = arith.constant 0 : index
    %c0_9 = arith.constant 0 : index
    %15 = vector.load %arg4[%c1, %c0_8, %c0_9] : memref<16x256x256xf32, #tpu.memory_space<vmem>>, vector<1x256x256xf32>
    %16 = vector.shape_cast %15 : vector<1x256x256xf32> to vector<256x256xf32>
    %cst_10 = arith.constant dense<0.000000e+00> : vector<2x256xf32>
    %17 = tpu.matmul %14, %16, %cst_10 {dimension_numbers = #tpu.dot_dimension_numbers<[1], [0], [0], [1], [0, 0, 1, 1], [], []>} : vector<2x256xf32>, vector<256x256xf32>, vector<2x256xf32> -> vector<2x256xf32>
    %18 = arith.addf %12, %17 : vector<2x256xf32>
    %19 = vector.extract_strided_slice %5 {offsets = [0, 2, 0], sizes = [2, 1, 256], strides = [1, 1, 1]} : vector<2x16x256xf32> to vector<2x1x256xf32>
    %20 = vector.shape_cast %19 : vector<2x1x256xf32> to vector<2x256xf32>
    %c2 = arith.constant 2 : index
    %c0_11 = arith.constant 0 : index
    %c0_12 = arith.constant 0 : index
    %21 = vector.load %arg4[%c2, %c0_11, %c0_12] : memref<16x256x256xf32, #tpu.memory_space<vmem>>, vector<1x256x256xf32>
    %22 = vector.shape_cast %21 : vector<1x256x256xf32> to vector<256x256xf32>
    %cst_13 = arith.constant dense<0.000000e+00> : vector<2x256xf32>
    %23 = tpu.matmul %20, %22, %cst_13 {dimension_numbers = #tpu.dot_dimension_numbers<[1], [0], [0], [1], [0, 0, 1, 1], [], []>} : vector<2x256xf32>, vector<256x256xf32>, vector<2x256xf32> -> vector<2x256xf32>
    %24 = arith.addf %18, %23 : vector<2x256xf32>
    %25 = vector.extract_strided_slice %5 {offsets = [0, 3, 0], sizes = [2, 1, 256], strides = [1, 1, 1]} : vector<2x16x256xf32> to vector<2x1x256xf32>
    %26 = vector.shape_cast %25 : vector<2x1x256xf32> to vector<2x256xf32>
    %c3 = arith.constant 3 : index
    %c0_14 = arith.constant 0 : index
    %c0_15 = arith.constant 0 : index
    %27 = vector.load %arg4[%c3, %c0_14, %c0_15] : memref<16x256x256xf32, #tpu.memory_space<vmem>>, vector<1x256x256xf32>
    %28 = vector.shape_cast %27 : vector<1x256x256xf32> to vector<256x256xf32>
    %cst_16 = arith.constant dense<0.000000e+00> : vector<2x256xf32>
    %29 = tpu.matmul %26, %28, %cst_16 {dimension_numbers = #tpu.dot_dimension_numbers<[1], [0], [0], [1], [0, 0, 1, 1], [], []>} : vector<2x256xf32>, vector<256x256xf32>, vector<2x256xf32> -> vector<2x256xf32>
    %30 = arith.addf %24, %29 : vector<2x256xf32>
    %31 = vector.extract_strided_slice %5 {offsets = [0, 4, 0], sizes = [2, 1, 256], strides = [1, 1, 1]} : vector<2x16x256xf32> to vector<2x1x256xf32>
    %32 = vector.shape_cast %31 : vector<2x1x256xf32> to vector<2x256xf32>
    %c4 = arith.constant 4 : index
    %c0_17 = arith.constant 0 : index
    %c0_18 = arith.constant 0 : index
    %33 = vector.load %arg4[%c4, %c0_17, %c0_18] : memref<16x256x256xf32, #tpu.memory_space<vmem>>, vector<1x256x256xf32>
    %34 = vector.shape_cast %33 : vector<1x256x256xf32> to vector<256x256xf32>
    %cst_19 = arith.constant dense<0.000000e+00> : vector<2x256xf32>
    %35 = tpu.matmul %32, %34, %cst_19 {dimension_numbers = #tpu.dot_dimension_numbers<[1], [0], [0], [1], [0, 0, 1, 1], [], []>} : vector<2x256xf32>, vector<256x256xf32>, vector<2x256xf32> -> vector<2x256xf32>
    %36 = arith.addf %30, %35 : vector<2x256xf32>
    %37 = vector.extract_strided_slice %5 {offsets = [0, 5, 0], sizes = [2, 1, 256], strides = [1, 1, 1]} : vector<2x16x256xf32> to vector<2x1x256xf32>
    %38 = vector.shape_cast %37 : vector<2x1x256xf32> to vector<2x256xf32>
    %c5 = arith.constant 5 : index
    %c0_20 = arith.constant 0 : index
    %c0_21 = arith.constant 0 : index
    %39 = vector.load %arg4[%c5, %c0_20, %c0_21] : memref<16x256x256xf32, #tpu.memory_space<vmem>>, vector<1x256x256xf32>
    %40 = vector.shape_cast %39 : vector<1x256x256xf32> to vector<256x256xf32>
    %cst_22 = arith.constant dense<0.000000e+00> : vector<2x256xf32>
    %41 = tpu.matmul %38, %40, %cst_22 {dimension_numbers = #tpu.dot_dimension_numbers<[1], [0], [0], [1], [0, 0, 1, 1], [], []>} : vector<2x256xf32>, vector<256x256xf32>, vector<2x256xf32> -> vector<2x256xf32>
    %42 = arith.addf %36, %41 : vector<2x256xf32>
    %43 = vector.extract_strided_slice %5 {offsets = [0, 6, 0], sizes = [2, 1, 256], strides = [1, 1, 1]} : vector<2x16x256xf32> to vector<2x1x256xf32>
    %44 = vector.shape_cast %43 : vector<2x1x256xf32> to vector<2x256xf32>
    %c6 = arith.constant 6 : index
    %c0_23 = arith.constant 0 : index
    %c0_24 = arith.constant 0 : index
    %45 = vector.load %arg4[%c6, %c0_23, %c0_24] : memref<16x256x256xf32, #tpu.memory_space<vmem>>, vector<1x256x256xf32>
    %46 = vector.shape_cast %45 : vector<1x256x256xf32> to vector<256x256xf32>
    %cst_25 = arith.constant dense<0.000000e+00> : vector<2x256xf32>
    %47 = tpu.matmul %44, %46, %cst_25 {dimension_numbers = #tpu.dot_dimension_numbers<[1], [0], [0], [1], [0, 0, 1, 1], [], []>} : vector<2x256xf32>, vector<256x256xf32>, vector<2x256xf32> -> vector<2x256xf32>
    %48 = arith.addf %42, %47 : vector<2x256xf32>
    %49 = vector.extract_strided_slice %5 {offsets = [0, 7, 0], sizes = [2, 1, 256], strides = [1, 1, 1]} : vector<2x16x256xf32> to vector<2x1x256xf32>
    %50 = vector.shape_cast %49 : vector<2x1x256xf32> to vector<2x256xf32>
    %c7 = arith.constant 7 : index
    %c0_26 = arith.constant 0 : index
    %c0_27 = arith.constant 0 : index
    %51 = vector.load %arg4[%c7, %c0_26, %c0_27] : memref<16x256x256xf32, #tpu.memory_space<vmem>>, vector<1x256x256xf32>
    %52 = vector.shape_cast %51 : vector<1x256x256xf32> to vector<256x256xf32>
    %cst_28 = arith.constant dense<0.000000e+00> : vector<2x256xf32>
    %53 = tpu.matmul %50, %52, %cst_28 {dimension_numbers = #tpu.dot_dimension_numbers<[1], [0], [0], [1], [0, 0, 1, 1], [], []>} : vector<2x256xf32>, vector<256x256xf32>, vector<2x256xf32> -> vector<2x256xf32>
    %54 = arith.addf %48, %53 : vector<2x256xf32>
    %55 = vector.extract_strided_slice %5 {offsets = [0, 8, 0], sizes = [2, 1, 256], strides = [1, 1, 1]} : vector<2x16x256xf32> to vector<2x1x256xf32>
    %56 = vector.shape_cast %55 : vector<2x1x256xf32> to vector<2x256xf32>
    %c8 = arith.constant 8 : index
    %c0_29 = arith.constant 0 : index
    %c0_30 = arith.constant 0 : index
    %57 = vector.load %arg4[%c8, %c0_29, %c0_30] : memref<16x256x256xf32, #tpu.memory_space<vmem>>, vector<1x256x256xf32>
    %58 = vector.shape_cast %57 : vector<1x256x256xf32> to vector<256x256xf32>
    %cst_31 = arith.constant dense<0.000000e+00> : vector<2x256xf32>
    %59 = tpu.matmul %56, %58, %cst_31 {dimension_numbers = #tpu.dot_dimension_numbers<[1], [0], [0], [1], [0, 0, 1, 1], [], []>} : vector<2x256xf32>, vector<256x256xf32>, vector<2x256xf32> -> vector<2x256xf32>
    %60 = arith.addf %54, %59 : vector<2x256xf32>
    %61 = vector.extract_strided_slice %5 {offsets = [0, 9, 0], sizes = [2, 1, 256], strides = [1, 1, 1]} : vector<2x16x256xf32> to vector<2x1x256xf32>
    %62 = vector.shape_cast %61 : vector<2x1x256xf32> to vector<2x256xf32>
    %c9 = arith.constant 9 : index
    %c0_32 = arith.constant 0 : index
    %c0_33 = arith.constant 0 : index
    %63 = vector.load %arg4[%c9, %c0_32, %c0_33] : memref<16x256x256xf32, #tpu.memory_space<vmem>>, vector<1x256x256xf32>
    %64 = vector.shape_cast %63 : vector<1x256x256xf32> to vector<256x256xf32>
    %cst_34 = arith.constant dense<0.000000e+00> : vector<2x256xf32>
    %65 = tpu.matmul %62, %64, %cst_34 {dimension_numbers = #tpu.dot_dimension_numbers<[1], [0], [0], [1], [0, 0, 1, 1], [], []>} : vector<2x256xf32>, vector<256x256xf32>, vector<2x256xf32> -> vector<2x256xf32>
    %66 = arith.addf %60, %65 : vector<2x256xf32>
    %67 = vector.extract_strided_slice %5 {offsets = [0, 10, 0], sizes = [2, 1, 256], strides = [1, 1, 1]} : vector<2x16x256xf32> to vector<2x1x256xf32>
    %68 = vector.shape_cast %67 : vector<2x1x256xf32> to vector<2x256xf32>
    %c10 = arith.constant 10 : index
    %c0_35 = arith.constant 0 : index
    %c0_36 = arith.constant 0 : index
    %69 = vector.load %arg4[%c10, %c0_35, %c0_36] : memref<16x256x256xf32, #tpu.memory_space<vmem>>, vector<1x256x256xf32>
    %70 = vector.shape_cast %69 : vector<1x256x256xf32> to vector<256x256xf32>
    %cst_37 = arith.constant dense<0.000000e+00> : vector<2x256xf32>
    %71 = tpu.matmul %68, %70, %cst_37 {dimension_numbers = #tpu.dot_dimension_numbers<[1], [0], [0], [1], [0, 0, 1, 1], [], []>} : vector<2x256xf32>, vector<256x256xf32>, vector<2x256xf32> -> vector<2x256xf32>
    %72 = arith.addf %66, %71 : vector<2x256xf32>
    %73 = vector.extract_strided_slice %5 {offsets = [0, 11, 0], sizes = [2, 1, 256], strides = [1, 1, 1]} : vector<2x16x256xf32> to vector<2x1x256xf32>
    %74 = vector.shape_cast %73 : vector<2x1x256xf32> to vector<2x256xf32>
    %c11 = arith.constant 11 : index
    %c0_38 = arith.constant 0 : index
    %c0_39 = arith.constant 0 : index
    %75 = vector.load %arg4[%c11, %c0_38, %c0_39] : memref<16x256x256xf32, #tpu.memory_space<vmem>>, vector<1x256x256xf32>
    %76 = vector.shape_cast %75 : vector<1x256x256xf32> to vector<256x256xf32>
    %cst_40 = arith.constant dense<0.000000e+00> : vector<2x256xf32>
    %77 = tpu.matmul %74, %76, %cst_40 {dimension_numbers = #tpu.dot_dimension_numbers<[1], [0], [0], [1], [0, 0, 1, 1], [], []>} : vector<2x256xf32>, vector<256x256xf32>, vector<2x256xf32> -> vector<2x256xf32>
    %78 = arith.addf %72, %77 : vector<2x256xf32>
    %79 = vector.extract_strided_slice %5 {offsets = [0, 12, 0], sizes = [2, 1, 256], strides = [1, 1, 1]} : vector<2x16x256xf32> to vector<2x1x256xf32>
    %80 = vector.shape_cast %79 : vector<2x1x256xf32> to vector<2x256xf32>
    %c12 = arith.constant 12 : index
    %c0_41 = arith.constant 0 : index
    %c0_42 = arith.constant 0 : index
    %81 = vector.load %arg4[%c12, %c0_41, %c0_42] : memref<16x256x256xf32, #tpu.memory_space<vmem>>, vector<1x256x256xf32>
    %82 = vector.shape_cast %81 : vector<1x256x256xf32> to vector<256x256xf32>
    %cst_43 = arith.constant dense<0.000000e+00> : vector<2x256xf32>
    %83 = tpu.matmul %80, %82, %cst_43 {dimension_numbers = #tpu.dot_dimension_numbers<[1], [0], [0], [1], [0, 0, 1, 1], [], []>} : vector<2x256xf32>, vector<256x256xf32>, vector<2x256xf32> -> vector<2x256xf32>
    %84 = arith.addf %78, %83 : vector<2x256xf32>
    %85 = vector.extract_strided_slice %5 {offsets = [0, 13, 0], sizes = [2, 1, 256], strides = [1, 1, 1]} : vector<2x16x256xf32> to vector<2x1x256xf32>
    %86 = vector.shape_cast %85 : vector<2x1x256xf32> to vector<2x256xf32>
    %c13 = arith.constant 13 : index
    %c0_44 = arith.constant 0 : index
    %c0_45 = arith.constant 0 : index
    %87 = vector.load %arg4[%c13, %c0_44, %c0_45] : memref<16x256x256xf32, #tpu.memory_space<vmem>>, vector<1x256x256xf32>
    %88 = vector.shape_cast %87 : vector<1x256x256xf32> to vector<256x256xf32>
    %cst_46 = arith.constant dense<0.000000e+00> : vector<2x256xf32>
    %89 = tpu.matmul %86, %88, %cst_46 {dimension_numbers = #tpu.dot_dimension_numbers<[1], [0], [0], [1], [0, 0, 1, 1], [], []>} : vector<2x256xf32>, vector<256x256xf32>, vector<2x256xf32> -> vector<2x256xf32>
    %90 = arith.addf %84, %89 : vector<2x256xf32>
    %91 = vector.extract_strided_slice %5 {offsets = [0, 14, 0], sizes = [2, 1, 256], strides = [1, 1, 1]} : vector<2x16x256xf32> to vector<2x1x256xf32>
    %92 = vector.shape_cast %91 : vector<2x1x256xf32> to vector<2x256xf32>
    %c14 = arith.constant 14 : index
    %c0_47 = arith.constant 0 : index
    %c0_48 = arith.constant 0 : index
    %93 = vector.load %arg4[%c14, %c0_47, %c0_48] : memref<16x256x256xf32, #tpu.memory_space<vmem>>, vector<1x256x256xf32>
    %94 = vector.shape_cast %93 : vector<1x256x256xf32> to vector<256x256xf32>
    %cst_49 = arith.constant dense<0.000000e+00> : vector<2x256xf32>
    %95 = tpu.matmul %92, %94, %cst_49 {dimension_numbers = #tpu.dot_dimension_numbers<[1], [0], [0], [1], [0, 0, 1, 1], [], []>} : vector<2x256xf32>, vector<256x256xf32>, vector<2x256xf32> -> vector<2x256xf32>
    %96 = arith.addf %90, %95 : vector<2x256xf32>
    %97 = vector.extract_strided_slice %5 {offsets = [0, 15, 0], sizes = [2, 1, 256], strides = [1, 1, 1]} : vector<2x16x256xf32> to vector<2x1x256xf32>
    %98 = vector.shape_cast %97 : vector<2x1x256xf32> to vector<2x256xf32>
    %c15 = arith.constant 15 : index
    %c0_50 = arith.constant 0 : index
    %c0_51 = arith.constant 0 : index
    %99 = vector.load %arg4[%c15, %c0_50, %c0_51] : memref<16x256x256xf32, #tpu.memory_space<vmem>>, vector<1x256x256xf32>
    %100 = vector.shape_cast %99 : vector<1x256x256xf32> to vector<256x256xf32>
    %cst_52 = arith.constant dense<0.000000e+00> : vector<2x256xf32>
    %101 = tpu.matmul %98, %100, %cst_52 {dimension_numbers = #tpu.dot_dimension_numbers<[1], [0], [0], [1], [0, 0, 1, 1], [], []>} : vector<2x256xf32>, vector<256x256xf32>, vector<2x256xf32> -> vector<2x256xf32>
    %102 = arith.addf %96, %101 : vector<2x256xf32>
    %c0_53 = arith.constant 0 : index
    %c0_54 = arith.constant 0 : index
    %103 = vector.load %arg9[%c0_53, %c0_54] : memref<2x256xf32, #tpu.memory_space<vmem>>, vector<2x256xf32>
    tpu.vector_store %arg9[%c0_53, %c0_54], %102 {strides = array<i32>} : memref<2x256xf32, #tpu.memory_space<vmem>>, vector<2x256xf32>,
    %c3_i32 = arith.constant 3 : i32
    %104 = arith.cmpi eq, %arg1, %c3_i32 : i32
    %105 = arith.extui %104 : i1 to i32
    %c0_i32_55 = arith.constant 0 : i32
    %106 = arith.cmpi ne, %105, %c0_i32_55 : i32
    scf.if %106 {
      %c0_56 = arith.constant 0 : index
      %c0_57 = arith.constant 0 : index
      %107 = vector.load %arg9[%c0_56, %c0_57] : memref<2x256xf32, #tpu.memory_space<vmem>>, vector<2x256xf32>
      %c0_58 = arith.constant 0 : index
      %c0_59 = arith.constant 0 : index
      %108 = vector.load %arg5[%c0_58, %c0_59] : memref<1x256xf32, #tpu.memory_space<vmem>>, vector<1x256xf32>
      %109 = vector.broadcast %108 : vector<1x256xf32> to vector<2x256xf32>
      %110 = arith.addf %107, %109 : vector<2x256xf32>
      %cst_60 = arith.constant 0.000000e+00 : f32
      %111 = vector.broadcast %cst_60 : f32 to vector<2x256xf32>
      %112 = arith.cmpf ogt, %110, %111 : vector<2x256xf32>
      %cst_61 = arith.constant 0.00999999977 : f32
      %113 = vector.broadcast %cst_61 : f32 to vector<2x256xf32>
      %114 = arith.mulf %113, %110 : vector<2x256xf32>
      %115 = arith.select %112, %110, %114 : vector<2x256xi1>, vector<2x256xf32>
      %c0_62 = arith.constant 0 : index
      %c0_63 = arith.constant 0 : index
      %116 = vector.load %arg6[%c0_62, %c0_63] : memref<256x10xf32, #tpu.memory_space<vmem>>, vector<256x10xf32>
      %cst_64 = arith.constant dense<0.000000e+00> : vector<2x10xf32>
      %117 = tpu.matmul %115, %116, %cst_64 {dimension_numbers = #tpu.dot_dimension_numbers<[1], [0], [0], [1], [0, 0, 1, 1], [], []>} : vector<2x256xf32>, vector<256x10xf32>, vector<2x10xf32> -> vector<2x10xf32>
      %c0_65 = arith.constant 0 : index
      %c0_66 = arith.constant 0 : index
      %c0_67 = arith.constant 0 : index
      %118 = vector.load %arg7[%c0_65, %c0_66, %c0_67] : memref<1x2x10xf32, #tpu.memory_space<vmem>>, vector<1x2x10xf32>
      %119 = vector.shape_cast %118 : vector<1x2x10xf32> to vector<2x10xf32>
      %120 = vector.shape_cast %117 : vector<2x10xf32> to vector<1x2x10xf32>
      tpu.vector_store %arg7[%c0_65, %c0_66, %c0_67], %120 {strides = array<i32>} : memref<1x2x10xf32, #tpu.memory_space<vmem>>, vector<1x2x10xf32>,
    } else {
    }
    return
  }
  func.func @transform_0(%arg0: i32, %arg1: i32) -> (i32, i32) {
    %c0_i32 = arith.constant 0 : i32
    %c0_i32_0 = arith.constant 0 : i32
    %c0_i32_1 = arith.constant 0 : i32
    return %c0_i32, %c0_i32_0 : i32, i32
  }
  func.func @transform_1(%arg0: i32, %arg1: i32) -> (i32, i32) {
    %c0_i32 = arith.constant 0 : i32
    %c0_i32_0 = arith.constant 0 : i32
    %c0_i32_1 = arith.constant 0 : i32
    return %c0_i32, %c0_i32_0 : i32, i32
  }
  func.func @transform_2(%arg0: i32, %arg1: i32) -> (i32, i32, i32) {
    %c0_i32 = arith.constant 0 : i32
    %c0_i32_0 = arith.constant 0 : i32
    return %arg1, %c0_i32, %arg0 : i32, i32, i32
  }
  func.func @transform_3(%arg0: i32, %arg1: i32) -> (i32, i32) {
    %c0_i32 = arith.constant 0 : i32
    %c0_i32_0 = arith.constant 0 : i32
    return %c0_i32, %arg0 : i32, i32
  }
  func.func @transform_4(%arg0: i32, %arg1: i32) -> (i32, i32) {
    %c0_i32 = arith.constant 0 : i32
    %c0_i32_0 = arith.constant 0 : i32
    return %arg0, %c0_i32 : i32, i32
  }
  func.func @transform_5(%arg0: i32, %arg1: i32) -> (i32, i32, i32) {
    %c0_i32 = arith.constant 0 : i32
    %c0_i32_0 = arith.constant 0 : i32
    %c0_i32_1 = arith.constant 0 : i32
    return %arg0, %c0_i32, %c0_i32_0 : i32, i32, i32
  }
}

</mosaic_0001>

<llo_original>
// kernel: cnn_forward.1
$region0: #{cnn_forward.1}
  #allocation0 [shape = 'u32[]', space=smem, size = 0x4, offset = 0x4, fixed_abs, tag = 'smem constant byte address 0x4 - core index']
  #allocation1 [shape = 'u32[144,128]{1,0:T(1,128)}', space=vmem, size = 0x12000, scoped, tag = 'internal scratch']
  #allocation2 [shape = 'f32[4,2,16,256]{3,2,1,0:T(8,128)}', space=vmem, size = 0x20000, scoped, tag = 'scratch operand']
  #allocation3 [shape = 'f32[2,256]{1,0:T(2,128)}', space=vmem, size = 0x800, scoped, tag = 'scratch operand']
  %s0 = inlined_call_operand.vmem [shape: f32[32,2048], index: 0, kind: input, shape index: {}]
  %s1 = inlined_call_operand.vmem [shape: f32[64,32], index: 1, kind: input, shape index: {}]
  %s2 = inlined_call_operand.hbm [shape: f32[64,256,512], index: 2, kind: input, shape index: {}]
  %s3 = inlined_call_operand.vmem [shape: f32[1,512], index: 3, kind: input, shape index: {}]
  %s4 = inlined_call_operand.vmem [shape: f32[512,10], index: 4, kind: input, shape index: {}]
  %s5 = inlined_call_operand.vmem [shape: f32[2,2,10], index: 5, kind: output, shape index: {}]
  %s6 = sld [smem:[#allocation0]]
  $region65: #{cnn_forward.1} parent=0
    _
  %s8 = ssub.s32 1, %s6
  %s9 = scalar_select 0, %s8, %s6
  $region1: #{cnn_forward.1} parent=0
    #allocation4 [shape = 'u8[8388608]{0}', space=vmem, size = 0x800000, scoped, tag = 'input window, operand 2']
    #allocation5 [shape = 's32[2]{0}', space=sflag, size = 0x8, scoped, tag = 'scoped memory for cnn_forward.1']
    %10 = vsyncpa [#allocation5], 0
    %s11 = scalar_lea.sflag [#allocation5], 1
    %12 = vsyncpa %s11, 0
    loop: start=0, step=1, limit=10
    $region2: #{cnn_forward.1} parent=1 // loop_pre_header
      _
    $region3: #{cnn_forward.1} parent=1 // loop_header
      %s14 = sphi 0, %s18
      %p15 = scmp.ge.s32.totalorder %s14, 10
      %s21 = sphi 0, %s33
      %s22 = sphi 0, %s29
      %s23 = sphi 0, %s21
      %s24 = sphi 0, %s22
      %s25 = sphi 0, %s23
      %s26 = sphi 0, %s24
      %s34 = sphi 0, %s34
      %s36 = sphi 0, %s34
      %s37 = sphi 0, %s36
      %s51 = sphi 0, %s37
      %s55 = sphi 0, %s55
      %s57 = sphi 0, %s55
      %s58 = sphi 0, %s57
      %s72 = sphi 0, %s58
      %s80 = sphi 0, %s82
      %s83 = sphi 0, %s80
      %s84 = sphi 0, %s83
      %s100 = sphi 0, %s84
      %s106 = sphi 0, %s108
      %s109 = sphi 0, %s106
      %s110 = sphi 0, %s109
      %s126 = sphi 0, %s110
      %s132 = sphi 0, %s134
      %s135 = sphi 0, %s132
      %s136 = sphi 0, %s135
      %s152 = sphi 0, %s136
      %s158 = sphi 0, %s160
      %s161 = sphi 0, %s158
      %s162 = sphi 0, %s161
      %s178 = sphi 0, %s162
    $region4: #{cnn_forward.1} parent=1 // loop_header_branch
      %17 = sbr.rel (%p15) target = $region8
    $region5: #{cnn_forward.1} parent=1 // loop_body
      %s19 = ssub.s32 %s14, 1
      %s20 = ssub.s32 %s14, 2
      %s27 = sadd.s32 1, %s22
      %p28 = scmp.ge.s32.totalorder %s27, 4
      %s29 = scalar_select %p28, 0, %s27
      %s30 = sadd.s32 1, %s21
      %s31 = scalar_select %p28, %s30, %s21
      %p32 = scmp.ge.s32.totalorder %s31, 2
      %s33 = scalar_select %p32, 0, %s31
      %s35 = sadd.s32 %s34, 1
      %p38 = scmp.eq.s32.totalorder %s14, 7
      %p39 = scmp.ne.s32.totalorder %s34, %s36
      %p40 = scmp.eq.s32.totalorder %s14, 0
      %p41 = por %p39, %p40
      %p42 = scmp.ne.s32.totalorder %s34, %s36
      %p43 = scmp.eq.s32.totalorder %s19, 7
      %p44 = por %p42, %p43
      %p45 = scmp.ne.s32.totalorder %s36, %s37
      %p46 = scmp.eq.s32.totalorder %s19, 0
      %p47 = por %p45, %p46
      %p48 = scmp.ne.s32.totalorder %s36, %s37
      %p49 = scmp.eq.s32.totalorder %s20, 7
      %p50 = por %p48, %p49
      %p52 = scmp.ne.s32.totalorder %s37, %s51
      %p53 = scmp.eq.s32.totalorder %s20, 0
      %p54 = por %p52, %p53
      %s56 = sadd.s32 %s55, 1
      %p59 = scmp.eq.s32.totalorder %s14, 7
      %p60 = scmp.ne.s32.totalorder %s55, %s57
      %p61 = scmp.eq.s32.totalorder %s14, 0
      %p62 = por %p60, %p61
      %p63 = scmp.ne.s32.totalorder %s55, %s57
      %p64 = scmp.eq.s32.totalorder %s19, 7
      %p65 = por %p63, %p64
      %p66 = scmp.ne.s32.totalorder %s57, %s58
      %p67 = scmp.eq.s32.totalorder %s19, 0
      %p68 = por %p66, %p67
      %p69 = scmp.ne.s32.totalorder %s57, %s58
      %p70 = scmp.eq.s32.totalorder %s20, 7
      %p71 = por %p69, %p70
      %p73 = scmp.ne.s32.totalorder %s58, %s72
      %p74 = scmp.eq.s32.totalorder %s20, 0
      %p75 = por %p73, %p74
      %s76 = ssub.s32 %s22, %s29
      %s77 = ssub.s32 %s21, %s33
      %s78 = sor.u32 %s76, %s77
      %p79 = scmp.eq.s32.totalorder %s78, 0
      %s81 = sadd.s32 %s80, 1
      %s82 = scalar_select %p79, %s80, %s81
      %p85 = pneg %p79
      %p86 = scmp.eq.s32.totalorder %s14, 7
      %p87 = por %p85, %p86
      %p88 = scmp.ne.s32.totalorder %s80, %s83
      %p89 = scmp.eq.s32.totalorder %s14, 0
      %p90 = por %p88, %p89
      %p91 = scmp.ne.s32.totalorder %s80, %s83
      %p92 = scmp.eq.s32.totalorder %s19, 7
      %p93 = por %p91, %p92
      %p94 = scmp.ne.s32.totalorder %s83, %s84
      %p95 = scmp.eq.s32.totalorder %s19, 0
      %p96 = por %p94, %p95
      %p97 = scmp.ne.s32.totalorder %s83, %s84
      %p98 = scmp.eq.s32.totalorder %s20, 7
      %p99 = por %p97, %p98
      %p101 = scmp.ne.s32.totalorder %s84, %s100
      %p102 = scmp.eq.s32.totalorder %s20, 0
      %p103 = por %p101, %p102
      %s104 = ssub.s32 %s21, %s33
      %p105 = scmp.eq.s32.totalorder %s104, 0
      %s107 = sadd.s32 %s106, 1
      %s108 = scalar_select %p105, %s106, %s107
      %p111 = pneg %p105
      %p112 = scmp.eq.s32.totalorder %s14, 7
      %p113 = por %p111, %p112
      %p114 = scmp.ne.s32.totalorder %s106, %s109
      %p115 = scmp.eq.s32.totalorder %s14, 0
      %p116 = por %p114, %p115
      %p117 = scmp.ne.s32.totalorder %s106, %s109
      %p118 = scmp.eq.s32.totalorder %s19, 7
      %p119 = por %p117, %p118
      %p120 = scmp.ne.s32.totalorder %s109, %s110
      %p121 = scmp.eq.s32.totalorder %s19, 0
      %p122 = por %p120, %p121
      %p123 = scmp.ne.s32.totalorder %s109, %s110
      %p124 = scmp.eq.s32.totalorder %s20, 7
      %p125 = por %p123, %p124
      %p127 = scmp.ne.s32.totalorder %s110, %s126
      %p128 = scmp.eq.s32.totalorder %s20, 0
      %p129 = por %p127, %p128
      %s130 = ssub.s32 %s21, %s33
      %p131 = scmp.eq.s32.totalorder %s130, 0
      %s133 = sadd.s32 %s132, 1
      %s134 = scalar_select %p131, %s132, %s133
      %p137 = pneg %p131
      %p138 = scmp.eq.s32.totalorder %s14, 7
      %p139 = por %p137, %p138
      %p140 = scmp.ne.s32.totalorder %s132, %s135
      %p141 = scmp.eq.s32.totalorder %s14, 0
      %p142 = por %p140, %p141
      %p143 = scmp.ne.s32.totalorder %s132, %s135
      %p144 = scmp.eq.s32.totalorder %s19, 7
      %p145 = por %p143, %p144
      %p146 = scmp.ne.s32.totalorder %s135, %s136
      %p147 = scmp.eq.s32.totalorder %s19, 0
      %p148 = por %p146, %p147
      %p149 = scmp.ne.s32.totalorder %s135, %s136
      %p150 = scmp.eq.s32.totalorder %s20, 7
      %p151 = por %p149, %p150
      %p153 = scmp.ne.s32.totalorder %s136, %s152
      %p154 = scmp.eq.s32.totalorder %s20, 0
      %p155 = por %p153, %p154
      %s156 = ssub.s32 %s21, %s33
      %p157 = scmp.eq.s32.totalorder %s156, 0
      %s159 = sadd.s32 %s158, 1
      %s160 = scalar_select %p157, %s158, %s159
      %p163 = pneg %p157
      %p164 = scmp.eq.s32.totalorder %s14, 7
      %p165 = por %p163, %p164
      %p166 = scmp.ne.s32.totalorder %s158, %s161
      %p167 = scmp.eq.s32.totalorder %s14, 0
      %p168 = por %p166, %p167
      %p169 = scmp.ne.s32.totalorder %s158, %s161
      %p170 = scmp.eq.s32.totalorder %s19, 7
      %p171 = por %p169, %p170
      %p172 = scmp.ne.s32.totalorder %s161, %s162
      %p173 = scmp.eq.s32.totalorder %s19, 0
      %p174 = por %p172, %p173
      %p175 = scmp.ne.s32.totalorder %s161, %s162
      %p176 = scmp.eq.s32.totalorder %s20, 7
      %p177 = por %p175, %p176
      %p179 = scmp.ne.s32.totalorder %s162, %s178
      %p180 = scmp.eq.s32.totalorder %s20, 0
      %p181 = por %p179, %p180
      %p182 = scmp.le.s32.totalorder 1, %s14
      %p183 = scmp.lt.s32.totalorder %s14, 9
      %p184 = pnand %p182, %p183
      %p185 = pneg %p184
      // Predicated region
      $region9: #{cnn_forward.1} parent=5 // pred_check
        _
      $region10: #{cnn_forward.1} parent=5 // pred_check_branch
        %187 = sbr.rel (%p184) target = $region12
      $region11: #{cnn_forward.1} parent=5 // pred_region
        %s188 = ssub.s32 %s14, 1
        // Predicated region
        $region13: #{cnn_forward.1} parent=11 // pred_check
          %p189 = pneg %p47
        $region14: #{cnn_forward.1} parent=11 // pred_check_branch
          %191 = sbr.rel (%p189) target = $region16
        $region15: #{cnn_forward.1} parent=11 // pred_region
          _
        $region16: #{cnn_forward.1} parent=11 // pred_fallthru
          _
        // Predicated region
        $region17: #{cnn_forward.1} parent=11 // pred_check
          %p192 = pneg %p68
        $region18: #{cnn_forward.1} parent=11 // pred_check_branch
          %194 = sbr.rel (%p192) target = $region20
        $region19: #{cnn_forward.1} parent=11 // pred_region
          _
        $region20: #{cnn_forward.1} parent=11 // pred_fallthru
          _
      $region12: #{cnn_forward.1} parent=5 // pred_fallthru
        _
      %p195 = scmp.lt.s32.totalorder %s14, 8
      // Predicated region
      $region21: #{cnn_forward.1} parent=5 // pred_check
        %p196 = pneg %p195
      $region22: #{cnn_forward.1} parent=5 // pred_check_branch
        %198 = sbr.rel (%p196) target = $region24
      $region23: #{cnn_forward.1} parent=5 // pred_region
        // Predicated region
        $region25: #{cnn_forward.1} parent=23 // pred_check
          %p199 = pneg %p90
        $region26: #{cnn_forward.1} parent=23 // pred_check_branch
          %201 = sbr.rel (%p199) target = $region28
        $region27: #{cnn_forward.1} parent=23 // pred_region
          %s202 = sand.u32 %s80, 1
          %s203 = scalar_lea.sflag [#allocation5], %s202
          %s204 = sand.u32 %s80, 1
          %s205 = smul.addr %s204, 8192
          %s206 = scalar_lea.vmem [#allocation4], %s205
          %s207 = smul.u32 16, %s22
          %s208 = smul.u32 2, %s21
          %s210 = ssub.s32 131072, 131072
          %211 = vsyncadd %s203, %s210
          %s212 = smul.addr %s207, 128
          %s213 = sadd.s32 %s208, %s212
          %s214 = smul.addr %s213, 128
          %s215 = scalar_lea.hbm %s2, %s214
          %s216 = sshll.u32 %s206, 4
          %s217 = int_to_ptr.vmem [resolvable:$true] %s216
          %222 = dma.hbm_to_vmem [thread:$0]  %s215, 131072, %s217, %s203, 512, 256, 16
        $region28: #{cnn_forward.1} parent=23 // pred_fallthru
          _
        // Predicated region
        $region29: #{cnn_forward.1} parent=23 // pred_check
          %p223 = pneg %p116
        $region30: #{cnn_forward.1} parent=23 // pred_check_branch
          %225 = sbr.rel (%p223) target = $region32
        $region31: #{cnn_forward.1} parent=23 // pred_region
          %s226 = smul.u32 2, %s21
          %p227 = scmp.lt.s32.totalorder %s226, 3
          %s228 = scalar_select %p227, %s226, 3
          %s229 = scalar_lea.vmem %s3, %s228
          %s230 = smul.u32 2, %s21
        $region32: #{cnn_forward.1} parent=23 // pred_fallthru
          _
        // Predicated region
        $region33: #{cnn_forward.1} parent=23 // pred_check
          %p231 = pneg %p142
        $region34: #{cnn_forward.1} parent=23 // pred_check_branch
          %233 = sbr.rel (%p231) target = $region36
        $region35: #{cnn_forward.1} parent=23 // pred_region
          %s234 = smul.u32 32, %s21
          %p235 = scmp.lt.s32.totalorder %s234, 63
          %s236 = scalar_select %p235, %s234, 63
          %s237 = smul.addr %s236, 8
          %s238 = scalar_lea.vmem %s4, %s237
          %s239 = smul.u32 32, %s21
        $region36: #{cnn_forward.1} parent=23 // pred_fallthru
          _
      $region24: #{cnn_forward.1} parent=5 // pred_fallthru
        _
      %p240 = scmp.le.s32.totalorder 1, %s14
      %p241 = scmp.lt.s32.totalorder %s14, 9
      %p242 = pnand %p240, %p241
      %p243 = pneg %p242
      // Predicated region
      $region37: #{cnn_forward.1} parent=5 // pred_check
        _
      $region38: #{cnn_forward.1} parent=5 // pred_check_branch
        %245 = sbr.rel (%p242) target = $region40
      $region39: #{cnn_forward.1} parent=5 // pred_region
        %s246 = ssub.s32 %s14, 1
        %s247 = sand.u32 %s83, 1
        %s248 = scalar_lea.sflag [#allocation5], %s247
        %s249 = sand.u32 %s83, 1
        %s250 = smul.addr %s249, 8192
        %s251 = scalar_lea.vmem [#allocation4], %s250
        // Predicated region
        $region41: #{cnn_forward.1} parent=39 // pred_check
          %p252 = pneg %p96
        $region42: #{cnn_forward.1} parent=39 // pred_check_branch
          %254 = sbr.rel (%p252) target = $region44
        $region43: #{cnn_forward.1} parent=39 // pred_region
          %255 = dma.done %s248, 131072
        $region44: #{cnn_forward.1} parent=39 // pred_fallthru
          _
        %p256 = pneg %p47
        %p257 = pneg %p44
        %p258 = pneg %p68
        %p259 = pneg %p65
        %s260 = sand.u32 %s83, 1
        %s261 = scalar_lea.sflag [#allocation5], %s260
        %s262 = sand.u32 %s83, 1
        %s263 = smul.addr %s262, 8192
        %s264 = scalar_lea.vmem [#allocation4], %s263
        %p265 = pneg %p96
        %p266 = pneg %p93
        %s267 = smul.u32 2, %s23
        %p268 = scmp.lt.s32.totalorder %s267, 3
        %s269 = scalar_select %p268, %s267, 3
        %s270 = scalar_lea.vmem %s3, %s269
        %p271 = pneg %p122
        %p272 = pneg %p119
        %s273 = smul.u32 32, %s23
        %p274 = scmp.lt.s32.totalorder %s273, 63
        %s275 = scalar_select %p274, %s273, 63
        %s276 = smul.addr %s275, 8
        %s277 = scalar_lea.vmem %s4, %s276
        %p278 = pneg %p148
        %p279 = pneg %p145
        %p280 = pneg %p174
        %p281 = pneg %p171
        %p282 = scmp.lt.s32.totalorder %s23, 1
        %s283 = scalar_select %p282, %s23, 1
        %s284 = smul.addr %s283, 2
        %s285 = scalar_lea.vmem %s5, %s284
        %s286 = smul.u32 16, %s24
        %s287 = smul.u32 2, %s23
        %s288 = smul.u32 2, %s23
        %p289 = scmp.lt.s32.totalorder %s288, 3
        %s290 = scalar_select %p289, %s288, 3
        %s291 = scalar_lea.vmem %s3, %s290
        %s292 = smul.u32 2, %s23
        %s293 = smul.u32 32, %s23
        %p294 = scmp.lt.s32.totalorder %s293, 63
        %s295 = scalar_select %p294, %s293, 63
        %s296 = smul.addr %s295, 8
        %s297 = scalar_lea.vmem %s4, %s296
        %s298 = smul.u32 32, %s23
        %p299 = scmp.lt.s32.totalorder %s23, 1
        %s300 = scalar_select %p299, %s23, 1
        %s301 = smul.addr %s300, 2
        %s302 = scalar_lea.vmem %s5, %s301
        %p303 = scmp.eq.s32.totalorder %s24, 0
        // Predicated region
        $region45: #{cnn_forward.1} parent=39 // pred_check
          %p304 = pneg %p303
        $region46: #{cnn_forward.1} parent=39 // pred_check_branch
          %306 = sbr.rel (%p304) target = $region48
        $region47: #{cnn_forward.1} parent=39 // pred_region
          %307 = vst [vmem:[#allocation3] sm:$0xf] 0.0
          %v308 = vld [vmem:[%s1] sm:$0xff]
          %v309 = vld [vmem:[%s1 + $0x8] sm:$0xff]
          %v310 = vld [vmem:[%s1 + $0x10] sm:$0xff]
          %v311 = vld [vmem:[%s1 + $0x18] sm:$0xff]
          %v312 = vld [vmem:[%s1 + $0x20] sm:$0xff]
          %v313 = vld [vmem:[%s1 + $0x28] sm:$0xff]
          %v314 = vld [vmem:[%s1 + $0x30] sm:$0xff]
          %v315 = vld [vmem:[%s1 + $0x38] sm:$0xff]
          %v316 = vld [vmem:[%s0] sm:$0xff]
          %v317 = vld [vmem:[%s0 + $0x8] sm:$0xff]
          %v318 = vld [vmem:[%s0 + $0x80] sm:$0xff]
          %v319 = vld [vmem:[%s0 + $0x88] sm:$0xff]
          %v320 = vld [vmem:[%s0 + $0x100] sm:$0xff]
          %v321 = vld [vmem:[%s0 + $0x108] sm:$0xff]
          %v322 = vld [vmem:[%s0 + $0x180] sm:$0xff]
          %v323 = vld [vmem:[%s0 + $0x188] sm:$0xff]
          %vm324 = vcmask 261120
          %v326 = vsel %vm324, %v308, 0
          %v329 = vsel %vm324, %v309, 0
          %v332 = vsel %vm324, %v310, 0
          %v335 = vsel %vm324, %v311, 0
          %v338 = vsel %vm324, %v312, 0
          %v341 = vsel %vm324, %v313, 0
          %v344 = vsel %vm324, %v314, 0
          %v347 = vsel %vm324, %v315, 0
          %349 = vmatprep.subr.mxu0 0.0
          %350 = vmatpush1.msra.mxu0 0.0
          %351 = vmatprep.subr.mxu0 0.0
          %352 = vmatpush1.msra.mxu0 0.0
          %353 = vmatprep.subr.mxu0 0.0
          %354 = vmatpush1.msra.mxu0 0.0
          %355 = vmatprep.subr.mxu0 0.0
          %356 = vmatpush1.msra.mxu0 0.0
          %357 = vmatprep.subr.mxu0 0.0
          %358 = vmatpush1.msra.mxu0 0.0
          %359 = vmatprep.subr.mxu0 0.0
          %360 = vmatpush1.msra.mxu0 0.0
          %361 = vmatprep.subr.mxu0 0.0
          %362 = vmatpush1.msra.mxu0 0.0
          %363 = vmatprep.subr.mxu0 0.0
          %364 = vmatpush1.msra.mxu0 0.0
          %365 = vmatprep.subr.mxu0 0.0
          %366 = vmatpush1.msra.mxu0 0.0
          %367 = vmatprep.subr.mxu0 0.0
          %368 = vmatpush1.msra.mxu0 0.0
          %369 = vmatprep.subr.mxu0 0.0
          %370 = vmatpush1.msra.mxu0 0.0
          %371 = vmatprep.subr.mxu0 0.0
          %372 = vmatpush1.msra.mxu0 0.0
          %373 = vmatprep.subr.mxu0 %v323
          %374 = vmatpush1.msra.mxu0 %v322
          %375 = vmatprep.subr.mxu0 %v321
          %376 = vmatpush1.msra.mxu0 %v320
          %377 = vmatprep.subr.mxu0 %v319
          %378 = vmatpush1.msra.mxu0 %v318
          %379 = vmatprep.subr.mxu0 %v317
          %380 = vmatpush1.msra.mxu0 %v316
          %381 = vmatprep.subr.mxu0 0.0
          %382 = vmatpush2.msra.mxu0 0.0
          %383 = vmatprep.subr.mxu0 0.0
          %384 = vmatpush2.msra.mxu0 0.0
          %385 = vmatprep.subr.mxu0 0.0
          %386 = vmatpush2.msra.mxu0 0.0
          %387 = vmatprep.subr.mxu0 0.0
          %388 = vmatpush2.msra.mxu0 0.0
          %389 = vmatprep.subr.mxu0 0.0
          %390 = vmatpush2.msra.mxu0 0.0
          %391 = vmatprep.subr.mxu0 0.0
          %392 = vmatpush2.msra.mxu0 0.0
          %393 = vmatprep.subr.mxu0 0.0
          %394 = vmatpush2.msra.mxu0 0.0
          %395 = vmatprep.subr.mxu0 0.0
          %396 = vmatpush2.msra.mxu0 0.0
          %397 = vmatprep.subr.mxu0 0.0
          %398 = vmatpush2.msra.mxu0 0.0
          %399 = vmatprep.subr.mxu0 0.0
          %400 = vmatpush2.msra.mxu0 0.0
          %401 = vmatprep.subr.mxu0 0.0
          %402 = vmatpush2.msra.mxu0 0.0
          %403 = vmatprep.subr.mxu0 0.0
          %404 = vmatpush2.msra.mxu0 0.0
          %405 = vmatprep.subr.mxu0 0.0
          %406 = vmatpush2.msra.mxu0 0.0
          %407 = vmatprep.subr.mxu0 0.0
          %408 = vmatpush2.msra.mxu0 0.0
          %409 = vmatprep.subr.mxu0 0.0
          %410 = vmatpush2.msra.mxu0 0.0
          %411 = vmatprep.subr.mxu0 0.0
          %412 = vmatpush2.msra.mxu0 0.0
          %413 = vmatprep.mubr.f32.mxu0 0.0
          %414 = vmatmul.mubr.f32.gmra.mxu0 %v326
          %v415 = vpop.f32.mrf.mxu0
          %v416 = vadd.f32 0.0, %v415
          %v417 = vpop.f32.mrf.mxu0
          %v418 = vadd.f32 0.0, %v417
          %419 = vmatprep.mubr.f32.mxu0 0.0
          %420 = vmatmul.mubr.f32.gmra.mxu0 %v329
          %v421 = vpop.f32.mrf.mxu0
          %v422 = vadd.f32 0.0, %v421
          %v423 = vpop.f32.mrf.mxu0
          %v424 = vadd.f32 0.0, %v423
          %425 = vmatprep.mubr.f32.mxu0 0.0
          %426 = vmatmul.mubr.f32.gmra.mxu0 %v332
          %v427 = vpop.f32.mrf.mxu0
          %v428 = vadd.f32 0.0, %v427
          %v429 = vpop.f32.mrf.mxu0
          %v430 = vadd.f32 0.0, %v429
          %431 = vmatprep.mubr.f32.mxu0 0.0
          %432 = vmatmul.mubr.f32.gmra.mxu0 %v335
          %v433 = vpop.f32.mrf.mxu0
          %v434 = vadd.f32 0.0, %v433
          %v435 = vpop.f32.mrf.mxu0
          %v436 = vadd.f32 0.0, %v435
          %437 = vmatprep.mubr.f32.mxu0 0.0
          %438 = vmatmul.mubr.f32.gmra.mxu0 %v338
          %v439 = vpop.f32.mrf.mxu0
          %v440 = vadd.f32 0.0, %v439
          %v441 = vpop.f32.mrf.mxu0
          %v442 = vadd.f32 0.0, %v441
          %443 = vmatprep.mubr.f32.mxu0 0.0
          %444 = vmatmul.mubr.f32.gmra.mxu0 %v341
          %v445 = vpop.f32.mrf.mxu0
          %v446 = vadd.f32 0.0, %v445
          %v447 = vpop.f32.mrf.mxu0
          %v448 = vadd.f32 0.0, %v447
          %449 = vmatprep.mubr.f32.mxu0 0.0
          %450 = vmatmul.mubr.f32.gmra.mxu0 %v344
          %v451 = vpop.f32.mrf.mxu0
          %v452 = vadd.f32 0.0, %v451
          %v453 = vpop.f32.mrf.mxu0
          %v454 = vadd.f32 0.0, %v453
          %455 = vmatprep.mubr.f32.mxu0 0.0
          %456 = vmatmul.mubr.f32.gmra.mxu0 %v347
          %v457 = vpop.f32.mrf.mxu0
          %v458 = vadd.f32 0.0, %v457
          %v459 = vpop.f32.mrf.mxu0
          %v460 = vadd.f32 0.0, %v459
          %461 = vdwg.mxu0
          %v462 = vld [vmem:[%s0 + $0x10] sm:$0xff]
          %v463 = vld [vmem:[%s0 + $0x18] sm:$0xff]
          %v464 = vld [vmem:[%s0 + $0x90] sm:$0xff]
          %v465 = vld [vmem:[%s0 + $0x98] sm:$0xff]
          %v466 = vld [vmem:[%s0 + $0x110] sm:$0xff]
          %v467 = vld [vmem:[%s0 + $0x118] sm:$0xff]
          %v468 = vld [vmem:[%s0 + $0x190] sm:$0xff]
          %v469 = vld [vmem:[%s0 + $0x198] sm:$0xff]
          %470 = vmatprep.subr.mxu0 0.0
          %471 = vmatpush1.msra.mxu0 0.0
          %472 = vmatprep.subr.mxu0 0.0
          %473 = vmatpush1.msra.mxu0 0.0
          %474 = vmatprep.subr.mxu0 0.0
          %475 = vmatpush1.msra.mxu0 0.0
          %476 = vmatprep.subr.mxu0 0.0
          %477 = vmatpush1.msra.mxu0 0.0
          %478 = vmatprep.subr.mxu0 0.0
          %479 = vmatpush1.msra.mxu0 0.0
          %480 = vmatprep.subr.mxu0 0.0
          %481 = vmatpush1.msra.mxu0 0.0
          %482 = vmatprep.subr.mxu0 0.0
          %483 = vmatpush1.msra.mxu0 0.0
          %484 = vmatprep.subr.mxu0 0.0
          %485 = vmatpush1.msra.mxu0 0.0
          %486 = vmatprep.subr.mxu0 0.0
          %487 = vmatpush1.msra.mxu0 0.0
          %488 = vmatprep.subr.mxu0 0.0
          %489 = vmatpush1.msra.mxu0 0.0
          %490 = vmatprep.subr.mxu0 0.0
          %491 = vmatpush1.msra.mxu0 0.0
          %492 = vmatprep.subr.mxu0 0.0
          %493 = vmatpush1.msra.mxu0 0.0
          %494 = vmatprep.subr.mxu0 %v469
          %495 = vmatpush1.msra.mxu0 %v468
          %496 = vmatprep.subr.mxu0 %v467
          %497 = vmatpush1.msra.mxu0 %v466
          %498 = vmatprep.subr.mxu0 %v465
          %499 = vmatpush1.msra.mxu0 %v464
          %500 = vmatprep.subr.mxu0 %v463
          %501 = vmatpush1.msra.mxu0 %v462
          %502 = vmatprep.subr.mxu0 0.0
          %503 = vmatpush2.msra.mxu0 0.0
          %504 = vmatprep.subr.mxu0 0.0
          %505 = vmatpush2.msra.mxu0 0.0
          %506 = vmatprep.subr.mxu0 0.0
          %507 = vmatpush2.msra.mxu0 0.0
          %508 = vmatprep.subr.mxu0 0.0
          %509 = vmatpush2.msra.mxu0 0.0
          %510 = vmatprep.subr.mxu0 0.0
          %511 = vmatpush2.msra.mxu0 0.0
          %512 = vmatprep.subr.mxu0 0.0
          %513 = vmatpush2.msra.mxu0 0.0
          %514 = vmatprep.subr.mxu0 0.0
          %515 = vmatpush2.msra.mxu0 0.0
          %516 = vmatprep.subr.mxu0 0.0
          %517 = vmatpush2.msra.mxu0 0.0
          %518 = vmatprep.subr.mxu0 0.0
          %519 = vmatpush2.msra.mxu0 0.0
          %520 = vmatprep.subr.mxu0 0.0
          %521 = vmatpush2.msra.mxu0 0.0
          %522 = vmatprep.subr.mxu0 0.0
          %523 = vmatpush2.msra.mxu0 0.0
          %524 = vmatprep.subr.mxu0 0.0
          %525 = vmatpush2.msra.mxu0 0.0
          %526 = vmatprep.subr.mxu0 0.0
          %527 = vmatpush2.msra.mxu0 0.0
          %528 = vmatprep.subr.mxu0 0.0
          %529 = vmatpush2.msra.mxu0 0.0
          %530 = vmatprep.subr.mxu0 0.0
          %531 = vmatpush2.msra.mxu0 0.0
          %532 = vmatprep.subr.mxu0 0.0
          %533 = vmatpush2.msra.mxu0 0.0
          %534 = vmatprep.mubr.f32.mxu0 0.0
          %535 = vmatmul.mubr.f32.gmra.mxu0 %v326
          %v536 = vpop.f32.mrf.mxu0
          %v537 = vadd.f32 0.0, %v536
          %v538 = vpop.f32.mrf.mxu0
          %v539 = vadd.f32 0.0, %v538
          %540 = vmatprep.mubr.f32.mxu0 0.0
          %541 = vmatmul.mubr.f32.gmra.mxu0 %v329
          %v542 = vpop.f32.mrf.mxu0
          %v543 = vadd.f32 0.0, %v542
          %v544 = vpop.f32.mrf.mxu0
          %v545 = vadd.f32 0.0, %v544
          %546 = vmatprep.mubr.f32.mxu0 0.0
          %547 = vmatmul.mubr.f32.gmra.mxu0 %v332
          %v548 = vpop.f32.mrf.mxu0
          %v549 = vadd.f32 0.0, %v548
          %v550 = vpop.f32.mrf.mxu0
          %v551 = vadd.f32 0.0, %v550
          %552 = vmatprep.mubr.f32.mxu0 0.0
          %553 = vmatmul.mubr.f32.gmra.mxu0 %v335
          %v554 = vpop.f32.mrf.mxu0
          %v555 = vadd.f32 0.0, %v554
          %v556 = vpop.f32.mrf.mxu0
          %v557 = vadd.f32 0.0, %v556
          %558 = vmatprep.mubr.f32.mxu0 0.0
          %559 = vmatmul.mubr.f32.gmra.mxu0 %v338
          %v560 = vpop.f32.mrf.mxu0
          %v561 = vadd.f32 0.0, %v560
          %v562 = vpop.f32.mrf.mxu0
          %v563 = vadd.f32 0.0, %v562
          %564 = vmatprep.mubr.f32.mxu0 0.0
          %565 = vmatmul.mubr.f32.gmra.mxu0 %v341
          %v566 = vpop.f32.mrf.mxu0
          %v567 = vadd.f32 0.0, %v566
          %v568 = vpop.f32.mrf.mxu0
          %v569 = vadd.f32 0.0, %v568
          %570 = vmatprep.mubr.f32.mxu0 0.0
          %571 = vmatmul.mubr.f32.gmra.mxu0 %v344
          %v572 = vpop.f32.mrf.mxu0
          %v573 = vadd.f32 0.0, %v572
          %v574 = vpop.f32.mrf.mxu0
          %v575 = vadd.f32 0.0, %v574
          %576 = vmatprep.mubr.f32.mxu0 0.0
          %577 = vmatmul.mubr.f32.gmra.mxu0 %v347
          %v578 = vpop.f32.mrf.mxu0
          %v579 = vadd.f32 0.0, %v578
          %v580 = vpop.f32.mrf.mxu0
          %v581 = vadd.f32 0.0, %v580
          %582 = vdwg.mxu0
          %v583 = vmax.f32 %v416, %v537
          %v584 = vmax.f32 %v418, %v539
          %v585 = vmax.f32 %v422, %v543
          %v586 = vmax.f32 %v424, %v545
          %v587 = vmax.f32 %v428, %v549
          %v588 = vmax.f32 %v430, %v551
          %v589 = vmax.f32 %v434, %v555
          %v590 = vmax.f32 %v436, %v557
          %v591 = vmax.f32 %v440, %v561
          %v592 = vmax.f32 %v442, %v563
          %v593 = vmax.f32 %v446, %v567
          %v594 = vmax.f32 %v448, %v569
          %v595 = vmax.f32 %v452, %v573
          %v596 = vmax.f32 %v454, %v575
          %v597 = vmax.f32 %v458, %v579
          %v598 = vmax.f32 %v460, %v581
          %v599 = vld [vmem:[%s0 + $0x20] sm:$0xff]
          %v600 = vld [vmem:[%s0 + $0x28] sm:$0xff]
          %v601 = vld [vmem:[%s0 + $0xa0] sm:$0xff]
          %v602 = vld [vmem:[%s0 + $0xa8] sm:$0xff]
          %v603 = vld [vmem:[%s0 + $0x120] sm:$0xff]
          %v604 = vld [vmem:[%s0 + $0x128] sm:$0xff]
          %v605 = vld [vmem:[%s0 + $0x1a0] sm:$0xff]
          %v606 = vld [vmem:[%s0 + $0x1a8] sm:$0xff]
          %607 = vmatprep.subr.mxu0 0.0
          %608 = vmatpush1.msra.mxu0 0.0
          %609 = vmatprep.subr.mxu0 0.0
          %610 = vmatpush1.msra.mxu0 0.0
          %611 = vmatprep.subr.mxu0 0.0
          %612 = vmatpush1.msra.mxu0 0.0
          %613 = vmatprep.subr.mxu0 0.0
          %614 = vmatpush1.msra.mxu0 0.0
          %615 = vmatprep.subr.mxu0 0.0
          %616 = vmatpush1.msra.mxu0 0.0
          %617 = vmatprep.subr.mxu0 0.0
          %618 = vmatpush1.msra.mxu0 0.0
          %619 = vmatprep.subr.mxu0 0.0
          %620 = vmatpush1.msra.mxu0 0.0
          %621 = vmatprep.subr.mxu0 0.0
          %622 = vmatpush1.msra.mxu0 0.0
          %623 = vmatprep.subr.mxu0 0.0
          %624 = vmatpush1.msra.mxu0 0.0
          %625 = vmatprep.subr.mxu0 0.0
          %626 = vmatpush1.msra.mxu0 0.0
          %627 = vmatprep.subr.mxu0 0.0
          %628 = vmatpush1.msra.mxu0 0.0
          %629 = vmatprep.subr.mxu0 0.0
          %630 = vmatpush1.msra.mxu0 0.0
          %631 = vmatprep.subr.mxu0 %v606
          %632 = vmatpush1.msra.mxu0 %v605
          %633 = vmatprep.subr.mxu0 %v604
          %634 = vmatpush1.msra.mxu0 %v603
          %635 = vmatprep.subr.mxu0 %v602
          %636 = vmatpush1.msra.mxu0 %v601
          %637 = vmatprep.subr.mxu0 %v600
          %638 = vmatpush1.msra.mxu0 %v599
          %639 = vmatprep.subr.mxu0 0.0
          %640 = vmatpush2.msra.mxu0 0.0
          %641 = vmatprep.subr.mxu0 0.0
          %642 = vmatpush2.msra.mxu0 0.0
          %643 = vmatprep.subr.mxu0 0.0
          %644 = vmatpush2.msra.mxu0 0.0
          %645 = vmatprep.subr.mxu0 0.0
          %646 = vmatpush2.msra.mxu0 0.0
          %647 = vmatprep.subr.mxu0 0.0
          %648 = vmatpush2.msra.mxu0 0.0
          %649 = vmatprep.subr.mxu0 0.0
          %650 = vmatpush2.msra.mxu0 0.0
          %651 = vmatprep.subr.mxu0 0.0
          %652 = vmatpush2.msra.mxu0 0.0
          %653 = vmatprep.subr.mxu0 0.0
          %654 = vmatpush2.msra.mxu0 0.0
          %655 = vmatprep.subr.mxu0 0.0
          %656 = vmatpush2.msra.mxu0 0.0
          %657 = vmatprep.subr.mxu0 0.0
          %658 = vmatpush2.msra.mxu0 0.0
          %659 = vmatprep.subr.mxu0 0.0
          %660 = vmatpush2.msra.mxu0 0.0
          %661 = vmatprep.subr.mxu0 0.0
          %662 = vmatpush2.msra.mxu0 0.0
          %663 = vmatprep.subr.mxu0 0.0
          %664 = vmatpush2.msra.mxu0 0.0
          %665 = vmatprep.subr.mxu0 0.0
          %666 = vmatpush2.msra.mxu0 0.0
          %667 = vmatprep.subr.mxu0 0.0
          %668 = vmatpush2.msra.mxu0 0.0
          %669 = vmatprep.subr.mxu0 0.0
          %670 = vmatpush2.msra.mxu0 0.0
          %671 = vmatprep.mubr.f32.mxu0 0.0
          %672 = vmatmul.mubr.f32.gmra.mxu0 %v326
          %v673 = vpop.f32.mrf.mxu0
          %v674 = vadd.f32 0.0, %v673
          %v675 = vpop.f32.mrf.mxu0
          %v676 = vadd.f32 0.0, %v675
          %677 = vmatprep.mubr.f32.mxu0 0.0
          %678 = vmatmul.mubr.f32.gmra.mxu0 %v329
          %v679 = vpop.f32.mrf.mxu0
          %v680 = vadd.f32 0.0, %v679
          %v681 = vpop.f32.mrf.mxu0
          %v682 = vadd.f32 0.0, %v681
          %683 = vmatprep.mubr.f32.mxu0 0.0
          %684 = vmatmul.mubr.f32.gmra.mxu0 %v332
          %v685 = vpop.f32.mrf.mxu0
          %v686 = vadd.f32 0.0, %v685
          %v687 = vpop.f32.mrf.mxu0
          %v688 = vadd.f32 0.0, %v687
          %689 = vmatprep.mubr.f32.mxu0 0.0
          %690 = vmatmul.mubr.f32.gmra.mxu0 %v335
          %v691 = vpop.f32.mrf.mxu0
          %v692 = vadd.f32 0.0, %v691
          %v693 = vpop.f32.mrf.mxu0
          %v694 = vadd.f32 0.0, %v693
          %695 = vmatprep.mubr.f32.mxu0 0.0
          %696 = vmatmul.mubr.f32.gmra.mxu0 %v338
          %v697 = vpop.f32.mrf.mxu0
          %v698 = vadd.f32 0.0, %v697
          %v699 = vpop.f32.mrf.mxu0
          %v700 = vadd.f32 0.0, %v699
          %701 = vmatprep.mubr.f32.mxu0 0.0
          %702 = vmatmul.mubr.f32.gmra.mxu0 %v341
          %v703 = vpop.f32.mrf.mxu0
          %v704 = vadd.f32 0.0, %v703
          %v705 = vpop.f32.mrf.mxu0
          %v706 = vadd.f32 0.0, %v705
          %707 = vmatprep.mubr.f32.mxu0 0.0
          %708 = vmatmul.mubr.f32.gmra.mxu0 %v344
          %v709 = vpop.f32.mrf.mxu0
          %v710 = vadd.f32 0.0, %v709
          %v711 = vpop.f32.mrf.mxu0
          %v712 = vadd.f32 0.0, %v711
          %713 = vmatprep.mubr.f32.mxu0 0.0
          %714 = vmatmul.mubr.f32.gmra.mxu0 %v347
          %v715 = vpop.f32.mrf.mxu0
          %v716 = vadd.f32 0.0, %v715
          %v717 = vpop.f32.mrf.mxu0
          %v718 = vadd.f32 0.0, %v717
          %719 = vdwg.mxu0
          %v720 = vmax.f32 %v583, %v674
          %v721 = vmax.f32 %v584, %v676
          %v722 = vmax.f32 %v585, %v680
          %v723 = vmax.f32 %v586, %v682
          %v724 = vmax.f32 %v587, %v686
          %v725 = vmax.f32 %v588, %v688
          %v726 = vmax.f32 %v589, %v692
          %v727 = vmax.f32 %v590, %v694
          %v728 = vmax.f32 %v591, %v698
          %v729 = vmax.f32 %v592, %v700
          %v730 = vmax.f32 %v593, %v704
          %v731 = vmax.f32 %v594, %v706
          %v732 = vmax.f32 %v595, %v710
          %v733 = vmax.f32 %v596, %v712
          %v734 = vmax.f32 %v597, %v716
          %v735 = vmax.f32 %v598, %v718
          %v736 = vld [vmem:[%s0 + $0x30] sm:$0xff]
          %v737 = vld [vmem:[%s0 + $0x38] sm:$0xff]
          %v738 = vld [vmem:[%s0 + $0xb0] sm:$0xff]
          %v739 = vld [vmem:[%s0 + $0xb8] sm:$0xff]
          %v740 = vld [vmem:[%s0 + $0x130] sm:$0xff]
          %v741 = vld [vmem:[%s0 + $0x138] sm:$0xff]
          %v742 = vld [vmem:[%s0 + $0x1b0] sm:$0xff]
          %v743 = vld [vmem:[%s0 + $0x1b8] sm:$0xff]
          %744 = vmatprep.subr.mxu0 0.0
          %745 = vmatpush1.msra.mxu0 0.0
          %746 = vmatprep.subr.mxu0 0.0
          %747 = vmatpush1.msra.mxu0 0.0
          %748 = vmatprep.subr.mxu0 0.0
          %749 = vmatpush1.msra.mxu0 0.0
          %750 = vmatprep.subr.mxu0 0.0
          %751 = vmatpush1.msra.mxu0 0.0
          %752 = vmatprep.subr.mxu0 0.0
          %753 = vmatpush1.msra.mxu0 0.0
          %754 = vmatprep.subr.mxu0 0.0
          %755 = vmatpush1.msra.mxu0 0.0
          %756 = vmatprep.subr.mxu0 0.0
          %757 = vmatpush1.msra.mxu0 0.0
          %758 = vmatprep.subr.mxu0 0.0
          %759 = vmatpush1.msra.mxu0 0.0
          %760 = vmatprep.subr.mxu0 0.0
          %761 = vmatpush1.msra.mxu0 0.0
          %762 = vmatprep.subr.mxu0 0.0
          %763 = vmatpush1.msra.mxu0 0.0
          %764 = vmatprep.subr.mxu0 0.0
          %765 = vmatpush1.msra.mxu0 0.0
          %766 = vmatprep.subr.mxu0 0.0
          %767 = vmatpush1.msra.mxu0 0.0
          %768 = vmatprep.subr.mxu0 %v743
          %769 = vmatpush1.msra.mxu0 %v742
          %770 = vmatprep.subr.mxu0 %v741
          %771 = vmatpush1.msra.mxu0 %v740
          %772 = vmatprep.subr.mxu0 %v739
          %773 = vmatpush1.msra.mxu0 %v738
          %774 = vmatprep.subr.mxu0 %v737
          %775 = vmatpush1.msra.mxu0 %v736
          %776 = vmatprep.subr.mxu0 0.0
          %777 = vmatpush2.msra.mxu0 0.0
          %778 = vmatprep.subr.mxu0 0.0
          %779 = vmatpush2.msra.mxu0 0.0
          %780 = vmatprep.subr.mxu0 0.0
          %781 = vmatpush2.msra.mxu0 0.0
          %782 = vmatprep.subr.mxu0 0.0
          %783 = vmatpush2.msra.mxu0 0.0
          %784 = vmatprep.subr.mxu0 0.0
          %785 = vmatpush2.msra.mxu0 0.0
          %786 = vmatprep.subr.mxu0 0.0
          %787 = vmatpush2.msra.mxu0 0.0
          %788 = vmatprep.subr.mxu0 0.0
          %789 = vmatpush2.msra.mxu0 0.0
          %790 = vmatprep.subr.mxu0 0.0
          %791 = vmatpush2.msra.mxu0 0.0
          %792 = vmatprep.subr.mxu0 0.0
          %793 = vmatpush2.msra.mxu0 0.0
          %794 = vmatprep.subr.mxu0 0.0
          %795 = vmatpush2.msra.mxu0 0.0
          %796 = vmatprep.subr.mxu0 0.0
          %797 = vmatpush2.msra.mxu0 0.0
          %798 = vmatprep.subr.mxu0 0.0
          %799 = vmatpush2.msra.mxu0 0.0
          %800 = vmatprep.subr.mxu0 0.0
          %801 = vmatpush2.msra.mxu0 0.0
          %802 = vmatprep.subr.mxu0 0.0
          %803 = vmatpush2.msra.mxu0 0.0
          %804 = vmatprep.subr.mxu0 0.0
          %805 = vmatpush2.msra.mxu0 0.0
          %806 = vmatprep.subr.mxu0 0.0
          %807 = vmatpush2.msra.mxu0 0.0
          %808 = vmatprep.mubr.f32.mxu0 0.0
          %809 = vmatmul.mubr.f32.gmra.mxu0 %v326
          %v810 = vpop.f32.mrf.mxu0
          %v811 = vadd.f32 0.0, %v810
          %v812 = vpop.f32.mrf.mxu0
          %v813 = vadd.f32 0.0, %v812
          %814 = vmatprep.mubr.f32.mxu0 0.0
          %815 = vmatmul.mubr.f32.gmra.mxu0 %v329
          %v816 = vpop.f32.mrf.mxu0
          %v817 = vadd.f32 0.0, %v816
          %v818 = vpop.f32.mrf.mxu0
          %v819 = vadd.f32 0.0, %v818
          %820 = vmatprep.mubr.f32.mxu0 0.0
          %821 = vmatmul.mubr.f32.gmra.mxu0 %v332
          %v822 = vpop.f32.mrf.mxu0
          %v823 = vadd.f32 0.0, %v822
          %v824 = vpop.f32.mrf.mxu0
          %v825 = vadd.f32 0.0, %v824
          %826 = vmatprep.mubr.f32.mxu0 0.0
          %827 = vmatmul.mubr.f32.gmra.mxu0 %v335
          %v828 = vpop.f32.mrf.mxu0
          %v829 = vadd.f32 0.0, %v828
          %v830 = vpop.f32.mrf.mxu0
          %v831 = vadd.f32 0.0, %v830
          %832 = vmatprep.mubr.f32.mxu0 0.0
          %833 = vmatmul.mubr.f32.gmra.mxu0 %v338
          %v834 = vpop.f32.mrf.mxu0
          %v835 = vadd.f32 0.0, %v834
          %v836 = vpop.f32.mrf.mxu0
          %v837 = vadd.f32 0.0, %v836
          %838 = vmatprep.mubr.f32.mxu0 0.0
          %839 = vmatmul.mubr.f32.gmra.mxu0 %v341
          %v840 = vpop.f32.mrf.mxu0
          %v841 = vadd.f32 0.0, %v840
          %v842 = vpop.f32.mrf.mxu0
          %v843 = vadd.f32 0.0, %v842
          %844 = vmatprep.mubr.f32.mxu0 0.0
          %845 = vmatmul.mubr.f32.gmra.mxu0 %v344
          %v846 = vpop.f32.mrf.mxu0
          %v847 = vadd.f32 0.0, %v846
          %v848 = vpop.f32.mrf.mxu0
          %v849 = vadd.f32 0.0, %v848
          %850 = vmatprep.mubr.f32.mxu0 0.0
          %851 = vmatmul.mubr.f32.gmra.mxu0 %v347
          %v852 = vpop.f32.mrf.mxu0
          %v853 = vadd.f32 0.0, %v852
          %v854 = vpop.f32.mrf.mxu0
          %v855 = vadd.f32 0.0, %v854
          %856 = vdwg.mxu0
          %v857 = vmax.f32 %v720, %v811
          %v858 = vmax.f32 %v721, %v813
          %v859 = vmax.f32 %v722, %v817
          %v860 = vmax.f32 %v723, %v819
          %v861 = vmax.f32 %v724, %v823
          %v862 = vmax.f32 %v725, %v825
          %v863 = vmax.f32 %v726, %v829
          %v864 = vmax.f32 %v727, %v831
          %v865 = vmax.f32 %v728, %v835
          %v866 = vmax.f32 %v729, %v837
          %v867 = vmax.f32 %v730, %v841
          %v868 = vmax.f32 %v731, %v843
          %v869 = vmax.f32 %v732, %v847
          %v870 = vmax.f32 %v733, %v849
          %v871 = vmax.f32 %v734, %v853
          %v872 = vmax.f32 %v735, %v855
          %v873 = vmax.f32 %v857, 0.0
          %v874 = vmax.f32 %v858, 0.0
          %v875 = vmax.f32 %v859, 0.0
          %v876 = vmax.f32 %v860, 0.0
          %v877 = vmax.f32 %v861, 0.0
          %v878 = vmax.f32 %v862, 0.0
          %v879 = vmax.f32 %v863, 0.0
          %v880 = vmax.f32 %v864, 0.0
          %v881 = vmax.f32 %v865, 0.0
          %v882 = vmax.f32 %v866, 0.0
          %v883 = vmax.f32 %v867, 0.0
          %v884 = vmax.f32 %v868, 0.0
          %v885 = vmax.f32 %v869, 0.0
          %v886 = vmax.f32 %v870, 0.0
          %v887 = vmax.f32 %v871, 0.0
          %v888 = vmax.f32 %v872, 0.0
          %889 = vst [vmem:[#allocation2] sm:$0xff] %v873
          %890 = vst [vmem:[#allocation2 + $0x8] sm:$0xff] %v874
          %891 = vst [vmem:[#allocation2 + $0x10] sm:$0xff] %v875
          %892 = vst [vmem:[#allocation2 + $0x18] sm:$0xff] %v876
          %s893 = scalar_lea.vmem [#allocation2], 64
          %894 = vst [vmem:[%s893] sm:$0xff] %v877
          %895 = vst [vmem:[%s893 + $0x8] sm:$0xff] %v878
          %896 = vst [vmem:[%s893 + $0x10] sm:$0xff] %v879
          %897 = vst [vmem:[%s893 + $0x18] sm:$0xff] %v880
          %s898 = scalar_lea.vmem [#allocation2], 128
          %899 = vst [vmem:[%s898] sm:$0xff] %v881
          %900 = vst [vmem:[%s898 + $0x8] sm:$0xff] %v882
          %901 = vst [vmem:[%s898 + $0x10] sm:$0xff] %v883
          %902 = vst [vmem:[%s898 + $0x18] sm:$0xff] %v884
          %s903 = scalar_lea.vmem [#allocation2], 192
          %904 = vst [vmem:[%s903] sm:$0xff] %v885
          %905 = vst [vmem:[%s903 + $0x8] sm:$0xff] %v886
          %906 = vst [vmem:[%s903 + $0x10] sm:$0xff] %v887
          %907 = vst [vmem:[%s903 + $0x18] sm:$0xff] %v888
          %v908 = vld [vmem:[%s1] sm:$0xff]
          %v909 = vld [vmem:[%s1 + $0x8] sm:$0xff]
          %v910 = vld [vmem:[%s1 + $0x10] sm:$0xff]
          %v911 = vld [vmem:[%s1 + $0x18] sm:$0xff]
          %v912 = vld [vmem:[%s1 + $0x20] sm:$0xff]
          %v913 = vld [vmem:[%s1 + $0x28] sm:$0xff]
          %v914 = vld [vmem:[%s1 + $0x30] sm:$0xff]
          %v915 = vld [vmem:[%s1 + $0x38] sm:$0xff]
          %v916 = vld [vmem:[%s0 + $0x40] sm:$0xff]
          %v917 = vld [vmem:[%s0 + $0x48] sm:$0xff]
          %v918 = vld [vmem:[%s0 + $0xc0] sm:$0xff]
          %v919 = vld [vmem:[%s0 + $0xc8] sm:$0xff]
          %v920 = vld [vmem:[%s0 + $0x140] sm:$0xff]
          %v921 = vld [vmem:[%s0 + $0x148] sm:$0xff]
          %v922 = vld [vmem:[%s0 + $0x1c0] sm:$0xff]
          %v923 = vld [vmem:[%s0 + $0x1c8] sm:$0xff]
          %v925 = vsel %vm324, %v908, 0
          %v928 = vsel %vm324, %v909, 0
          %v931 = vsel %vm324, %v910, 0
          %v934 = vsel %vm324, %v911, 0
          %v937 = vsel %vm324, %v912, 0
          %v940 = vsel %vm324, %v913, 0
          %v943 = vsel %vm324, %v914, 0
          %v946 = vsel %vm324, %v915, 0
          %948 = vmatprep.subr.mxu0 0.0
          %949 = vmatpush1.msra.mxu0 0.0
          %950 = vmatprep.subr.mxu0 0.0
          %951 = vmatpush1.msra.mxu0 0.0
          %952 = vmatprep.subr.mxu0 0.0
          %953 = vmatpush1.msra.mxu0 0.0
          %954 = vmatprep.subr.mxu0 0.0
          %955 = vmatpush1.msra.mxu0 0.0
          %956 = vmatprep.subr.mxu0 0.0
          %957 = vmatpush1.msra.mxu0 0.0
          %958 = vmatprep.subr.mxu0 0.0
          %959 = vmatpush1.msra.mxu0 0.0
          %960 = vmatprep.subr.mxu0 0.0
          %961 = vmatpush1.msra.mxu0 0.0
          %962 = vmatprep.subr.mxu0 0.0
          %963 = vmatpush1.msra.mxu0 0.0
          %964 = vmatprep.subr.mxu0 0.0
          %965 = vmatpush1.msra.mxu0 0.0
          %966 = vmatprep.subr.mxu0 0.0
          %967 = vmatpush1.msra.mxu0 0.0
          %968 = vmatprep.subr.mxu0 0.0
          %969 = vmatpush1.msra.mxu0 0.0
          %970 = vmatprep.subr.mxu0 0.0
          %971 = vmatpush1.msra.mxu0 0.0
          %972 = vmatprep.subr.mxu0 %v923
          %973 = vmatpush1.msra.mxu0 %v922
          %974 = vmatprep.subr.mxu0 %v921
          %975 = vmatpush1.msra.mxu0 %v920
          %976 = vmatprep.subr.mxu0 %v919
          %977 = vmatpush1.msra.mxu0 %v918
          %978 = vmatprep.subr.mxu0 %v917
          %979 = vmatpush1.msra.mxu0 %v916
          %980 = vmatprep.subr.mxu0 0.0
          %981 = vmatpush2.msra.mxu0 0.0
          %982 = vmatprep.subr.mxu0 0.0
          %983 = vmatpush2.msra.mxu0 0.0
          %984 = vmatprep.subr.mxu0 0.0
          %985 = vmatpush2.msra.mxu0 0.0
          %986 = vmatprep.subr.mxu0 0.0
          %987 = vmatpush2.msra.mxu0 0.0
          %988 = vmatprep.subr.mxu0 0.0
          %989 = vmatpush2.msra.mxu0 0.0
          %990 = vmatprep.subr.mxu0 0.0
          %991 = vmatpush2.msra.mxu0 0.0
          %992 = vmatprep.subr.mxu0 0.0
          %993 = vmatpush2.msra.mxu0 0.0
          %994 = vmatprep.subr.mxu0 0.0
          %995 = vmatpush2.msra.mxu0 0.0
          %996 = vmatprep.subr.mxu0 0.0
          %997 = vmatpush2.msra.mxu0 0.0
          %998 = vmatprep.subr.mxu0 0.0
          %999 = vmatpush2.msra.mxu0 0.0
          %1000 = vmatprep.subr.mxu0 0.0
          %1001 = vmatpush2.msra.mxu0 0.0
          %1002 = vmatprep.subr.mxu0 0.0
          %1003 = vmatpush2.msra.mxu0 0.0
          %1004 = vmatprep.subr.mxu0 0.0
          %1005 = vmatpush2.msra.mxu0 0.0
          %1006 = vmatprep.subr.mxu0 0.0
          %1007 = vmatpush2.msra.mxu0 0.0
          %1008 = vmatprep.subr.mxu0 0.0
          %1009 = vmatpush2.msra.mxu0 0.0
          %1010 = vmatprep.subr.mxu0 0.0
          %1011 = vmatpush2.msra.mxu0 0.0
          %1012 = vmatprep.mubr.f32.mxu0 0.0
          %1013 = vmatmul.mubr.f32.gmra.mxu0 %v925
          %v1014 = vpop.f32.mrf.mxu0
          %v1015 = vadd.f32 0.0, %v1014
          %v1016 = vpop.f32.mrf.mxu0
          %v1017 = vadd.f32 0.0, %v1016
          %1018 = vmatprep.mubr.f32.mxu0 0.0
          %1019 = vmatmul.mubr.f32.gmra.mxu0 %v928
          %v1020 = vpop.f32.mrf.mxu0
          %v1021 = vadd.f32 0.0, %v1020
          %v1022 = vpop.f32.mrf.mxu0
          %v1023 = vadd.f32 0.0, %v1022
          %1024 = vmatprep.mubr.f32.mxu0 0.0
          %1025 = vmatmul.mubr.f32.gmra.mxu0 %v931
          %v1026 = vpop.f32.mrf.mxu0
          %v1027 = vadd.f32 0.0, %v1026
          %v1028 = vpop.f32.mrf.mxu0
          %v1029 = vadd.f32 0.0, %v1028
          %1030 = vmatprep.mubr.f32.mxu0 0.0
          %1031 = vmatmul.mubr.f32.gmra.mxu0 %v934
          %v1032 = vpop.f32.mrf.mxu0
          %v1033 = vadd.f32 0.0, %v1032
          %v1034 = vpop.f32.mrf.mxu0
          %v1035 = vadd.f32 0.0, %v1034
          %1036 = vmatprep.mubr.f32.mxu0 0.0
          %1037 = vmatmul.mubr.f32.gmra.mxu0 %v937
          %v1038 = vpop.f32.mrf.mxu0
          %v1039 = vadd.f32 0.0, %v1038
          %v1040 = vpop.f32.mrf.mxu0
          %v1041 = vadd.f32 0.0, %v1040
          %1042 = vmatprep.mubr.f32.mxu0 0.0
          %1043 = vmatmul.mubr.f32.gmra.mxu0 %v940
          %v1044 = vpop.f32.mrf.mxu0
          %v1045 = vadd.f32 0.0, %v1044
          %v1046 = vpop.f32.mrf.mxu0
          %v1047 = vadd.f32 0.0, %v1046
          %1048 = vmatprep.mubr.f32.mxu0 0.0
          %1049 = vmatmul.mubr.f32.gmra.mxu0 %v943
          %v1050 = vpop.f32.mrf.mxu0
          %v1051 = vadd.f32 0.0, %v1050
          %v1052 = vpop.f32.mrf.mxu0
          %v1053 = vadd.f32 0.0, %v1052
          %1054 = vmatprep.mubr.f32.mxu0 0.0
          %1055 = vmatmul.mubr.f32.gmra.mxu0 %v946
          %v1056 = vpop.f32.mrf.mxu0
          %v1057 = vadd.f32 0.0, %v1056
          %v1058 = vpop.f32.mrf.mxu0
          %v1059 = vadd.f32 0.0, %v1058
          %1060 = vdwg.mxu0
          %v1061 = vld [vmem:[%s0 + $0x50] sm:$0xff]
          %v1062 = vld [vmem:[%s0 + $0x58] sm:$0xff]
          %v1063 = vld [vmem:[%s0 + $0xd0] sm:$0xff]
          %v1064 = vld [vmem:[%s0 + $0xd8] sm:$0xff]
          %v1065 = vld [vmem:[%s0 + $0x150] sm:$0xff]
          %v1066 = vld [vmem:[%s0 + $0x158] sm:$0xff]
          %v1067 = vld [vmem:[%s0 + $0x1d0] sm:$0xff]
          %v1068 = vld [vmem:[%s0 + $0x1d8] sm:$0xff]
          %1069 = vmatprep.subr.mxu0 0.0
          %1070 = vmatpush1.msra.mxu0 0.0
          %1071 = vmatprep.subr.mxu0 0.0
          %1072 = vmatpush1.msra.mxu0 0.0
          %1073 = vmatprep.subr.mxu0 0.0
          %1074 = vmatpush1.msra.mxu0 0.0
          %1075 = vmatprep.subr.mxu0 0.0
          %1076 = vmatpush1.msra.mxu0 0.0
          %1077 = vmatprep.subr.mxu0 0.0
          %1078 = vmatpush1.msra.mxu0 0.0
          %1079 = vmatprep.subr.mxu0 0.0
          %1080 = vmatpush1.msra.mxu0 0.0
          %1081 = vmatprep.subr.mxu0 0.0
          %1082 = vmatpush1.msra.mxu0 0.0
          %1083 = vmatprep.subr.mxu0 0.0
          %1084 = vmatpush1.msra.mxu0 0.0
          %1085 = vmatprep.subr.mxu0 0.0
          %1086 = vmatpush1.msra.mxu0 0.0
          %1087 = vmatprep.subr.mxu0 0.0
          %1088 = vmatpush1.msra.mxu0 0.0
          %1089 = vmatprep.subr.mxu0 0.0
          %1090 = vmatpush1.msra.mxu0 0.0
          %1091 = vmatprep.subr.mxu0 0.0
          %1092 = vmatpush1.msra.mxu0 0.0
          %1093 = vmatprep.subr.mxu0 %v1068
          %1094 = vmatpush1.msra.mxu0 %v1067
          %1095 = vmatprep.subr.mxu0 %v1066
          %1096 = vmatpush1.msra.mxu0 %v1065
          %1097 = vmatprep.subr.mxu0 %v1064
          %1098 = vmatpush1.msra.mxu0 %v1063
          %1099 = vmatprep.subr.mxu0 %v1062
          %1100 = vmatpush1.msra.mxu0 %v1061
          %1101 = vmatprep.subr.mxu0 0.0
          %1102 = vmatpush2.msra.mxu0 0.0
          %1103 = vmatprep.subr.mxu0 0.0
          %1104 = vmatpush2.msra.mxu0 0.0
          %1105 = vmatprep.subr.mxu0 0.0
          %1106 = vmatpush2.msra.mxu0 0.0
          %1107 = vmatprep.subr.mxu0 0.0
          %1108 = vmatpush2.msra.mxu0 0.0
          %1109 = vmatprep.subr.mxu0 0.0
          %1110 = vmatpush2.msra.mxu0 0.0
          %1111 = vmatprep.subr.mxu0 0.0
          %1112 = vmatpush2.msra.mxu0 0.0
          %1113 = vmatprep.subr.mxu0 0.0
          %1114 = vmatpush2.msra.mxu0 0.0
          %1115 = vmatprep.subr.mxu0 0.0
          %1116 = vmatpush2.msra.mxu0 0.0
          %1117 = vmatprep.subr.mxu0 0.0
          %1118 = vmatpush2.msra.mxu0 0.0
          %1119 = vmatprep.subr.mxu0 0.0
          %1120 = vmatpush2.msra.mxu0 0.0
          %1121 = vmatprep.subr.mxu0 0.0
          %1122 = vmatpush2.msra.mxu0 0.0
          %1123 = vmatprep.subr.mxu0 0.0
          %1124 = vmatpush2.msra.mxu0 0.0
          %1125 = vmatprep.subr.mxu0 0.0
          %1126 = vmatpush2.msra.mxu0 0.0
          %1127 = vmatprep.subr.mxu0 0.0
          %1128 = vmatpush2.msra.mxu0 0.0
          %1129 = vmatprep.subr.mxu0 0.0
          %1130 = vmatpush2.msra.mxu0 0.0
          %1131 = vmatprep.subr.mxu0 0.0
          %1132 = vmatpush2.msra.mxu0 0.0
          %1133 = vmatprep.mubr.f32.mxu0 0.0
          %1134 = vmatmul.mubr.f32.gmra.mxu0 %v925
          %v1135 = vpop.f32.mrf.mxu0
          %v1136 = vadd.f32 0.0, %v1135
          %v1137 = vpop.f32.mrf.mxu0
          %v1138 = vadd.f32 0.0, %v1137
          %1139 = vmatprep.mubr.f32.mxu0 0.0
          %1140 = vmatmul.mubr.f32.gmra.mxu0 %v928
          %v1141 = vpop.f32.mrf.mxu0
          %v1142 = vadd.f32 0.0, %v1141
          %v1143 = vpop.f32.mrf.mxu0
          %v1144 = vadd.f32 0.0, %v1143
          %1145 = vmatprep.mubr.f32.mxu0 0.0
          %1146 = vmatmul.mubr.f32.gmra.mxu0 %v931
          %v1147 = vpop.f32.mrf.mxu0
          %v1148 = vadd.f32 0.0, %v1147
          %v1149 = vpop.f32.mrf.mxu0
          %v1150 = vadd.f32 0.0, %v1149
          %1151 = vmatprep.mubr.f32.mxu0 0.0
          %1152 = vmatmul.mubr.f32.gmra.mxu0 %v934
          %v1153 = vpop.f32.mrf.mxu0
          %v1154 = vadd.f32 0.0, %v1153
          %v1155 = vpop.f32.mrf.mxu0
          %v1156 = vadd.f32 0.0, %v1155
          %1157 = vmatprep.mubr.f32.mxu0 0.0
          %1158 = vmatmul.mubr.f32.gmra.mxu0 %v937
          %v1159 = vpop.f32.mrf.mxu0
          %v1160 = vadd.f32 0.0, %v1159
          %v1161 = vpop.f32.mrf.mxu0
          %v1162 = vadd.f32 0.0, %v1161
          %1163 = vmatprep.mubr.f32.mxu0 0.0
          %1164 = vmatmul.mubr.f32.gmra.mxu0 %v940
          %v1165 = vpop.f32.mrf.mxu0
          %v1166 = vadd.f32 0.0, %v1165
          %v1167 = vpop.f32.mrf.mxu0
          %v1168 = vadd.f32 0.0, %v1167
          %1169 = vmatprep.mubr.f32.mxu0 0.0
          %1170 = vmatmul.mubr.f32.gmra.mxu0 %v943
          %v1171 = vpop.f32.mrf.mxu0
          %v1172 = vadd.f32 0.0, %v1171
          %v1173 = vpop.f32.mrf.mxu0
          %v1174 = vadd.f32 0.0, %v1173
          %1175 = vmatprep.mubr.f32.mxu0 0.0
          %1176 = vmatmul.mubr.f32.gmra.mxu0 %v946
          %v1177 = vpop.f32.mrf.mxu0
          %v1178 = vadd.f32 0.0, %v1177
          %v1179 = vpop.f32.mrf.mxu0
          %v1180 = vadd.f32 0.0, %v1179
          %1181 = vdwg.mxu0
          %v1182 = vmax.f32 %v1015, %v1136
          %v1183 = vmax.f32 %v1017, %v1138
          %v1184 = vmax.f32 %v1021, %v1142
          %v1185 = vmax.f32 %v1023, %v1144
          %v1186 = vmax.f32 %v1027, %v1148
          %v1187 = vmax.f32 %v1029, %v1150
          %v1188 = vmax.f32 %v1033, %v1154
          %v1189 = vmax.f32 %v1035, %v1156
          %v1190 = vmax.f32 %v1039, %v1160
          %v1191 = vmax.f32 %v1041, %v1162
          %v1192 = vmax.f32 %v1045, %v1166
          %v1193 = vmax.f32 %v1047, %v1168
          %v1194 = vmax.f32 %v1051, %v1172
          %v1195 = vmax.f32 %v1053, %v1174
          %v1196 = vmax.f32 %v1057, %v1178
          %v1197 = vmax.f32 %v1059, %v1180
          %v1198 = vld [vmem:[%s0 + $0x60] sm:$0xff]
          %v1199 = vld [vmem:[%s0 + $0x68] sm:$0xff]
          %v1200 = vld [vmem:[%s0 + $0xe0] sm:$0xff]
          %v1201 = vld [vmem:[%s0 + $0xe8] sm:$0xff]
          %v1202 = vld [vmem:[%s0 + $0x160] sm:$0xff]
          %v1203 = vld [vmem:[%s0 + $0x168] sm:$0xff]
          %v1204 = vld [vmem:[%s0 + $0x1e0] sm:$0xff]
          %v1205 = vld [vmem:[%s0 + $0x1e8] sm:$0xff]
          %1206 = vmatprep.subr.mxu0 0.0
          %1207 = vmatpush1.msra.mxu0 0.0
          %1208 = vmatprep.subr.mxu0 0.0
          %1209 = vmatpush1.msra.mxu0 0.0
          %1210 = vmatprep.subr.mxu0 0.0
          %1211 = vmatpush1.msra.mxu0 0.0
          %1212 = vmatprep.subr.mxu0 0.0
          %1213 = vmatpush1.msra.mxu0 0.0
          %1214 = vmatprep.subr.mxu0 0.0
          %1215 = vmatpush1.msra.mxu0 0.0
          %1216 = vmatprep.subr.mxu0 0.0
          %1217 = vmatpush1.msra.mxu0 0.0
          %1218 = vmatprep.subr.mxu0 0.0
          %1219 = vmatpush1.msra.mxu0 0.0
          %1220 = vmatprep.subr.mxu0 0.0
          %1221 = vmatpush1.msra.mxu0 0.0
          %1222 = vmatprep.subr.mxu0 0.0
          %1223 = vmatpush1.msra.mxu0 0.0
          %1224 = vmatprep.subr.mxu0 0.0
          %1225 = vmatpush1.msra.mxu0 0.0
          %1226 = vmatprep.subr.mxu0 0.0
          %1227 = vmatpush1.msra.mxu0 0.0
          %1228 = vmatprep.subr.mxu0 0.0
          %1229 = vmatpush1.msra.mxu0 0.0
          %1230 = vmatprep.subr.mxu0 %v1205
          %1231 = vmatpush1.msra.mxu0 %v1204
          %1232 = vmatprep.subr.mxu0 %v1203
          %1233 = vmatpush1.msra.mxu0 %v1202
          %1234 = vmatprep.subr.mxu0 %v1201
          %1235 = vmatpush1.msra.mxu0 %v1200
          %1236 = vmatprep.subr.mxu0 %v1199
          %1237 = vmatpush1.msra.mxu0 %v1198
          %1238 = vmatprep.subr.mxu0 0.0
          %1239 = vmatpush2.msra.mxu0 0.0
          %1240 = vmatprep.subr.mxu0 0.0
          %1241 = vmatpush2.msra.mxu0 0.0
          %1242 = vmatprep.subr.mxu0 0.0
          %1243 = vmatpush2.msra.mxu0 0.0
          %1244 = vmatprep.subr.mxu0 0.0
          %1245 = vmatpush2.msra.mxu0 0.0
          %1246 = vmatprep.subr.mxu0 0.0
          %1247 = vmatpush2.msra.mxu0 0.0
          %1248 = vmatprep.subr.mxu0 0.0
          %1249 = vmatpush2.msra.mxu0 0.0
          %1250 = vmatprep.subr.mxu0 0.0
          %1251 = vmatpush2.msra.mxu0 0.0
          %1252 = vmatprep.subr.mxu0 0.0
          %1253 = vmatpush2.msra.mxu0 0.0
          %1254 = vmatprep.subr.mxu0 0.0
          %1255 = vmatpush2.msra.mxu0 0.0
          %1256 = vmatprep.subr.mxu0 0.0
          %1257 = vmatpush2.msra.mxu0 0.0
          %1258 = vmatprep.subr.mxu0 0.0
          %1259 = vmatpush2.msra.mxu0 0.0
          %1260 = vmatprep.subr.mxu0 0.0
          %1261 = vmatpush2.msra.mxu0 0.0
          %1262 = vmatprep.subr.mxu0 0.0
          %1263 = vmatpush2.msra.mxu0 0.0
          %1264 = vmatprep.subr.mxu0 0.0
          %1265 = vmatpush2.msra.mxu0 0.0
          %1266 = vmatprep.subr.mxu0 0.0
          %1267 = vmatpush2.msra.mxu0 0.0
          %1268 = vmatprep.subr.mxu0 0.0
          %1269 = vmatpush2.msra.mxu0 0.0
          %1270 = vmatprep.mubr.f32.mxu0 0.0
          %1271 = vmatmul.mubr.f32.gmra.mxu0 %v925
          %v1272 = vpop.f32.mrf.mxu0
          %v1273 = vadd.f32 0.0, %v1272
          %v1274 = vpop.f32.mrf.mxu0
          %v1275 = vadd.f32 0.0, %v1274
          %1276 = vmatprep.mubr.f32.mxu0 0.0
          %1277 = vmatmul.mubr.f32.gmra.mxu0 %v928
          %v1278 = vpop.f32.mrf.mxu0
          %v1279 = vadd.f32 0.0, %v1278
          %v1280 = vpop.f32.mrf.mxu0
          %v1281 = vadd.f32 0.0, %v1280
          %1282 = vmatprep.mubr.f32.mxu0 0.0
          %1283 = vmatmul.mubr.f32.gmra.mxu0 %v931
          %v1284 = vpop.f32.mrf.mxu0
          %v1285 = vadd.f32 0.0, %v1284
          %v1286 = vpop.f32.mrf.mxu0
          %v1287 = vadd.f32 0.0, %v1286
          %1288 = vmatprep.mubr.f32.mxu0 0.0
          %1289 = vmatmul.mubr.f32.gmra.mxu0 %v934
          %v1290 = vpop.f32.mrf.mxu0
          %v1291 = vadd.f32 0.0, %v1290
          %v1292 = vpop.f32.mrf.mxu0
          %v1293 = vadd.f32 0.0, %v1292
          %1294 = vmatprep.mubr.f32.mxu0 0.0
          %1295 = vmatmul.mubr.f32.gmra.mxu0 %v937
          %v1296 = vpop.f32.mrf.mxu0
          %v1297 = vadd.f32 0.0, %v1296
          %v1298 = vpop.f32.mrf.mxu0
          %v1299 = vadd.f32 0.0, %v1298
          %1300 = vmatprep.mubr.f32.mxu0 0.0
          %1301 = vmatmul.mubr.f32.gmra.mxu0 %v940
          %v1302 = vpop.f32.mrf.mxu0
          %v1303 = vadd.f32 0.0, %v1302
          %v1304 = vpop.f32.mrf.mxu0
          %v1305 = vadd.f32 0.0, %v1304
          %1306 = vmatprep.mubr.f32.mxu0 0.0
          %1307 = vmatmul.mubr.f32.gmra.mxu0 %v943
          %v1308 = vpop.f32.mrf.mxu0
          %v1309 = vadd.f32 0.0, %v1308
          %v1310 = vpop.f32.mrf.mxu0
          %v1311 = vadd.f32 0.0, %v1310
          %1312 = vmatprep.mubr.f32.mxu0 0.0
          %1313 = vmatmul.mubr.f32.gmra.mxu0 %v946
          %v1314 = vpop.f32.mrf.mxu0
          %v1315 = vadd.f32 0.0, %v1314
          %v1316 = vpop.f32.mrf.mxu0
          %v1317 = vadd.f32 0.0, %v1316
          %1318 = vdwg.mxu0
          %v1319 = vmax.f32 %v1182, %v1273
          %v1320 = vmax.f32 %v1183, %v1275
          %v1321 = vmax.f32 %v1184, %v1279
          %v1322 = vmax.f32 %v1185, %v1281
          %v1323 = vmax.f32 %v1186, %v1285
          %v1324 = vmax.f32 %v1187, %v1287
          %v1325 = vmax.f32 %v1188, %v1291
          %v1326 = vmax.f32 %v1189, %v1293
          %v1327 = vmax.f32 %v1190, %v1297
          %v1328 = vmax.f32 %v1191, %v1299
          %v1329 = vmax.f32 %v1192, %v1303
          %v1330 = vmax.f32 %v1193, %v1305
          %v1331 = vmax.f32 %v1194, %v1309
          %v1332 = vmax.f32 %v1195, %v1311
          %v1333 = vmax.f32 %v1196, %v1315
          %v1334 = vmax.f32 %v1197, %v1317
          %v1335 = vld [vmem:[%s0 + $0x70] sm:$0xff]
          %v1336 = vld [vmem:[%s0 + $0x78] sm:$0xff]
          %v1337 = vld [vmem:[%s0 + $0xf0] sm:$0xff]
          %v1338 = vld [vmem:[%s0 + $0xf8] sm:$0xff]
          %v1339 = vld [vmem:[%s0 + $0x170] sm:$0xff]
          %v1340 = vld [vmem:[%s0 + $0x178] sm:$0xff]
          %v1341 = vld [vmem:[%s0 + $0x1f0] sm:$0xff]
          %v1342 = vld [vmem:[%s0 + $0x1f8] sm:$0xff]
          %1343 = vmatprep.subr.mxu0 0.0
          %1344 = vmatpush1.msra.mxu0 0.0
          %1345 = vmatprep.subr.mxu0 0.0
          %1346 = vmatpush1.msra.mxu0 0.0
          %1347 = vmatprep.subr.mxu0 0.0
          %1348 = vmatpush1.msra.mxu0 0.0
          %1349 = vmatprep.subr.mxu0 0.0
          %1350 = vmatpush1.msra.mxu0 0.0
          %1351 = vmatprep.subr.mxu0 0.0
          %1352 = vmatpush1.msra.mxu0 0.0
          %1353 = vmatprep.subr.mxu0 0.0
          %1354 = vmatpush1.msra.mxu0 0.0
          %1355 = vmatprep.subr.mxu0 0.0
          %1356 = vmatpush1.msra.mxu0 0.0
          %1357 = vmatprep.subr.mxu0 0.0
          %1358 = vmatpush1.msra.mxu0 0.0
          %1359 = vmatprep.subr.mxu0 0.0
          %1360 = vmatpush1.msra.mxu0 0.0
          %1361 = vmatprep.subr.mxu0 0.0
          %1362 = vmatpush1.msra.mxu0 0.0
          %1363 = vmatprep.subr.mxu0 0.0
          %1364 = vmatpush1.msra.mxu0 0.0
          %1365 = vmatprep.subr.mxu0 0.0
          %1366 = vmatpush1.msra.mxu0 0.0
          %1367 = vmatprep.subr.mxu0 %v1342
          %1368 = vmatpush1.msra.mxu0 %v1341
          %1369 = vmatprep.subr.mxu0 %v1340
          %1370 = vmatpush1.msra.mxu0 %v1339
          %1371 = vmatprep.subr.mxu0 %v1338
          %1372 = vmatpush1.msra.mxu0 %v1337
          %1373 = vmatprep.subr.mxu0 %v1336
          %1374 = vmatpush1.msra.mxu0 %v1335
          %1375 = vmatprep.subr.mxu0 0.0
          %1376 = vmatpush2.msra.mxu0 0.0
          %1377 = vmatprep.subr.mxu0 0.0
          %1378 = vmatpush2.msra.mxu0 0.0
          %1379 = vmatprep.subr.mxu0 0.0
          %1380 = vmatpush2.msra.mxu0 0.0
          %1381 = vmatprep.subr.mxu0 0.0
          %1382 = vmatpush2.msra.mxu0 0.0
          %1383 = vmatprep.subr.mxu0 0.0
          %1384 = vmatpush2.msra.mxu0 0.0
          %1385 = vmatprep.subr.mxu0 0.0
          %1386 = vmatpush2.msra.mxu0 0.0
          %1387 = vmatprep.subr.mxu0 0.0
          %1388 = vmatpush2.msra.mxu0 0.0
          %1389 = vmatprep.subr.mxu0 0.0
          %1390 = vmatpush2.msra.mxu0 0.0
          %1391 = vmatprep.subr.mxu0 0.0
          %1392 = vmatpush2.msra.mxu0 0.0
          %1393 = vmatprep.subr.mxu0 0.0
          %1394 = vmatpush2.msra.mxu0 0.0
          %1395 = vmatprep.subr.mxu0 0.0
          %1396 = vmatpush2.msra.mxu0 0.0
          %1397 = vmatprep.subr.mxu0 0.0
          %1398 = vmatpush2.msra.mxu0 0.0
          %1399 = vmatprep.subr.mxu0 0.0
          %1400 = vmatpush2.msra.mxu0 0.0
          %1401 = vmatprep.subr.mxu0 0.0
          %1402 = vmatpush2.msra.mxu0 0.0
          %1403 = vmatprep.subr.mxu0 0.0
          %1404 = vmatpush2.msra.mxu0 0.0
          %1405 = vmatprep.subr.mxu0 0.0
          %1406 = vmatpush2.msra.mxu0 0.0
          %1407 = vmatprep.mubr.f32.mxu0 0.0
          %1408 = vmatmul.mubr.f32.gmra.mxu0 %v925
          %v1409 = vpop.f32.mrf.mxu0
          %v1410 = vadd.f32 0.0, %v1409
          %v1411 = vpop.f32.mrf.mxu0
          %v1412 = vadd.f32 0.0, %v1411
          %1413 = vmatprep.mubr.f32.mxu0 0.0
          %1414 = vmatmul.mubr.f32.gmra.mxu0 %v928
          %v1415 = vpop.f32.mrf.mxu0
          %v1416 = vadd.f32 0.0, %v1415
          %v1417 = vpop.f32.mrf.mxu0
          %v1418 = vadd.f32 0.0, %v1417
          %1419 = vmatprep.mubr.f32.mxu0 0.0
          %1420 = vmatmul.mubr.f32.gmra.mxu0 %v931
          %v1421 = vpop.f32.mrf.mxu0
          %v1422 = vadd.f32 0.0, %v1421
          %v1423 = vpop.f32.mrf.mxu0
          %v1424 = vadd.f32 0.0, %v1423
          %1425 = vmatprep.mubr.f32.mxu0 0.0
          %1426 = vmatmul.mubr.f32.gmra.mxu0 %v934
          %v1427 = vpop.f32.mrf.mxu0
          %v1428 = vadd.f32 0.0, %v1427
          %v1429 = vpop.f32.mrf.mxu0
          %v1430 = vadd.f32 0.0, %v1429
          %1431 = vmatprep.mubr.f32.mxu0 0.0
          %1432 = vmatmul.mubr.f32.gmra.mxu0 %v937
          %v1433 = vpop.f32.mrf.mxu0
          %v1434 = vadd.f32 0.0, %v1433
          %v1435 = vpop.f32.mrf.mxu0
          %v1436 = vadd.f32 0.0, %v1435
          %1437 = vmatprep.mubr.f32.mxu0 0.0
          %1438 = vmatmul.mubr.f32.gmra.mxu0 %v940
          %v1439 = vpop.f32.mrf.mxu0
          %v1440 = vadd.f32 0.0, %v1439
          %v1441 = vpop.f32.mrf.mxu0
          %v1442 = vadd.f32 0.0, %v1441
          %1443 = vmatprep.mubr.f32.mxu0 0.0
          %1444 = vmatmul.mubr.f32.gmra.mxu0 %v943
          %v1445 = vpop.f32.mrf.mxu0
          %v1446 = vadd.f32 0.0, %v1445
          %v1447 = vpop.f32.mrf.mxu0
          %v1448 = vadd.f32 0.0, %v1447
          %1449 = vmatprep.mubr.f32.mxu0 0.0
          %1450 = vmatmul.mubr.f32.gmra.mxu0 %v946
          %v1451 = vpop.f32.mrf.mxu0
          %v1452 = vadd.f32 0.0, %v1451
          %v1453 = vpop.f32.mrf.mxu0
          %v1454 = vadd.f32 0.0, %v1453
          %1455 = vdwg.mxu0
          %v1456 = vmax.f32 %v1319, %v1410
          %v1457 = vmax.f32 %v1320, %v1412
          %v1458 = vmax.f32 %v1321, %v1416
          %v1459 = vmax.f32 %v1322, %v1418
          %v1460 = vmax.f32 %v1323, %v1422
          %v1461 = vmax.f32 %v1324, %v1424
          %v1462 = vmax.f32 %v1325, %v1428
          %v1463 = vmax.f32 %v1326, %v1430
          %v1464 = vmax.f32 %v1327, %v1434
          %v1465 = vmax.f32 %v1328, %v1436
          %v1466 = vmax.f32 %v1329, %v1440
          %v1467 = vmax.f32 %v1330, %v1442
          %v1468 = vmax.f32 %v1331, %v1446
          %v1469 = vmax.f32 %v1332, %v1448
          %v1470 = vmax.f32 %v1333, %v1452
          %v1471 = vmax.f32 %v1334, %v1454
          %v1472 = vmax.f32 %v1456, 0.0
          %v1473 = vmax.f32 %v1457, 0.0
          %v1474 = vmax.f32 %v1458, 0.0
          %v1475 = vmax.f32 %v1459, 0.0
          %v1476 = vmax.f32 %v1460, 0.0
          %v1477 = vmax.f32 %v1461, 0.0
          %v1478 = vmax.f32 %v1462, 0.0
          %v1479 = vmax.f32 %v1463, 0.0
          %v1480 = vmax.f32 %v1464, 0.0
          %v1481 = vmax.f32 %v1465, 0.0
          %v1482 = vmax.f32 %v1466, 0.0
          %v1483 = vmax.f32 %v1467, 0.0
          %v1484 = vmax.f32 %v1468, 0.0
          %v1485 = vmax.f32 %v1469, 0.0
          %v1486 = vmax.f32 %v1470, 0.0
          %v1487 = vmax.f32 %v1471, 0.0
          %s1488 = scalar_lea.vmem [#allocation2], 32
          %1489 = vst [vmem:[%s1488] sm:$0xff] %v1472
          %1490 = vst [vmem:[%s1488 + $0x8] sm:$0xff] %v1473
          %1491 = vst [vmem:[%s1488 + $0x10] sm:$0xff] %v1474
          %1492 = vst [vmem:[%s1488 + $0x18] sm:$0xff] %v1475
          %s1493 = scalar_lea.vmem [#allocation2], 96
          %1494 = vst [vmem:[%s1493] sm:$0xff] %v1476
          %1495 = vst [vmem:[%s1493 + $0x8] sm:$0xff] %v1477
          %1496 = vst [vmem:[%s1493 + $0x10] sm:$0xff] %v1478
          %1497 = vst [vmem:[%s1493 + $0x18] sm:$0xff] %v1479
          %s1498 = scalar_lea.vmem [#allocation2], 160
          %1499 = vst [vmem:[%s1498] sm:$0xff] %v1480
          %1500 = vst [vmem:[%s1498 + $0x8] sm:$0xff] %v1481
          %1501 = vst [vmem:[%s1498 + $0x10] sm:$0xff] %v1482
          %1502 = vst [vmem:[%s1498 + $0x18] sm:$0xff] %v1483
          %s1503 = scalar_lea.vmem [#allocation2], 224
          %1504 = vst [vmem:[%s1503] sm:$0xff] %v1484
          %1505 = vst [vmem:[%s1503 + $0x8] sm:$0xff] %v1485
          %1506 = vst [vmem:[%s1503 + $0x10] sm:$0xff] %v1486
          %1507 = vst [vmem:[%s1503 + $0x18] sm:$0xff] %v1487
        $region48: #{cnn_forward.1} parent=39 // pred_fallthru
          _
        %s1508 = smul.u32 %s24, 8
        %s1509 = smul.addr %s1508, 8
        %s1510 = scalar_lea.vmem [#allocation2], %s1509
        %v1511 = vld [vmem:[%s1510] sm:$0xff]
        %v1512 = vld [vmem:[%s1510 + $0x8] sm:$0xff]
        %v1513 = vld [vmem:[%s1510 + $0x10] sm:$0xff]
        %v1514 = vld [vmem:[%s1510 + $0x18] sm:$0xff]
        %v1515 = vld [vmem:[%s1510 + $0x20] sm:$0xff]
        %v1516 = vld [vmem:[%s1510 + $0x28] sm:$0xff]
        %v1517 = vld [vmem:[%s1510 + $0x30] sm:$0xff]
        %v1518 = vld [vmem:[%s1510 + $0x38] sm:$0xff]
        %v1519 = vld [vmem:[#allocation3] sm:$0xf]
        %v1520 = vld [vmem:[%s251] sm:$0xff]
        %v1521 = vld [vmem:[%s251 + $0x8] sm:$0xff]
        %v1522 = vld [vmem:[%s251 + $0x10] sm:$0xff]
        %v1523 = vld [vmem:[%s251 + $0x18] sm:$0xff]
        %v1524 = vld [vmem:[%s251 + $0x20] sm:$0xff]
        %v1525 = vld [vmem:[%s251 + $0x28] sm:$0xff]
        %v1526 = vld [vmem:[%s251 + $0x30] sm:$0xff]
        %v1527 = vld [vmem:[%s251 + $0x38] sm:$0xff]
        %v1528 = vld [vmem:[%s251 + $0x40] sm:$0xff]
        %v1529 = vld [vmem:[%s251 + $0x48] sm:$0xff]
        %v1530 = vld [vmem:[%s251 + $0x50] sm:$0xff]
        %v1531 = vld [vmem:[%s251 + $0x58] sm:$0xff]
        %v1532 = vld [vmem:[%s251 + $0x60] sm:$0xff]
        %v1533 = vld [vmem:[%s251 + $0x68] sm:$0xff]
        %v1534 = vld [vmem:[%s251 + $0x70] sm:$0xff]
        %v1535 = vld [vmem:[%s251 + $0x78] sm:$0xff]
        %v1536 = vld [vmem:[%s251 + $0x80] sm:$0xff]
        %v1537 = vld [vmem:[%s251 + $0x88] sm:$0xff]
        %v1538 = vld [vmem:[%s251 + $0x90] sm:$0xff]
        %v1539 = vld [vmem:[%s251 + $0x98] sm:$0xff]
        %v1540 = vld [vmem:[%s251 + $0xa0] sm:$0xff]
        %v1541 = vld [vmem:[%s251 + $0xa8] sm:$0xff]
        %v1542 = vld [vmem:[%s251 + $0xb0] sm:$0xff]
        %v1543 = vld [vmem:[%s251 + $0xb8] sm:$0xff]
        %v1544 = vld [vmem:[%s251 + $0xc0] sm:$0xff]
        %v1545 = vld [vmem:[%s251 + $0xc8] sm:$0xff]
        %v1546 = vld [vmem:[%s251 + $0xd0] sm:$0xff]
        %v1547 = vld [vmem:[%s251 + $0xd8] sm:$0xff]
        %v1548 = vld [vmem:[%s251 + $0xe0] sm:$0xff]
        %v1549 = vld [vmem:[%s251 + $0xe8] sm:$0xff]
        %v1550 = vld [vmem:[%s251 + $0xf0] sm:$0xff]
        %v1551 = vld [vmem:[%s251 + $0xf8] sm:$0xff]
        %v1552 = vld [vmem:[%s251 + $0x100] sm:$0xff]
        %v1553 = vld [vmem:[%s251 + $0x108] sm:$0xff]
        %v1554 = vld [vmem:[%s251 + $0x110] sm:$0xff]
        %v1555 = vld [vmem:[%s251 + $0x118] sm:$0xff]
        %v1556 = vld [vmem:[%s251 + $0x120] sm:$0xff]
        %v1557 = vld [vmem:[%s251 + $0x128] sm:$0xff]
        %v1558 = vld [vmem:[%s251 + $0x130] sm:$0xff]
        %v1559 = vld [vmem:[%s251 + $0x138] sm:$0xff]
        %v1560 = vld [vmem:[%s251 + $0x140] sm:$0xff]
        %v1561 = vld [vmem:[%s251 + $0x148] sm:$0xff]
        %v1562 = vld [vmem:[%s251 + $0x150] sm:$0xff]
        %v1563 = vld [vmem:[%s251 + $0x158] sm:$0xff]
        %v1564 = vld [vmem:[%s251 + $0x160] sm:$0xff]
        %v1565 = vld [vmem:[%s251 + $0x168] sm:$0xff]
        %v1566 = vld [vmem:[%s251 + $0x170] sm:$0xff]
        %v1567 = vld [vmem:[%s251 + $0x178] sm:$0xff]
        %v1568 = vld [vmem:[%s251 + $0x180] sm:$0xff]
        %v1569 = vld [vmem:[%s251 + $0x188] sm:$0xff]
        %v1570 = vld [vmem:[%s251 + $0x190] sm:$0xff]
        %v1571 = vld [vmem:[%s251 + $0x198] sm:$0xff]
        %v1572 = vld [vmem:[%s251 + $0x1a0] sm:$0xff]
        %v1573 = vld [vmem:[%s251 + $0x1a8] sm:$0xff]
        %v1574 = vld [vmem:[%s251 + $0x1b0] sm:$0xff]
        %v1575 = vld [vmem:[%s251 + $0x1b8] sm:$0xff]
        %v1576 = vld [vmem:[%s251 + $0x1c0] sm:$0xff]
        %v1577 = vld [vmem:[%s251 + $0x1c8] sm:$0xff]
        %v1578 = vld [vmem:[%s251 + $0x1d0] sm:$0xff]
        %v1579 = vld [vmem:[%s251 + $0x1d8] sm:$0xff]
        %v1580 = vld [vmem:[%s251 + $0x1e0] sm:$0xff]
        %v1581 = vld [vmem:[%s251 + $0x1e8] sm:$0xff]
        %v1582 = vld [vmem:[%s251 + $0x1f0] sm:$0xff]
        %v1583 = vld [vmem:[%s251 + $0x1f8] sm:$0xff]
        %v1588 = vrot.slane %v1515, 7
        %vm1589 = vcmask 1041409
        %v1590 = vsel %vm1589, %v1588, %v1511
        %v1591 = vrot.slane %v1516, 7
        %v1592 = vsel %vm1589, %v1591, %v1512
        %1595 = vmatprep.subr.mxu0 %v1551
        %1596 = vmatpush1.msra.mxu0 %v1550
        %1597 = vmatprep.subr.mxu0 %v1549
        %1598 = vmatpush1.msra.mxu0 %v1548
        %1599 = vmatprep.subr.mxu0 %v1547
        %1600 = vmatpush1.msra.mxu0 %v1546
        %1601 = vmatprep.subr.mxu0 %v1545
        %1602 = vmatpush1.msra.mxu0 %v1544
        %1603 = vmatprep.subr.mxu0 %v1543
        %1604 = vmatpush1.msra.mxu0 %v1542
        %1605 = vmatprep.subr.mxu0 %v1541
        %1606 = vmatpush1.msra.mxu0 %v1540
        %1607 = vmatprep.subr.mxu0 %v1539
        %1608 = vmatpush1.msra.mxu0 %v1538
        %1609 = vmatprep.subr.mxu0 %v1537
        %1610 = vmatpush1.msra.mxu0 %v1536
        %1611 = vmatprep.subr.mxu0 %v1535
        %1612 = vmatpush1.msra.mxu0 %v1534
        %1613 = vmatprep.subr.mxu0 %v1533
        %1614 = vmatpush1.msra.mxu0 %v1532
        %1615 = vmatprep.subr.mxu0 %v1531
        %1616 = vmatpush1.msra.mxu0 %v1530
        %1617 = vmatprep.subr.mxu0 %v1529
        %1618 = vmatpush1.msra.mxu0 %v1528
        %1619 = vmatprep.subr.mxu0 %v1527
        %1620 = vmatpush1.msra.mxu0 %v1526
        %1621 = vmatprep.subr.mxu0 %v1525
        %1622 = vmatpush1.msra.mxu0 %v1524
        %1623 = vmatprep.subr.mxu0 %v1523
        %1624 = vmatpush1.msra.mxu0 %v1522
        %1625 = vmatprep.subr.mxu0 %v1521
        %1626 = vmatpush1.msra.mxu0 %v1520
        %1627 = vmatprep.subr.mxu0 %v1583
        %1628 = vmatpush2.msra.mxu0 %v1582
        %1629 = vmatprep.subr.mxu0 %v1581
        %1630 = vmatpush2.msra.mxu0 %v1580
        %1631 = vmatprep.subr.mxu0 %v1579
        %1632 = vmatpush2.msra.mxu0 %v1578
        %1633 = vmatprep.subr.mxu0 %v1577
        %1634 = vmatpush2.msra.mxu0 %v1576
        %1635 = vmatprep.subr.mxu0 %v1575
        %1636 = vmatpush2.msra.mxu0 %v1574
        %1637 = vmatprep.subr.mxu0 %v1573
        %1638 = vmatpush2.msra.mxu0 %v1572
        %1639 = vmatprep.subr.mxu0 %v1571
        %1640 = vmatpush2.msra.mxu0 %v1570
        %1641 = vmatprep.subr.mxu0 %v1569
        %1642 = vmatpush2.msra.mxu0 %v1568
        %1643 = vmatprep.subr.mxu0 %v1567
        %1644 = vmatpush2.msra.mxu0 %v1566
        %1645 = vmatprep.subr.mxu0 %v1565
        %1646 = vmatpush2.msra.mxu0 %v1564
        %1647 = vmatprep.subr.mxu0 %v1563
        %1648 = vmatpush2.msra.mxu0 %v1562
        %1649 = vmatprep.subr.mxu0 %v1561
        %1650 = vmatpush2.msra.mxu0 %v1560
        %1651 = vmatprep.subr.mxu0 %v1559
        %1652 = vmatpush2.msra.mxu0 %v1558
        %1653 = vmatprep.subr.mxu0 %v1557
        %1654 = vmatpush2.msra.mxu0 %v1556
        %1655 = vmatprep.subr.mxu0 %v1555
        %1656 = vmatpush2.msra.mxu0 %v1554
        %1657 = vmatprep.subr.mxu0 %v1553
        %1658 = vmatpush2.msra.mxu0 %v1552
        %1659 = vmatprep.mubr.f32.mxu0 %v1592
        %1660 = vmatmul.mubr.f32.gmra.mxu0 %v1590
        %v1661 = vpop.f32.mrf.mxu0
        %v1662 = vadd.f32 0.0, %v1661
        %v1663 = vpop.f32.mrf.mxu0
        %v1664 = vadd.f32 0.0, %v1663
        %1665 = vdwg.mxu0
        %v1668 = vcombine.low %v1662, %v1664
        %v1670 = vunpack.c.l.s4 1983009808
        %v1671 = vunpack.c.0.s8 %v1670
        %v1672 = vlaneseq
        %v1673 = vshrl.u32 %v1672, 7
        %v1674 = vsub.s32 %v1671, %v1673
        %v1675 = vrot.slane %v1668, %v1674
        %v1677 = vadd.f32 %v1519, %v1675
        %s1678 = scalar_lea.vmem %s251, 512 [#allocation4]
        %v1679 = vld [vmem:[%s1678] sm:$0xff]
        %v1680 = vld [vmem:[%s1678 + $0x8] sm:$0xff]
        %v1681 = vld [vmem:[%s1678 + $0x10] sm:$0xff]
        %v1682 = vld [vmem:[%s1678 + $0x18] sm:$0xff]
        %v1683 = vld [vmem:[%s1678 + $0x20] sm:$0xff]
        %v1684 = vld [vmem:[%s1678 + $0x28] sm:$0xff]
        %v1685 = vld [vmem:[%s1678 + $0x30] sm:$0xff]
        %v1686 = vld [vmem:[%s1678 + $0x38] sm:$0xff]
        %v1687 = vld [vmem:[%s1678 + $0x40] sm:$0xff]
        %v1688 = vld [vmem:[%s1678 + $0x48] sm:$0xff]
        %v1689 = vld [vmem:[%s1678 + $0x50] sm:$0xff]
        %v1690 = vld [vmem:[%s1678 + $0x58] sm:$0xff]
        %v1691 = vld [vmem:[%s1678 + $0x60] sm:$0xff]
        %v1692 = vld [vmem:[%s1678 + $0x68] sm:$0xff]
        %v1693 = vld [vmem:[%s1678 + $0x70] sm:$0xff]
        %v1694 = vld [vmem:[%s1678 + $0x78] sm:$0xff]
        %v1695 = vld [vmem:[%s1678 + $0x80] sm:$0xff]
        %v1696 = vld [vmem:[%s1678 + $0x88] sm:$0xff]
        %v1697 = vld [vmem:[%s1678 + $0x90] sm:$0xff]
        %v1698 = vld [vmem:[%s1678 + $0x98] sm:$0xff]
        %v1699 = vld [vmem:[%s1678 + $0xa0] sm:$0xff]
        %v1700 = vld [vmem:[%s1678 + $0xa8] sm:$0xff]
        %v1701 = vld [vmem:[%s1678 + $0xb0] sm:$0xff]
        %v1702 = vld [vmem:[%s1678 + $0xb8] sm:$0xff]
        %v1703 = vld [vmem:[%s1678 + $0xc0] sm:$0xff]
        %v1704 = vld [vmem:[%s1678 + $0xc8] sm:$0xff]
        %v1705 = vld [vmem:[%s1678 + $0xd0] sm:$0xff]
        %v1706 = vld [vmem:[%s1678 + $0xd8] sm:$0xff]
        %v1707 = vld [vmem:[%s1678 + $0xe0] sm:$0xff]
        %v1708 = vld [vmem:[%s1678 + $0xe8] sm:$0xff]
        %v1709 = vld [vmem:[%s1678 + $0xf0] sm:$0xff]
        %v1710 = vld [vmem:[%s1678 + $0xf8] sm:$0xff]
        %v1711 = vld [vmem:[%s1678 + $0x100] sm:$0xff]
        %v1712 = vld [vmem:[%s1678 + $0x108] sm:$0xff]
        %v1713 = vld [vmem:[%s1678 + $0x110] sm:$0xff]
        %v1714 = vld [vmem:[%s1678 + $0x118] sm:$0xff]
        %v1715 = vld [vmem:[%s1678 + $0x120] sm:$0xff]
        %v1716 = vld [vmem:[%s1678 + $0x128] sm:$0xff]
        %v1717 = vld [vmem:[%s1678 + $0x130] sm:$0xff]
        %v1718 = vld [vmem:[%s1678 + $0x138] sm:$0xff]
        %v1719 = vld [vmem:[%s1678 + $0x140] sm:$0xff]
        %v1720 = vld [vmem:[%s1678 + $0x148] sm:$0xff]
        %v1721 = vld [vmem:[%s1678 + $0x150] sm:$0xff]
        %v1722 = vld [vmem:[%s1678 + $0x158] sm:$0xff]
        %v1723 = vld [vmem:[%s1678 + $0x160] sm:$0xff]
        %v1724 = vld [vmem:[%s1678 + $0x168] sm:$0xff]
        %v1725 = vld [vmem:[%s1678 + $0x170] sm:$0xff]
        %v1726 = vld [vmem:[%s1678 + $0x178] sm:$0xff]
        %v1727 = vld [vmem:[%s1678 + $0x180] sm:$0xff]
        %v1728 = vld [vmem:[%s1678 + $0x188] sm:$0xff]
        %v1729 = vld [vmem:[%s1678 + $0x190] sm:$0xff]
        %v1730 = vld [vmem:[%s1678 + $0x198] sm:$0xff]
        %v1731 = vld [vmem:[%s1678 + $0x1a0] sm:$0xff]
        %v1732 = vld [vmem:[%s1678 + $0x1a8] sm:$0xff]
        %v1733 = vld [vmem:[%s1678 + $0x1b0] sm:$0xff]
        %v1734 = vld [vmem:[%s1678 + $0x1b8] sm:$0xff]
        %v1735 = vld [vmem:[%s1678 + $0x1c0] sm:$0xff]
        %v1736 = vld [vmem:[%s1678 + $0x1c8] sm:$0xff]
        %v1737 = vld [vmem:[%s1678 + $0x1d0] sm:$0xff]
        %v1738 = vld [vmem:[%s1678 + $0x1d8] sm:$0xff]
        %v1739 = vld [vmem:[%s1678 + $0x1e0] sm:$0xff]
        %v1740 = vld [vmem:[%s1678 + $0x1e8] sm:$0xff]
        %v1741 = vld [vmem:[%s1678 + $0x1f0] sm:$0xff]
        %v1742 = vld [vmem:[%s1678 + $0x1f8] sm:$0xff]
        %v1743 = vrot.slane %v1511, 1
        %v1744 = vsel %vm1589, %v1515, %v1743
        %v1745 = vrot.slane %v1512, 1
        %v1746 = vsel %vm1589, %v1516, %v1745
        %1749 = vmatprep.subr.mxu0 %v1710
        %1750 = vmatpush1.msra.mxu0 %v1709
        %1751 = vmatprep.subr.mxu0 %v1708
        %1752 = vmatpush1.msra.mxu0 %v1707
        %1753 = vmatprep.subr.mxu0 %v1706
        %1754 = vmatpush1.msra.mxu0 %v1705
        %1755 = vmatprep.subr.mxu0 %v1704
        %1756 = vmatpush1.msra.mxu0 %v1703
        %1757 = vmatprep.subr.mxu0 %v1702
        %1758 = vmatpush1.msra.mxu0 %v1701
        %1759 = vmatprep.subr.mxu0 %v1700
        %1760 = vmatpush1.msra.mxu0 %v1699
        %1761 = vmatprep.subr.mxu0 %v1698
        %1762 = vmatpush1.msra.mxu0 %v1697
        %1763 = vmatprep.subr.mxu0 %v1696
        %1764 = vmatpush1.msra.mxu0 %v1695
        %1765 = vmatprep.subr.mxu0 %v1694
        %1766 = vmatpush1.msra.mxu0 %v1693
        %1767 = vmatprep.subr.mxu0 %v1692
        %1768 = vmatpush1.msra.mxu0 %v1691
        %1769 = vmatprep.subr.mxu0 %v1690
        %1770 = vmatpush1.msra.mxu0 %v1689
        %1771 = vmatprep.subr.mxu0 %v1688
        %1772 = vmatpush1.msra.mxu0 %v1687
        %1773 = vmatprep.subr.mxu0 %v1686
        %1774 = vmatpush1.msra.mxu0 %v1685
        %1775 = vmatprep.subr.mxu0 %v1684
        %1776 = vmatpush1.msra.mxu0 %v1683
        %1777 = vmatprep.subr.mxu0 %v1682
        %1778 = vmatpush1.msra.mxu0 %v1681
        %1779 = vmatprep.subr.mxu0 %v1680
        %1780 = vmatpush1.msra.mxu0 %v1679
        %1781 = vmatprep.subr.mxu0 %v1742
        %1782 = vmatpush2.msra.mxu0 %v1741
        %1783 = vmatprep.subr.mxu0 %v1740
        %1784 = vmatpush2.msra.mxu0 %v1739
        %1785 = vmatprep.subr.mxu0 %v1738
        %1786 = vmatpush2.msra.mxu0 %v1737
        %1787 = vmatprep.subr.mxu0 %v1736
        %1788 = vmatpush2.msra.mxu0 %v1735
        %1789 = vmatprep.subr.mxu0 %v1734
        %1790 = vmatpush2.msra.mxu0 %v1733
        %1791 = vmatprep.subr.mxu0 %v1732
        %1792 = vmatpush2.msra.mxu0 %v1731
        %1793 = vmatprep.subr.mxu0 %v1730
        %1794 = vmatpush2.msra.mxu0 %v1729
        %1795 = vmatprep.subr.mxu0 %v1728
        %1796 = vmatpush2.msra.mxu0 %v1727
        %1797 = vmatprep.subr.mxu0 %v1726
        %1798 = vmatpush2.msra.mxu0 %v1725
        %1799 = vmatprep.subr.mxu0 %v1724
        %1800 = vmatpush2.msra.mxu0 %v1723
        %1801 = vmatprep.subr.mxu0 %v1722
        %1802 = vmatpush2.msra.mxu0 %v1721
        %1803 = vmatprep.subr.mxu0 %v1720
        %1804 = vmatpush2.msra.mxu0 %v1719
        %1805 = vmatprep.subr.mxu0 %v1718
        %1806 = vmatpush2.msra.mxu0 %v1717
        %1807 = vmatprep.subr.mxu0 %v1716
        %1808 = vmatpush2.msra.mxu0 %v1715
        %1809 = vmatprep.subr.mxu0 %v1714
        %1810 = vmatpush2.msra.mxu0 %v1713
        %1811 = vmatprep.subr.mxu0 %v1712
        %1812 = vmatpush2.msra.mxu0 %v1711
        %1813 = vmatprep.mubr.f32.mxu0 %v1746
        %1814 = vmatmul.mubr.f32.gmra.mxu0 %v1744
        %v1815 = vpop.f32.mrf.mxu0
        %v1816 = vadd.f32 0.0, %v1815
        %v1817 = vpop.f32.mrf.mxu0
        %v1818 = vadd.f32 0.0, %v1817
        %1819 = vdwg.mxu0
        %v1822 = vcombine.low %v1816, %v1818
        %v1824 = vunpack.c.l.s4 1983009808
        %v1825 = vunpack.c.0.s8 %v1824
        %v1826 = vlaneseq
        %v1827 = vshrl.u32 %v1826, 7
        %v1828 = vsub.s32 %v1825, %v1827
        %v1829 = vrot.slane %v1822, %v1828
        %v1831 = vadd.f32 %v1677, %v1829
        %s1832 = scalar_lea.vmem %s251, 1024 [#allocation4]
        %v1833 = vld [vmem:[%s1832] sm:$0xff]
        %v1834 = vld [vmem:[%s1832 + $0x8] sm:$0xff]
        %v1835 = vld [vmem:[%s1832 + $0x10] sm:$0xff]
        %v1836 = vld [vmem:[%s1832 + $0x18] sm:$0xff]
        %v1837 = vld [vmem:[%s1832 + $0x20] sm:$0xff]
        %v1838 = vld [vmem:[%s1832 + $0x28] sm:$0xff]
        %v1839 = vld [vmem:[%s1832 + $0x30] sm:$0xff]
        %v1840 = vld [vmem:[%s1832 + $0x38] sm:$0xff]
        %v1841 = vld [vmem:[%s1832 + $0x40] sm:$0xff]
        %v1842 = vld [vmem:[%s1832 + $0x48] sm:$0xff]
        %v1843 = vld [vmem:[%s1832 + $0x50] sm:$0xff]
        %v1844 = vld [vmem:[%s1832 + $0x58] sm:$0xff]
        %v1845 = vld [vmem:[%s1832 + $0x60] sm:$0xff]
        %v1846 = vld [vmem:[%s1832 + $0x68] sm:$0xff]
        %v1847 = vld [vmem:[%s1832 + $0x70] sm:$0xff]
        %v1848 = vld [vmem:[%s1832 + $0x78] sm:$0xff]
        %v1849 = vld [vmem:[%s1832 + $0x80] sm:$0xff]
        %v1850 = vld [vmem:[%s1832 + $0x88] sm:$0xff]
        %v1851 = vld [vmem:[%s1832 + $0x90] sm:$0xff]
        %v1852 = vld [vmem:[%s1832 + $0x98] sm:$0xff]
        %v1853 = vld [vmem:[%s1832 + $0xa0] sm:$0xff]
        %v1854 = vld [vmem:[%s1832 + $0xa8] sm:$0xff]
        %v1855 = vld [vmem:[%s1832 + $0xb0] sm:$0xff]
        %v1856 = vld [vmem:[%s1832 + $0xb8] sm:$0xff]
        %v1857 = vld [vmem:[%s1832 + $0xc0] sm:$0xff]
        %v1858 = vld [vmem:[%s1832 + $0xc8] sm:$0xff]
        %v1859 = vld [vmem:[%s1832 + $0xd0] sm:$0xff]
        %v1860 = vld [vmem:[%s1832 + $0xd8] sm:$0xff]
        %v1861 = vld [vmem:[%s1832 + $0xe0] sm:$0xff]
        %v1862 = vld [vmem:[%s1832 + $0xe8] sm:$0xff]
        %v1863 = vld [vmem:[%s1832 + $0xf0] sm:$0xff]
        %v1864 = vld [vmem:[%s1832 + $0xf8] sm:$0xff]
        %v1865 = vld [vmem:[%s1832 + $0x100] sm:$0xff]
        %v1866 = vld [vmem:[%s1832 + $0x108] sm:$0xff]
        %v1867 = vld [vmem:[%s1832 + $0x110] sm:$0xff]
        %v1868 = vld [vmem:[%s1832 + $0x118] sm:$0xff]
        %v1869 = vld [vmem:[%s1832 + $0x120] sm:$0xff]
        %v1870 = vld [vmem:[%s1832 + $0x128] sm:$0xff]
        %v1871 = vld [vmem:[%s1832 + $0x130] sm:$0xff]
        %v1872 = vld [vmem:[%s1832 + $0x138] sm:$0xff]
        %v1873 = vld [vmem:[%s1832 + $0x140] sm:$0xff]
        %v1874 = vld [vmem:[%s1832 + $0x148] sm:$0xff]
        %v1875 = vld [vmem:[%s1832 + $0x150] sm:$0xff]
        %v1876 = vld [vmem:[%s1832 + $0x158] sm:$0xff]
        %v1877 = vld [vmem:[%s1832 + $0x160] sm:$0xff]
        %v1878 = vld [vmem:[%s1832 + $0x168] sm:$0xff]
        %v1879 = vld [vmem:[%s1832 + $0x170] sm:$0xff]
        %v1880 = vld [vmem:[%s1832 + $0x178] sm:$0xff]
        %v1881 = vld [vmem:[%s1832 + $0x180] sm:$0xff]
        %v1882 = vld [vmem:[%s1832 + $0x188] sm:$0xff]
        %v1883 = vld [vmem:[%s1832 + $0x190] sm:$0xff]
        %v1884 = vld [vmem:[%s1832 + $0x198] sm:$0xff]
        %v1885 = vld [vmem:[%s1832 + $0x1a0] sm:$0xff]
        %v1886 = vld [vmem:[%s1832 + $0x1a8] sm:$0xff]
        %v1887 = vld [vmem:[%s1832 + $0x1b0] sm:$0xff]
        %v1888 = vld [vmem:[%s1832 + $0x1b8] sm:$0xff]
        %v1889 = vld [vmem:[%s1832 + $0x1c0] sm:$0xff]
        %v1890 = vld [vmem:[%s1832 + $0x1c8] sm:$0xff]
        %v1891 = vld [vmem:[%s1832 + $0x1d0] sm:$0xff]
        %v1892 = vld [vmem:[%s1832 + $0x1d8] sm:$0xff]
        %v1893 = vld [vmem:[%s1832 + $0x1e0] sm:$0xff]
        %v1894 = vld [vmem:[%s1832 + $0x1e8] sm:$0xff]
        %v1895 = vld [vmem:[%s1832 + $0x1f0] sm:$0xff]
        %v1896 = vld [vmem:[%s1832 + $0x1f8] sm:$0xff]
        %v1897 = vrot.slane %v1511, 2
        %v1898 = vrot.slane %v1515, 1
        %v1899 = vsel %vm1589, %v1898, %v1897
        %v1900 = vrot.slane %v1512, 2
        %v1901 = vrot.slane %v1516, 1
        %v1902 = vsel %vm1589, %v1901, %v1900
        %1905 = vmatprep.subr.mxu0 %v1864
        %1906 = vmatpush1.msra.mxu0 %v1863
        %1907 = vmatprep.subr.mxu0 %v1862
        %1908 = vmatpush1.msra.mxu0 %v1861
        %1909 = vmatprep.subr.mxu0 %v1860
        %1910 = vmatpush1.msra.mxu0 %v1859
        %1911 = vmatprep.subr.mxu0 %v1858
        %1912 = vmatpush1.msra.mxu0 %v1857
        %1913 = vmatprep.subr.mxu0 %v1856
        %1914 = vmatpush1.msra.mxu0 %v1855
        %1915 = vmatprep.subr.mxu0 %v1854
        %1916 = vmatpush1.msra.mxu0 %v1853
        %1917 = vmatprep.subr.mxu0 %v1852
        %1918 = vmatpush1.msra.mxu0 %v1851
        %1919 = vmatprep.subr.mxu0 %v1850
        %1920 = vmatpush1.msra.mxu0 %v1849
        %1921 = vmatprep.subr.mxu0 %v1848
        %1922 = vmatpush1.msra.mxu0 %v1847
        %1923 = vmatprep.subr.mxu0 %v1846
        %1924 = vmatpush1.msra.mxu0 %v1845
        %1925 = vmatprep.subr.mxu0 %v1844
        %1926 = vmatpush1.msra.mxu0 %v1843
        %1927 = vmatprep.subr.mxu0 %v1842
        %1928 = vmatpush1.msra.mxu0 %v1841
        %1929 = vmatprep.subr.mxu0 %v1840
        %1930 = vmatpush1.msra.mxu0 %v1839
        %1931 = vmatprep.subr.mxu0 %v1838
        %1932 = vmatpush1.msra.mxu0 %v1837
        %1933 = vmatprep.subr.mxu0 %v1836
        %1934 = vmatpush1.msra.mxu0 %v1835
        %1935 = vmatprep.subr.mxu0 %v1834
        %1936 = vmatpush1.msra.mxu0 %v1833
        %1937 = vmatprep.subr.mxu0 %v1896
        %1938 = vmatpush2.msra.mxu0 %v1895
        %1939 = vmatprep.subr.mxu0 %v1894
        %1940 = vmatpush2.msra.mxu0 %v1893
        %1941 = vmatprep.subr.mxu0 %v1892
        %1942 = vmatpush2.msra.mxu0 %v1891
        %1943 = vmatprep.subr.mxu0 %v1890
        %1944 = vmatpush2.msra.mxu0 %v1889
        %1945 = vmatprep.subr.mxu0 %v1888
        %1946 = vmatpush2.msra.mxu0 %v1887
        %1947 = vmatprep.subr.mxu0 %v1886
        %1948 = vmatpush2.msra.mxu0 %v1885
        %1949 = vmatprep.subr.mxu0 %v1884
        %1950 = vmatpush2.msra.mxu0 %v1883
        %1951 = vmatprep.subr.mxu0 %v1882
        %1952 = vmatpush2.msra.mxu0 %v1881
        %1953 = vmatprep.subr.mxu0 %v1880
        %1954 = vmatpush2.msra.mxu0 %v1879
        %1955 = vmatprep.subr.mxu0 %v1878
        %1956 = vmatpush2.msra.mxu0 %v1877
        %1957 = vmatprep.subr.mxu0 %v1876
        %1958 = vmatpush2.msra.mxu0 %v1875
        %1959 = vmatprep.subr.mxu0 %v1874
        %1960 = vmatpush2.msra.mxu0 %v1873
        %1961 = vmatprep.subr.mxu0 %v1872
        %1962 = vmatpush2.msra.mxu0 %v1871
        %1963 = vmatprep.subr.mxu0 %v1870
        %1964 = vmatpush2.msra.mxu0 %v1869
        %1965 = vmatprep.subr.mxu0 %v1868
        %1966 = vmatpush2.msra.mxu0 %v1867
        %1967 = vmatprep.subr.mxu0 %v1866
        %1968 = vmatpush2.msra.mxu0 %v1865
        %1969 = vmatprep.mubr.f32.mxu0 %v1902
        %1970 = vmatmul.mubr.f32.gmra.mxu0 %v1899
        %v1971 = vpop.f32.mrf.mxu0
        %v1972 = vadd.f32 0.0, %v1971
        %v1973 = vpop.f32.mrf.mxu0
        %v1974 = vadd.f32 0.0, %v1973
        %1975 = vdwg.mxu0
        %v1978 = vcombine.low %v1972, %v1974
        %v1980 = vunpack.c.l.s4 1983009808
        %v1981 = vunpack.c.0.s8 %v1980
        %v1982 = vlaneseq
        %v1983 = vshrl.u32 %v1982, 7
        %v1984 = vsub.s32 %v1981, %v1983
        %v1985 = vrot.slane %v1978, %v1984
        %v1987 = vadd.f32 %v1831, %v1985
        %s1988 = scalar_lea.vmem %s251, 1536 [#allocation4]
        %v1989 = vld [vmem:[%s1988] sm:$0xff]
        %v1990 = vld [vmem:[%s1988 + $0x8] sm:$0xff]
        %v1991 = vld [vmem:[%s1988 + $0x10] sm:$0xff]
        %v1992 = vld [vmem:[%s1988 + $0x18] sm:$0xff]
        %v1993 = vld [vmem:[%s1988 + $0x20] sm:$0xff]
        %v1994 = vld [vmem:[%s1988 + $0x28] sm:$0xff]
        %v1995 = vld [vmem:[%s1988 + $0x30] sm:$0xff]
        %v1996 = vld [vmem:[%s1988 + $0x38] sm:$0xff]
        %v1997 = vld [vmem:[%s1988 + $0x40] sm:$0xff]
        %v1998 = vld [vmem:[%s1988 + $0x48] sm:$0xff]
        %v1999 = vld [vmem:[%s1988 + $0x50] sm:$0xff]
        %v2000 = vld [vmem:[%s1988 + $0x58] sm:$0xff]
        %v2001 = vld [vmem:[%s1988 + $0x60] sm:$0xff]
        %v2002 = vld [vmem:[%s1988 + $0x68] sm:$0xff]
        %v2003 = vld [vmem:[%s1988 + $0x70] sm:$0xff]
        %v2004 = vld [vmem:[%s1988 + $0x78] sm:$0xff]
        %v2005 = vld [vmem:[%s1988 + $0x80] sm:$0xff]
        %v2006 = vld [vmem:[%s1988 + $0x88] sm:$0xff]
        %v2007 = vld [vmem:[%s1988 + $0x90] sm:$0xff]
        %v2008 = vld [vmem:[%s1988 + $0x98] sm:$0xff]
        %v2009 = vld [vmem:[%s1988 + $0xa0] sm:$0xff]
        %v2010 = vld [vmem:[%s1988 + $0xa8] sm:$0xff]
        %v2011 = vld [vmem:[%s1988 + $0xb0] sm:$0xff]
        %v2012 = vld [vmem:[%s1988 + $0xb8] sm:$0xff]
        %v2013 = vld [vmem:[%s1988 + $0xc0] sm:$0xff]
        %v2014 = vld [vmem:[%s1988 + $0xc8] sm:$0xff]
        %v2015 = vld [vmem:[%s1988 + $0xd0] sm:$0xff]
        %v2016 = vld [vmem:[%s1988 + $0xd8] sm:$0xff]
        %v2017 = vld [vmem:[%s1988 + $0xe0] sm:$0xff]
        %v2018 = vld [vmem:[%s1988 + $0xe8] sm:$0xff]
        %v2019 = vld [vmem:[%s1988 + $0xf0] sm:$0xff]
        %v2020 = vld [vmem:[%s1988 + $0xf8] sm:$0xff]
        %v2021 = vld [vmem:[%s1988 + $0x100] sm:$0xff]
        %v2022 = vld [vmem:[%s1988 + $0x108] sm:$0xff]
        %v2023 = vld [vmem:[%s1988 + $0x110] sm:$0xff]
        %v2024 = vld [vmem:[%s1988 + $0x118] sm:$0xff]
        %v2025 = vld [vmem:[%s1988 + $0x120] sm:$0xff]
        %v2026 = vld [vmem:[%s1988 + $0x128] sm:$0xff]
        %v2027 = vld [vmem:[%s1988 + $0x130] sm:$0xff]
        %v2028 = vld [vmem:[%s1988 + $0x138] sm:$0xff]
        %v2029 = vld [vmem:[%s1988 + $0x140] sm:$0xff]
        %v2030 = vld [vmem:[%s1988 + $0x148] sm:$0xff]
        %v2031 = vld [vmem:[%s1988 + $0x150] sm:$0xff]
        %v2032 = vld [vmem:[%s1988 + $0x158] sm:$0xff]
        %v2033 = vld [vmem:[%s1988 + $0x160] sm:$0xff]
        %v2034 = vld [vmem:[%s1988 + $0x168] sm:$0xff]
        %v2035 = vld [vmem:[%s1988 + $0x170] sm:$0xff]
        %v2036 = vld [vmem:[%s1988 + $0x178] sm:$0xff]
        %v2037 = vld [vmem:[%s1988 + $0x180] sm:$0xff]
        %v2038 = vld [vmem:[%s1988 + $0x188] sm:$0xff]
        %v2039 = vld [vmem:[%s1988 + $0x190] sm:$0xff]
        %v2040 = vld [vmem:[%s1988 + $0x198] sm:$0xff]
        %v2041 = vld [vmem:[%s1988 + $0x1a0] sm:$0xff]
        %v2042 = vld [vmem:[%s1988 + $0x1a8] sm:$0xff]
        %v2043 = vld [vmem:[%s1988 + $0x1b0] sm:$0xff]
        %v2044 = vld [vmem:[%s1988 + $0x1b8] sm:$0xff]
        %v2045 = vld [vmem:[%s1988 + $0x1c0] sm:$0xff]
        %v2046 = vld [vmem:[%s1988 + $0x1c8] sm:$0xff]
        %v2047 = vld [vmem:[%s1988 + $0x1d0] sm:$0xff]
        %v2048 = vld [vmem:[%s1988 + $0x1d8] sm:$0xff]
        %v2049 = vld [vmem:[%s1988 + $0x1e0] sm:$0xff]
        %v2050 = vld [vmem:[%s1988 + $0x1e8] sm:$0xff]
        %v2051 = vld [vmem:[%s1988 + $0x1f0] sm:$0xff]
        %v2052 = vld [vmem:[%s1988 + $0x1f8] sm:$0xff]
        %v2053 = vrot.slane %v1511, 3
        %v2054 = vrot.slane %v1515, 2
        %v2055 = vsel %vm1589, %v2054, %v2053
        %v2056 = vrot.slane %v1512, 3
        %v2057 = vrot.slane %v1516, 2
        %v2058 = vsel %vm1589, %v2057, %v2056
        %2061 = vmatprep.subr.mxu0 %v2020
        %2062 = vmatpush1.msra.mxu0 %v2019
        %2063 = vmatprep.subr.mxu0 %v2018
        %2064 = vmatpush1.msra.mxu0 %v2017
        %2065 = vmatprep.subr.mxu0 %v2016
        %2066 = vmatpush1.msra.mxu0 %v2015
        %2067 = vmatprep.subr.mxu0 %v2014
        %2068 = vmatpush1.msra.mxu0 %v2013
        %2069 = vmatprep.subr.mxu0 %v2012
        %2070 = vmatpush1.msra.mxu0 %v2011
        %2071 = vmatprep.subr.mxu0 %v2010
        %2072 = vmatpush1.msra.mxu0 %v2009
        %2073 = vmatprep.subr.mxu0 %v2008
        %2074 = vmatpush1.msra.mxu0 %v2007
        %2075 = vmatprep.subr.mxu0 %v2006
        %2076 = vmatpush1.msra.mxu0 %v2005
        %2077 = vmatprep.subr.mxu0 %v2004
        %2078 = vmatpush1.msra.mxu0 %v2003
        %2079 = vmatprep.subr.mxu0 %v2002
        %2080 = vmatpush1.msra.mxu0 %v2001
        %2081 = vmatprep.subr.mxu0 %v2000
        %2082 = vmatpush1.msra.mxu0 %v1999
        %2083 = vmatprep.subr.mxu0 %v1998
        %2084 = vmatpush1.msra.mxu0 %v1997
        %2085 = vmatprep.subr.mxu0 %v1996
        %2086 = vmatpush1.msra.mxu0 %v1995
        %2087 = vmatprep.subr.mxu0 %v1994
        %2088 = vmatpush1.msra.mxu0 %v1993
        %2089 = vmatprep.subr.mxu0 %v1992
        %2090 = vmatpush1.msra.mxu0 %v1991
        %2091 = vmatprep.subr.mxu0 %v1990
        %2092 = vmatpush1.msra.mxu0 %v1989
        %2093 = vmatprep.subr.mxu0 %v2052
        %2094 = vmatpush2.msra.mxu0 %v2051
        %2095 = vmatprep.subr.mxu0 %v2050
        %2096 = vmatpush2.msra.mxu0 %v2049
        %2097 = vmatprep.subr.mxu0 %v2048
        %2098 = vmatpush2.msra.mxu0 %v2047
        %2099 = vmatprep.subr.mxu0 %v2046
        %2100 = vmatpush2.msra.mxu0 %v2045
        %2101 = vmatprep.subr.mxu0 %v2044
        %2102 = vmatpush2.msra.mxu0 %v2043
        %2103 = vmatprep.subr.mxu0 %v2042
        %2104 = vmatpush2.msra.mxu0 %v2041
        %2105 = vmatprep.subr.mxu0 %v2040
        %2106 = vmatpush2.msra.mxu0 %v2039
        %2107 = vmatprep.subr.mxu0 %v2038
        %2108 = vmatpush2.msra.mxu0 %v2037
        %2109 = vmatprep.subr.mxu0 %v2036
        %2110 = vmatpush2.msra.mxu0 %v2035
        %2111 = vmatprep.subr.mxu0 %v2034
        %2112 = vmatpush2.msra.mxu0 %v2033
        %2113 = vmatprep.subr.mxu0 %v2032
        %2114 = vmatpush2.msra.mxu0 %v2031
        %2115 = vmatprep.subr.mxu0 %v2030
        %2116 = vmatpush2.msra.mxu0 %v2029
        %2117 = vmatprep.subr.mxu0 %v2028
        %2118 = vmatpush2.msra.mxu0 %v2027
        %2119 = vmatprep.subr.mxu0 %v2026
        %2120 = vmatpush2.msra.mxu0 %v2025
        %2121 = vmatprep.subr.mxu0 %v2024
        %2122 = vmatpush2.msra.mxu0 %v2023
        %2123 = vmatprep.subr.mxu0 %v2022
        %2124 = vmatpush2.msra.mxu0 %v2021
        %2125 = vmatprep.mubr.f32.mxu0 %v2058
        %2126 = vmatmul.mubr.f32.gmra.mxu0 %v2055
        %v2127 = vpop.f32.mrf.mxu0
        %v2128 = vadd.f32 0.0, %v2127
        %v2129 = vpop.f32.mrf.mxu0
        %v2130 = vadd.f32 0.0, %v2129
        %2131 = vdwg.mxu0
        %v2134 = vcombine.low %v2128, %v2130
        %v2136 = vunpack.c.l.s4 1983009808
        %v2137 = vunpack.c.0.s8 %v2136
        %v2138 = vlaneseq
        %v2139 = vshrl.u32 %v2138, 7
        %v2140 = vsub.s32 %v2137, %v2139
        %v2141 = vrot.slane %v2134, %v2140
        %v2143 = vadd.f32 %v1987, %v2141
        %s2144 = scalar_lea.vmem %s251, 2048 [#allocation4]
        %v2145 = vld [vmem:[%s2144] sm:$0xff]
        %v2146 = vld [vmem:[%s2144 + $0x8] sm:$0xff]
        %v2147 = vld [vmem:[%s2144 + $0x10] sm:$0xff]
        %v2148 = vld [vmem:[%s2144 + $0x18] sm:$0xff]
        %v2149 = vld [vmem:[%s2144 + $0x20] sm:$0xff]
        %v2150 = vld [vmem:[%s2144 + $0x28] sm:$0xff]
        %v2151 = vld [vmem:[%s2144 + $0x30] sm:$0xff]
        %v2152 = vld [vmem:[%s2144 + $0x38] sm:$0xff]
        %v2153 = vld [vmem:[%s2144 + $0x40] sm:$0xff]
        %v2154 = vld [vmem:[%s2144 + $0x48] sm:$0xff]
        %v2155 = vld [vmem:[%s2144 + $0x50] sm:$0xff]
        %v2156 = vld [vmem:[%s2144 + $0x58] sm:$0xff]
        %v2157 = vld [vmem:[%s2144 + $0x60] sm:$0xff]
        %v2158 = vld [vmem:[%s2144 + $0x68] sm:$0xff]
        %v2159 = vld [vmem:[%s2144 + $0x70] sm:$0xff]
        %v2160 = vld [vmem:[%s2144 + $0x78] sm:$0xff]
        %v2161 = vld [vmem:[%s2144 + $0x80] sm:$0xff]
        %v2162 = vld [vmem:[%s2144 + $0x88] sm:$0xff]
        %v2163 = vld [vmem:[%s2144 + $0x90] sm:$0xff]
        %v2164 = vld [vmem:[%s2144 + $0x98] sm:$0xff]
        %v2165 = vld [vmem:[%s2144 + $0xa0] sm:$0xff]
        %v2166 = vld [vmem:[%s2144 + $0xa8] sm:$0xff]
        %v2167 = vld [vmem:[%s2144 + $0xb0] sm:$0xff]
        %v2168 = vld [vmem:[%s2144 + $0xb8] sm:$0xff]
        %v2169 = vld [vmem:[%s2144 + $0xc0] sm:$0xff]
        %v2170 = vld [vmem:[%s2144 + $0xc8] sm:$0xff]
        %v2171 = vld [vmem:[%s2144 + $0xd0] sm:$0xff]
        %v2172 = vld [vmem:[%s2144 + $0xd8] sm:$0xff]
        %v2173 = vld [vmem:[%s2144 + $0xe0] sm:$0xff]
        %v2174 = vld [vmem:[%s2144 + $0xe8] sm:$0xff]
        %v2175 = vld [vmem:[%s2144 + $0xf0] sm:$0xff]
        %v2176 = vld [vmem:[%s2144 + $0xf8] sm:$0xff]
        %v2177 = vld [vmem:[%s2144 + $0x100] sm:$0xff]
        %v2178 = vld [vmem:[%s2144 + $0x108] sm:$0xff]
        %v2179 = vld [vmem:[%s2144 + $0x110] sm:$0xff]
        %v2180 = vld [vmem:[%s2144 + $0x118] sm:$0xff]
        %v2181 = vld [vmem:[%s2144 + $0x120] sm:$0xff]
        %v2182 = vld [vmem:[%s2144 + $0x128] sm:$0xff]
        %v2183 = vld [vmem:[%s2144 + $0x130] sm:$0xff]
        %v2184 = vld [vmem:[%s2144 + $0x138] sm:$0xff]
        %v2185 = vld [vmem:[%s2144 + $0x140] sm:$0xff]
        %v2186 = vld [vmem:[%s2144 + $0x148] sm:$0xff]
        %v2187 = vld [vmem:[%s2144 + $0x150] sm:$0xff]
        %v2188 = vld [vmem:[%s2144 + $0x158] sm:$0xff]
        %v2189 = vld [vmem:[%s2144 + $0x160] sm:$0xff]
        %v2190 = vld [vmem:[%s2144 + $0x168] sm:$0xff]
        %v2191 = vld [vmem:[%s2144 + $0x170] sm:$0xff]
        %v2192 = vld [vmem:[%s2144 + $0x178] sm:$0xff]
        %v2193 = vld [vmem:[%s2144 + $0x180] sm:$0xff]
        %v2194 = vld [vmem:[%s2144 + $0x188] sm:$0xff]
        %v2195 = vld [vmem:[%s2144 + $0x190] sm:$0xff]
        %v2196 = vld [vmem:[%s2144 + $0x198] sm:$0xff]
        %v2197 = vld [vmem:[%s2144 + $0x1a0] sm:$0xff]
        %v2198 = vld [vmem:[%s2144 + $0x1a8] sm:$0xff]
        %v2199 = vld [vmem:[%s2144 + $0x1b0] sm:$0xff]
        %v2200 = vld [vmem:[%s2144 + $0x1b8] sm:$0xff]
        %v2201 = vld [vmem:[%s2144 + $0x1c0] sm:$0xff]
        %v2202 = vld [vmem:[%s2144 + $0x1c8] sm:$0xff]
        %v2203 = vld [vmem:[%s2144 + $0x1d0] sm:$0xff]
        %v2204 = vld [vmem:[%s2144 + $0x1d8] sm:$0xff]
        %v2205 = vld [vmem:[%s2144 + $0x1e0] sm:$0xff]
        %v2206 = vld [vmem:[%s2144 + $0x1e8] sm:$0xff]
        %v2207 = vld [vmem:[%s2144 + $0x1f0] sm:$0xff]
        %v2208 = vld [vmem:[%s2144 + $0x1f8] sm:$0xff]
        %v2209 = vrot.slane %v1511, 4
        %v2210 = vrot.slane %v1515, 3
        %v2211 = vsel %vm1589, %v2210, %v2209
        %v2212 = vrot.slane %v1512, 4
        %v2213 = vrot.slane %v1516, 3
        %v2214 = vsel %vm1589, %v2213, %v2212
        %2217 = vmatprep.subr.mxu0 %v2176
        %2218 = vmatpush1.msra.mxu0 %v2175
        %2219 = vmatprep.subr.mxu0 %v2174
        %2220 = vmatpush1.msra.mxu0 %v2173
        %2221 = vmatprep.subr.mxu0 %v2172
        %2222 = vmatpush1.msra.mxu0 %v2171
        %2223 = vmatprep.subr.mxu0 %v2170
        %2224 = vmatpush1.msra.mxu0 %v2169
        %2225 = vmatprep.subr.mxu0 %v2168
        %2226 = vmatpush1.msra.mxu0 %v2167
        %2227 = vmatprep.subr.mxu0 %v2166
        %2228 = vmatpush1.msra.mxu0 %v2165
        %2229 = vmatprep.subr.mxu0 %v2164
        %2230 = vmatpush1.msra.mxu0 %v2163
        %2231 = vmatprep.subr.mxu0 %v2162
        %2232 = vmatpush1.msra.mxu0 %v2161
        %2233 = vmatprep.subr.mxu0 %v2160
        %2234 = vmatpush1.msra.mxu0 %v2159
        %2235 = vmatprep.subr.mxu0 %v2158
        %2236 = vmatpush1.msra.mxu0 %v2157
        %2237 = vmatprep.subr.mxu0 %v2156
        %2238 = vmatpush1.msra.mxu0 %v2155
        %2239 = vmatprep.subr.mxu0 %v2154
        %2240 = vmatpush1.msra.mxu0 %v2153
        %2241 = vmatprep.subr.mxu0 %v2152
        %2242 = vmatpush1.msra.mxu0 %v2151
        %2243 = vmatprep.subr.mxu0 %v2150
        %2244 = vmatpush1.msra.mxu0 %v2149
        %2245 = vmatprep.subr.mxu0 %v2148
        %2246 = vmatpush1.msra.mxu0 %v2147
        %2247 = vmatprep.subr.mxu0 %v2146
        %2248 = vmatpush1.msra.mxu0 %v2145
        %2249 = vmatprep.subr.mxu0 %v2208
        %2250 = vmatpush2.msra.mxu0 %v2207
        %2251 = vmatprep.subr.mxu0 %v2206
        %2252 = vmatpush2.msra.mxu0 %v2205
        %2253 = vmatprep.subr.mxu0 %v2204
        %2254 = vmatpush2.msra.mxu0 %v2203
        %2255 = vmatprep.subr.mxu0 %v2202
        %2256 = vmatpush2.msra.mxu0 %v2201
        %2257 = vmatprep.subr.mxu0 %v2200
        %2258 = vmatpush2.msra.mxu0 %v2199
        %2259 = vmatprep.subr.mxu0 %v2198
        %2260 = vmatpush2.msra.mxu0 %v2197
        %2261 = vmatprep.subr.mxu0 %v2196
        %2262 = vmatpush2.msra.mxu0 %v2195
        %2263 = vmatprep.subr.mxu0 %v2194
        %2264 = vmatpush2.msra.mxu0 %v2193
        %2265 = vmatprep.subr.mxu0 %v2192
        %2266 = vmatpush2.msra.mxu0 %v2191
        %2267 = vmatprep.subr.mxu0 %v2190
        %2268 = vmatpush2.msra.mxu0 %v2189
        %2269 = vmatprep.subr.mxu0 %v2188
        %2270 = vmatpush2.msra.mxu0 %v2187
        %2271 = vmatprep.subr.mxu0 %v2186
        %2272 = vmatpush2.msra.mxu0 %v2185
        %2273 = vmatprep.subr.mxu0 %v2184
        %2274 = vmatpush2.msra.mxu0 %v2183
        %2275 = vmatprep.subr.mxu0 %v2182
        %2276 = vmatpush2.msra.mxu0 %v2181
        %2277 = vmatprep.subr.mxu0 %v2180
        %2278 = vmatpush2.msra.mxu0 %v2179
        %2279 = vmatprep.subr.mxu0 %v2178
        %2280 = vmatpush2.msra.mxu0 %v2177
        %2281 = vmatprep.mubr.f32.mxu0 %v2214
        %2282 = vmatmul.mubr.f32.gmra.mxu0 %v2211
        %v2283 = vpop.f32.mrf.mxu0
        %v2284 = vadd.f32 0.0, %v2283
        %v2285 = vpop.f32.mrf.mxu0
        %v2286 = vadd.f32 0.0, %v2285
        %2287 = vdwg.mxu0
        %v2290 = vcombine.low %v2284, %v2286
        %v2292 = vunpack.c.l.s4 1983009808
        %v2293 = vunpack.c.0.s8 %v2292
        %v2294 = vlaneseq
        %v2295 = vshrl.u32 %v2294, 7
        %v2296 = vsub.s32 %v2293, %v2295
        %v2297 = vrot.slane %v2290, %v2296
        %v2299 = vadd.f32 %v2143, %v2297
        %s2300 = scalar_lea.vmem %s251, 2560 [#allocation4]
        %v2301 = vld [vmem:[%s2300] sm:$0xff]
        %v2302 = vld [vmem:[%s2300 + $0x8] sm:$0xff]
        %v2303 = vld [vmem:[%s2300 + $0x10] sm:$0xff]
        %v2304 = vld [vmem:[%s2300 + $0x18] sm:$0xff]
        %v2305 = vld [vmem:[%s2300 + $0x20] sm:$0xff]
        %v2306 = vld [vmem:[%s2300 + $0x28] sm:$0xff]
        %v2307 = vld [vmem:[%s2300 + $0x30] sm:$0xff]
        %v2308 = vld [vmem:[%s2300 + $0x38] sm:$0xff]
        %v2309 = vld [vmem:[%s2300 + $0x40] sm:$0xff]
        %v2310 = vld [vmem:[%s2300 + $0x48] sm:$0xff]
        %v2311 = vld [vmem:[%s2300 + $0x50] sm:$0xff]
        %v2312 = vld [vmem:[%s2300 + $0x58] sm:$0xff]
        %v2313 = vld [vmem:[%s2300 + $0x60] sm:$0xff]
        %v2314 = vld [vmem:[%s2300 + $0x68] sm:$0xff]
        %v2315 = vld [vmem:[%s2300 + $0x70] sm:$0xff]
        %v2316 = vld [vmem:[%s2300 + $0x78] sm:$0xff]
        %v2317 = vld [vmem:[%s2300 + $0x80] sm:$0xff]
        %v2318 = vld [vmem:[%s2300 + $0x88] sm:$0xff]
        %v2319 = vld [vmem:[%s2300 + $0x90] sm:$0xff]
        %v2320 = vld [vmem:[%s2300 + $0x98] sm:$0xff]
        %v2321 = vld [vmem:[%s2300 + $0xa0] sm:$0xff]
        %v2322 = vld [vmem:[%s2300 + $0xa8] sm:$0xff]
        %v2323 = vld [vmem:[%s2300 + $0xb0] sm:$0xff]
        %v2324 = vld [vmem:[%s2300 + $0xb8] sm:$0xff]
        %v2325 = vld [vmem:[%s2300 + $0xc0] sm:$0xff]
        %v2326 = vld [vmem:[%s2300 + $0xc8] sm:$0xff]
        %v2327 = vld [vmem:[%s2300 + $0xd0] sm:$0xff]
        %v2328 = vld [vmem:[%s2300 + $0xd8] sm:$0xff]
        %v2329 = vld [vmem:[%s2300 + $0xe0] sm:$0xff]
        %v2330 = vld [vmem:[%s2300 + $0xe8] sm:$0xff]
        %v2331 = vld [vmem:[%s2300 + $0xf0] sm:$0xff]
        %v2332 = vld [vmem:[%s2300 + $0xf8] sm:$0xff]
        %v2333 = vld [vmem:[%s2300 + $0x100] sm:$0xff]
        %v2334 = vld [vmem:[%s2300 + $0x108] sm:$0xff]
        %v2335 = vld [vmem:[%s2300 + $0x110] sm:$0xff]
        %v2336 = vld [vmem:[%s2300 + $0x118] sm:$0xff]
        %v2337 = vld [vmem:[%s2300 + $0x120] sm:$0xff]
        %v2338 = vld [vmem:[%s2300 + $0x128] sm:$0xff]
        %v2339 = vld [vmem:[%s2300 + $0x130] sm:$0xff]
        %v2340 = vld [vmem:[%s2300 + $0x138] sm:$0xff]
        %v2341 = vld [vmem:[%s2300 + $0x140] sm:$0xff]
        %v2342 = vld [vmem:[%s2300 + $0x148] sm:$0xff]
        %v2343 = vld [vmem:[%s2300 + $0x150] sm:$0xff]
        %v2344 = vld [vmem:[%s2300 + $0x158] sm:$0xff]
        %v2345 = vld [vmem:[%s2300 + $0x160] sm:$0xff]
        %v2346 = vld [vmem:[%s2300 + $0x168] sm:$0xff]
        %v2347 = vld [vmem:[%s2300 + $0x170] sm:$0xff]
        %v2348 = vld [vmem:[%s2300 + $0x178] sm:$0xff]
        %v2349 = vld [vmem:[%s2300 + $0x180] sm:$0xff]
        %v2350 = vld [vmem:[%s2300 + $0x188] sm:$0xff]
        %v2351 = vld [vmem:[%s2300 + $0x190] sm:$0xff]
        %v2352 = vld [vmem:[%s2300 + $0x198] sm:$0xff]
        %v2353 = vld [vmem:[%s2300 + $0x1a0] sm:$0xff]
        %v2354 = vld [vmem:[%s2300 + $0x1a8] sm:$0xff]
        %v2355 = vld [vmem:[%s2300 + $0x1b0] sm:$0xff]
        %v2356 = vld [vmem:[%s2300 + $0x1b8] sm:$0xff]
        %v2357 = vld [vmem:[%s2300 + $0x1c0] sm:$0xff]
        %v2358 = vld [vmem:[%s2300 + $0x1c8] sm:$0xff]
        %v2359 = vld [vmem:[%s2300 + $0x1d0] sm:$0xff]
        %v2360 = vld [vmem:[%s2300 + $0x1d8] sm:$0xff]
        %v2361 = vld [vmem:[%s2300 + $0x1e0] sm:$0xff]
        %v2362 = vld [vmem:[%s2300 + $0x1e8] sm:$0xff]
        %v2363 = vld [vmem:[%s2300 + $0x1f0] sm:$0xff]
        %v2364 = vld [vmem:[%s2300 + $0x1f8] sm:$0xff]
        %v2365 = vrot.slane %v1511, 5
        %v2366 = vrot.slane %v1515, 4
        %v2367 = vsel %vm1589, %v2366, %v2365
        %v2368 = vrot.slane %v1512, 5
        %v2369 = vrot.slane %v1516, 4
        %v2370 = vsel %vm1589, %v2369, %v2368
        %2373 = vmatprep.subr.mxu0 %v2332
        %2374 = vmatpush1.msra.mxu0 %v2331
        %2375 = vmatprep.subr.mxu0 %v2330
        %2376 = vmatpush1.msra.mxu0 %v2329
        %2377 = vmatprep.subr.mxu0 %v2328
        %2378 = vmatpush1.msra.mxu0 %v2327
        %2379 = vmatprep.subr.mxu0 %v2326
        %2380 = vmatpush1.msra.mxu0 %v2325
        %2381 = vmatprep.subr.mxu0 %v2324
        %2382 = vmatpush1.msra.mxu0 %v2323
        %2383 = vmatprep.subr.mxu0 %v2322
        %2384 = vmatpush1.msra.mxu0 %v2321
        %2385 = vmatprep.subr.mxu0 %v2320
        %2386 = vmatpush1.msra.mxu0 %v2319
        %2387 = vmatprep.subr.mxu0 %v2318
        %2388 = vmatpush1.msra.mxu0 %v2317
        %2389 = vmatprep.subr.mxu0 %v2316
        %2390 = vmatpush1.msra.mxu0 %v2315
        %2391 = vmatprep.subr.mxu0 %v2314
        %2392 = vmatpush1.msra.mxu0 %v2313
        %2393 = vmatprep.subr.mxu0 %v2312
        %2394 = vmatpush1.msra.mxu0 %v2311
        %2395 = vmatprep.subr.mxu0 %v2310
        %2396 = vmatpush1.msra.mxu0 %v2309
        %2397 = vmatprep.subr.mxu0 %v2308
        %2398 = vmatpush1.msra.mxu0 %v2307
        %2399 = vmatprep.subr.mxu0 %v2306
        %2400 = vmatpush1.msra.mxu0 %v2305
        %2401 = vmatprep.subr.mxu0 %v2304
        %2402 = vmatpush1.msra.mxu0 %v2303
        %2403 = vmatprep.subr.mxu0 %v2302
        %2404 = vmatpush1.msra.mxu0 %v2301
        %2405 = vmatprep.subr.mxu0 %v2364
        %2406 = vmatpush2.msra.mxu0 %v2363
        %2407 = vmatprep.subr.mxu0 %v2362
        %2408 = vmatpush2.msra.mxu0 %v2361
        %2409 = vmatprep.subr.mxu0 %v2360
        %2410 = vmatpush2.msra.mxu0 %v2359
        %2411 = vmatprep.subr.mxu0 %v2358
        %2412 = vmatpush2.msra.mxu0 %v2357
        %2413 = vmatprep.subr.mxu0 %v2356
        %2414 = vmatpush2.msra.mxu0 %v2355
        %2415 = vmatprep.subr.mxu0 %v2354
        %2416 = vmatpush2.msra.mxu0 %v2353
        %2417 = vmatprep.subr.mxu0 %v2352
        %2418 = vmatpush2.msra.mxu0 %v2351
        %2419 = vmatprep.subr.mxu0 %v2350
        %2420 = vmatpush2.msra.mxu0 %v2349
        %2421 = vmatprep.subr.mxu0 %v2348
        %2422 = vmatpush2.msra.mxu0 %v2347
        %2423 = vmatprep.subr.mxu0 %v2346
        %2424 = vmatpush2.msra.mxu0 %v2345
        %2425 = vmatprep.subr.mxu0 %v2344
        %2426 = vmatpush2.msra.mxu0 %v2343
        %2427 = vmatprep.subr.mxu0 %v2342
        %2428 = vmatpush2.msra.mxu0 %v2341
        %2429 = vmatprep.subr.mxu0 %v2340
        %2430 = vmatpush2.msra.mxu0 %v2339
        %2431 = vmatprep.subr.mxu0 %v2338
        %2432 = vmatpush2.msra.mxu0 %v2337
        %2433 = vmatprep.subr.mxu0 %v2336
        %2434 = vmatpush2.msra.mxu0 %v2335
        %2435 = vmatprep.subr.mxu0 %v2334
        %2436 = vmatpush2.msra.mxu0 %v2333
        %2437 = vmatprep.mubr.f32.mxu0 %v2370
        %2438 = vmatmul.mubr.f32.gmra.mxu0 %v2367
        %v2439 = vpop.f32.mrf.mxu0
        %v2440 = vadd.f32 0.0, %v2439
        %v2441 = vpop.f32.mrf.mxu0
        %v2442 = vadd.f32 0.0, %v2441
        %2443 = vdwg.mxu0
        %v2446 = vcombine.low %v2440, %v2442
        %v2448 = vunpack.c.l.s4 1983009808
        %v2449 = vunpack.c.0.s8 %v2448
        %v2450 = vlaneseq
        %v2451 = vshrl.u32 %v2450, 7
        %v2452 = vsub.s32 %v2449, %v2451
        %v2453 = vrot.slane %v2446, %v2452
        %v2455 = vadd.f32 %v2299, %v2453
        %s2456 = scalar_lea.vmem %s251, 3072 [#allocation4]
        %v2457 = vld [vmem:[%s2456] sm:$0xff]
        %v2458 = vld [vmem:[%s2456 + $0x8] sm:$0xff]
        %v2459 = vld [vmem:[%s2456 + $0x10] sm:$0xff]
        %v2460 = vld [vmem:[%s2456 + $0x18] sm:$0xff]
        %v2461 = vld [vmem:[%s2456 + $0x20] sm:$0xff]
        %v2462 = vld [vmem:[%s2456 + $0x28] sm:$0xff]
        %v2463 = vld [vmem:[%s2456 + $0x30] sm:$0xff]
        %v2464 = vld [vmem:[%s2456 + $0x38] sm:$0xff]
        %v2465 = vld [vmem:[%s2456 + $0x40] sm:$0xff]
        %v2466 = vld [vmem:[%s2456 + $0x48] sm:$0xff]
        %v2467 = vld [vmem:[%s2456 + $0x50] sm:$0xff]
        %v2468 = vld [vmem:[%s2456 + $0x58] sm:$0xff]
        %v2469 = vld [vmem:[%s2456 + $0x60] sm:$0xff]
        %v2470 = vld [vmem:[%s2456 + $0x68] sm:$0xff]
        %v2471 = vld [vmem:[%s2456 + $0x70] sm:$0xff]
        %v2472 = vld [vmem:[%s2456 + $0x78] sm:$0xff]
        %v2473 = vld [vmem:[%s2456 + $0x80] sm:$0xff]
        %v2474 = vld [vmem:[%s2456 + $0x88] sm:$0xff]
        %v2475 = vld [vmem:[%s2456 + $0x90] sm:$0xff]
        %v2476 = vld [vmem:[%s2456 + $0x98] sm:$0xff]
        %v2477 = vld [vmem:[%s2456 + $0xa0] sm:$0xff]
        %v2478 = vld [vmem:[%s2456 + $0xa8] sm:$0xff]
        %v2479 = vld [vmem:[%s2456 + $0xb0] sm:$0xff]
        %v2480 = vld [vmem:[%s2456 + $0xb8] sm:$0xff]
        %v2481 = vld [vmem:[%s2456 + $0xc0] sm:$0xff]
        %v2482 = vld [vmem:[%s2456 + $0xc8] sm:$0xff]
        %v2483 = vld [vmem:[%s2456 + $0xd0] sm:$0xff]
        %v2484 = vld [vmem:[%s2456 + $0xd8] sm:$0xff]
        %v2485 = vld [vmem:[%s2456 + $0xe0] sm:$0xff]
        %v2486 = vld [vmem:[%s2456 + $0xe8] sm:$0xff]
        %v2487 = vld [vmem:[%s2456 + $0xf0] sm:$0xff]
        %v2488 = vld [vmem:[%s2456 + $0xf8] sm:$0xff]
        %v2489 = vld [vmem:[%s2456 + $0x100] sm:$0xff]
        %v2490 = vld [vmem:[%s2456 + $0x108] sm:$0xff]
        %v2491 = vld [vmem:[%s2456 + $0x110] sm:$0xff]
        %v2492 = vld [vmem:[%s2456 + $0x118] sm:$0xff]
        %v2493 = vld [vmem:[%s2456 + $0x120] sm:$0xff]
        %v2494 = vld [vmem:[%s2456 + $0x128] sm:$0xff]
        %v2495 = vld [vmem:[%s2456 + $0x130] sm:$0xff]
        %v2496 = vld [vmem:[%s2456 + $0x138] sm:$0xff]
        %v2497 = vld [vmem:[%s2456 + $0x140] sm:$0xff]
        %v2498 = vld [vmem:[%s2456 + $0x148] sm:$0xff]
        %v2499 = vld [vmem:[%s2456 + $0x150] sm:$0xff]
        %v2500 = vld [vmem:[%s2456 + $0x158] sm:$0xff]
        %v2501 = vld [vmem:[%s2456 + $0x160] sm:$0xff]
        %v2502 = vld [vmem:[%s2456 + $0x168] sm:$0xff]
        %v2503 = vld [vmem:[%s2456 + $0x170] sm:$0xff]
        %v2504 = vld [vmem:[%s2456 + $0x178] sm:$0xff]
        %v2505 = vld [vmem:[%s2456 + $0x180] sm:$0xff]
        %v2506 = vld [vmem:[%s2456 + $0x188] sm:$0xff]
        %v2507 = vld [vmem:[%s2456 + $0x190] sm:$0xff]
        %v2508 = vld [vmem:[%s2456 + $0x198] sm:$0xff]
        %v2509 = vld [vmem:[%s2456 + $0x1a0] sm:$0xff]
        %v2510 = vld [vmem:[%s2456 + $0x1a8] sm:$0xff]
        %v2511 = vld [vmem:[%s2456 + $0x1b0] sm:$0xff]
        %v2512 = vld [vmem:[%s2456 + $0x1b8] sm:$0xff]
        %v2513 = vld [vmem:[%s2456 + $0x1c0] sm:$0xff]
        %v2514 = vld [vmem:[%s2456 + $0x1c8] sm:$0xff]
        %v2515 = vld [vmem:[%s2456 + $0x1d0] sm:$0xff]
        %v2516 = vld [vmem:[%s2456 + $0x1d8] sm:$0xff]
        %v2517 = vld [vmem:[%s2456 + $0x1e0] sm:$0xff]
        %v2518 = vld [vmem:[%s2456 + $0x1e8] sm:$0xff]
        %v2519 = vld [vmem:[%s2456 + $0x1f0] sm:$0xff]
        %v2520 = vld [vmem:[%s2456 + $0x1f8] sm:$0xff]
        %v2521 = vrot.slane %v1511, 6
        %v2522 = vrot.slane %v1515, 5
        %v2523 = vsel %vm1589, %v2522, %v2521
        %v2524 = vrot.slane %v1512, 6
        %v2525 = vrot.slane %v1516, 5
        %v2526 = vsel %vm1589, %v2525, %v2524
        %2529 = vmatprep.subr.mxu0 %v2488
        %2530 = vmatpush1.msra.mxu0 %v2487
        %2531 = vmatprep.subr.mxu0 %v2486
        %2532 = vmatpush1.msra.mxu0 %v2485
        %2533 = vmatprep.subr.mxu0 %v2484
        %2534 = vmatpush1.msra.mxu0 %v2483
        %2535 = vmatprep.subr.mxu0 %v2482
        %2536 = vmatpush1.msra.mxu0 %v2481
        %2537 = vmatprep.subr.mxu0 %v2480
        %2538 = vmatpush1.msra.mxu0 %v2479
        %2539 = vmatprep.subr.mxu0 %v2478
        %2540 = vmatpush1.msra.mxu0 %v2477
        %2541 = vmatprep.subr.mxu0 %v2476
        %2542 = vmatpush1.msra.mxu0 %v2475
        %2543 = vmatprep.subr.mxu0 %v2474
        %2544 = vmatpush1.msra.mxu0 %v2473
        %2545 = vmatprep.subr.mxu0 %v2472
        %2546 = vmatpush1.msra.mxu0 %v2471
        %2547 = vmatprep.subr.mxu0 %v2470
        %2548 = vmatpush1.msra.mxu0 %v2469
        %2549 = vmatprep.subr.mxu0 %v2468
        %2550 = vmatpush1.msra.mxu0 %v2467
        %2551 = vmatprep.subr.mxu0 %v2466
        %2552 = vmatpush1.msra.mxu0 %v2465
        %2553 = vmatprep.subr.mxu0 %v2464
        %2554 = vmatpush1.msra.mxu0 %v2463
        %2555 = vmatprep.subr.mxu0 %v2462
        %2556 = vmatpush1.msra.mxu0 %v2461
        %2557 = vmatprep.subr.mxu0 %v2460
        %2558 = vmatpush1.msra.mxu0 %v2459
        %2559 = vmatprep.subr.mxu0 %v2458
        %2560 = vmatpush1.msra.mxu0 %v2457
        %2561 = vmatprep.subr.mxu0 %v2520
        %2562 = vmatpush2.msra.mxu0 %v2519
        %2563 = vmatprep.subr.mxu0 %v2518
        %2564 = vmatpush2.msra.mxu0 %v2517
        %2565 = vmatprep.subr.mxu0 %v2516
        %2566 = vmatpush2.msra.mxu0 %v2515
        %2567 = vmatprep.subr.mxu0 %v2514
        %2568 = vmatpush2.msra.mxu0 %v2513
        %2569 = vmatprep.subr.mxu0 %v2512
        %2570 = vmatpush2.msra.mxu0 %v2511
        %2571 = vmatprep.subr.mxu0 %v2510
        %2572 = vmatpush2.msra.mxu0 %v2509
        %2573 = vmatprep.subr.mxu0 %v2508
        %2574 = vmatpush2.msra.mxu0 %v2507
        %2575 = vmatprep.subr.mxu0 %v2506
        %2576 = vmatpush2.msra.mxu0 %v2505
        %2577 = vmatprep.subr.mxu0 %v2504
        %2578 = vmatpush2.msra.mxu0 %v2503
        %2579 = vmatprep.subr.mxu0 %v2502
        %2580 = vmatpush2.msra.mxu0 %v2501
        %2581 = vmatprep.subr.mxu0 %v2500
        %2582 = vmatpush2.msra.mxu0 %v2499
        %2583 = vmatprep.subr.mxu0 %v2498
        %2584 = vmatpush2.msra.mxu0 %v2497
        %2585 = vmatprep.subr.mxu0 %v2496
        %2586 = vmatpush2.msra.mxu0 %v2495
        %2587 = vmatprep.subr.mxu0 %v2494
        %2588 = vmatpush2.msra.mxu0 %v2493
        %2589 = vmatprep.subr.mxu0 %v2492
        %2590 = vmatpush2.msra.mxu0 %v2491
        %2591 = vmatprep.subr.mxu0 %v2490
        %2592 = vmatpush2.msra.mxu0 %v2489
        %2593 = vmatprep.mubr.f32.mxu0 %v2526
        %2594 = vmatmul.mubr.f32.gmra.mxu0 %v2523
        %v2595 = vpop.f32.mrf.mxu0
        %v2596 = vadd.f32 0.0, %v2595
        %v2597 = vpop.f32.mrf.mxu0
        %v2598 = vadd.f32 0.0, %v2597
        %2599 = vdwg.mxu0
        %v2602 = vcombine.low %v2596, %v2598
        %v2604 = vunpack.c.l.s4 1983009808
        %v2605 = vunpack.c.0.s8 %v2604
        %v2606 = vlaneseq
        %v2607 = vshrl.u32 %v2606, 7
        %v2608 = vsub.s32 %v2605, %v2607
        %v2609 = vrot.slane %v2602, %v2608
        %v2611 = vadd.f32 %v2455, %v2609
        %s2612 = scalar_lea.vmem %s251, 3584 [#allocation4]
        %v2613 = vld [vmem:[%s2612] sm:$0xff]
        %v2614 = vld [vmem:[%s2612 + $0x8] sm:$0xff]
        %v2615 = vld [vmem:[%s2612 + $0x10] sm:$0xff]
        %v2616 = vld [vmem:[%s2612 + $0x18] sm:$0xff]
        %v2617 = vld [vmem:[%s2612 + $0x20] sm:$0xff]
        %v2618 = vld [vmem:[%s2612 + $0x28] sm:$0xff]
        %v2619 = vld [vmem:[%s2612 + $0x30] sm:$0xff]
        %v2620 = vld [vmem:[%s2612 + $0x38] sm:$0xff]
        %v2621 = vld [vmem:[%s2612 + $0x40] sm:$0xff]
        %v2622 = vld [vmem:[%s2612 + $0x48] sm:$0xff]
        %v2623 = vld [vmem:[%s2612 + $0x50] sm:$0xff]
        %v2624 = vld [vmem:[%s2612 + $0x58] sm:$0xff]
        %v2625 = vld [vmem:[%s2612 + $0x60] sm:$0xff]
        %v2626 = vld [vmem:[%s2612 + $0x68] sm:$0xff]
        %v2627 = vld [vmem:[%s2612 + $0x70] sm:$0xff]
        %v2628 = vld [vmem:[%s2612 + $0x78] sm:$0xff]
        %v2629 = vld [vmem:[%s2612 + $0x80] sm:$0xff]
        %v2630 = vld [vmem:[%s2612 + $0x88] sm:$0xff]
        %v2631 = vld [vmem:[%s2612 + $0x90] sm:$0xff]
        %v2632 = vld [vmem:[%s2612 + $0x98] sm:$0xff]
        %v2633 = vld [vmem:[%s2612 + $0xa0] sm:$0xff]
        %v2634 = vld [vmem:[%s2612 + $0xa8] sm:$0xff]
        %v2635 = vld [vmem:[%s2612 + $0xb0] sm:$0xff]
        %v2636 = vld [vmem:[%s2612 + $0xb8] sm:$0xff]
        %v2637 = vld [vmem:[%s2612 + $0xc0] sm:$0xff]
        %v2638 = vld [vmem:[%s2612 + $0xc8] sm:$0xff]
        %v2639 = vld [vmem:[%s2612 + $0xd0] sm:$0xff]
        %v2640 = vld [vmem:[%s2612 + $0xd8] sm:$0xff]
        %v2641 = vld [vmem:[%s2612 + $0xe0] sm:$0xff]
        %v2642 = vld [vmem:[%s2612 + $0xe8] sm:$0xff]
        %v2643 = vld [vmem:[%s2612 + $0xf0] sm:$0xff]
        %v2644 = vld [vmem:[%s2612 + $0xf8] sm:$0xff]
        %v2645 = vld [vmem:[%s2612 + $0x100] sm:$0xff]
        %v2646 = vld [vmem:[%s2612 + $0x108] sm:$0xff]
        %v2647 = vld [vmem:[%s2612 + $0x110] sm:$0xff]
        %v2648 = vld [vmem:[%s2612 + $0x118] sm:$0xff]
        %v2649 = vld [vmem:[%s2612 + $0x120] sm:$0xff]
        %v2650 = vld [vmem:[%s2612 + $0x128] sm:$0xff]
        %v2651 = vld [vmem:[%s2612 + $0x130] sm:$0xff]
        %v2652 = vld [vmem:[%s2612 + $0x138] sm:$0xff]
        %v2653 = vld [vmem:[%s2612 + $0x140] sm:$0xff]
        %v2654 = vld [vmem:[%s2612 + $0x148] sm:$0xff]
        %v2655 = vld [vmem:[%s2612 + $0x150] sm:$0xff]
        %v2656 = vld [vmem:[%s2612 + $0x158] sm:$0xff]
        %v2657 = vld [vmem:[%s2612 + $0x160] sm:$0xff]
        %v2658 = vld [vmem:[%s2612 + $0x168] sm:$0xff]
        %v2659 = vld [vmem:[%s2612 + $0x170] sm:$0xff]
        %v2660 = vld [vmem:[%s2612 + $0x178] sm:$0xff]
        %v2661 = vld [vmem:[%s2612 + $0x180] sm:$0xff]
        %v2662 = vld [vmem:[%s2612 + $0x188] sm:$0xff]
        %v2663 = vld [vmem:[%s2612 + $0x190] sm:$0xff]
        %v2664 = vld [vmem:[%s2612 + $0x198] sm:$0xff]
        %v2665 = vld [vmem:[%s2612 + $0x1a0] sm:$0xff]
        %v2666 = vld [vmem:[%s2612 + $0x1a8] sm:$0xff]
        %v2667 = vld [vmem:[%s2612 + $0x1b0] sm:$0xff]
        %v2668 = vld [vmem:[%s2612 + $0x1b8] sm:$0xff]
        %v2669 = vld [vmem:[%s2612 + $0x1c0] sm:$0xff]
        %v2670 = vld [vmem:[%s2612 + $0x1c8] sm:$0xff]
        %v2671 = vld [vmem:[%s2612 + $0x1d0] sm:$0xff]
        %v2672 = vld [vmem:[%s2612 + $0x1d8] sm:$0xff]
        %v2673 = vld [vmem:[%s2612 + $0x1e0] sm:$0xff]
        %v2674 = vld [vmem:[%s2612 + $0x1e8] sm:$0xff]
        %v2675 = vld [vmem:[%s2612 + $0x1f0] sm:$0xff]
        %v2676 = vld [vmem:[%s2612 + $0x1f8] sm:$0xff]
        %v2677 = vrot.slane %v1511, 7
        %v2678 = vrot.slane %v1515, 6
        %v2679 = vsel %vm1589, %v2678, %v2677
        %v2680 = vrot.slane %v1512, 7
        %v2681 = vrot.slane %v1516, 6
        %v2682 = vsel %vm1589, %v2681, %v2680
        %2685 = vmatprep.subr.mxu0 %v2644
        %2686 = vmatpush1.msra.mxu0 %v2643
        %2687 = vmatprep.subr.mxu0 %v2642
        %2688 = vmatpush1.msra.mxu0 %v2641
        %2689 = vmatprep.subr.mxu0 %v2640
        %2690 = vmatpush1.msra.mxu0 %v2639
        %2691 = vmatprep.subr.mxu0 %v2638
        %2692 = vmatpush1.msra.mxu0 %v2637
        %2693 = vmatprep.subr.mxu0 %v2636
        %2694 = vmatpush1.msra.mxu0 %v2635
        %2695 = vmatprep.subr.mxu0 %v2634
        %2696 = vmatpush1.msra.mxu0 %v2633
        %2697 = vmatprep.subr.mxu0 %v2632
        %2698 = vmatpush1.msra.mxu0 %v2631
        %2699 = vmatprep.subr.mxu0 %v2630
        %2700 = vmatpush1.msra.mxu0 %v2629
        %2701 = vmatprep.subr.mxu0 %v2628
        %2702 = vmatpush1.msra.mxu0 %v2627
        %2703 = vmatprep.subr.mxu0 %v2626
        %2704 = vmatpush1.msra.mxu0 %v2625
        %2705 = vmatprep.subr.mxu0 %v2624
        %2706 = vmatpush1.msra.mxu0 %v2623
        %2707 = vmatprep.subr.mxu0 %v2622
        %2708 = vmatpush1.msra.mxu0 %v2621
        %2709 = vmatprep.subr.mxu0 %v2620
        %2710 = vmatpush1.msra.mxu0 %v2619
        %2711 = vmatprep.subr.mxu0 %v2618
        %2712 = vmatpush1.msra.mxu0 %v2617
        %2713 = vmatprep.subr.mxu0 %v2616
        %2714 = vmatpush1.msra.mxu0 %v2615
        %2715 = vmatprep.subr.mxu0 %v2614
        %2716 = vmatpush1.msra.mxu0 %v2613
        %2717 = vmatprep.subr.mxu0 %v2676
        %2718 = vmatpush2.msra.mxu0 %v2675
        %2719 = vmatprep.subr.mxu0 %v2674
        %2720 = vmatpush2.msra.mxu0 %v2673
        %2721 = vmatprep.subr.mxu0 %v2672
        %2722 = vmatpush2.msra.mxu0 %v2671
        %2723 = vmatprep.subr.mxu0 %v2670
        %2724 = vmatpush2.msra.mxu0 %v2669
        %2725 = vmatprep.subr.mxu0 %v2668
        %2726 = vmatpush2.msra.mxu0 %v2667
        %2727 = vmatprep.subr.mxu0 %v2666
        %2728 = vmatpush2.msra.mxu0 %v2665
        %2729 = vmatprep.subr.mxu0 %v2664
        %2730 = vmatpush2.msra.mxu0 %v2663
        %2731 = vmatprep.subr.mxu0 %v2662
        %2732 = vmatpush2.msra.mxu0 %v2661
        %2733 = vmatprep.subr.mxu0 %v2660
        %2734 = vmatpush2.msra.mxu0 %v2659
        %2735 = vmatprep.subr.mxu0 %v2658
        %2736 = vmatpush2.msra.mxu0 %v2657
        %2737 = vmatprep.subr.mxu0 %v2656
        %2738 = vmatpush2.msra.mxu0 %v2655
        %2739 = vmatprep.subr.mxu0 %v2654
        %2740 = vmatpush2.msra.mxu0 %v2653
        %2741 = vmatprep.subr.mxu0 %v2652
        %2742 = vmatpush2.msra.mxu0 %v2651
        %2743 = vmatprep.subr.mxu0 %v2650
        %2744 = vmatpush2.msra.mxu0 %v2649
        %2745 = vmatprep.subr.mxu0 %v2648
        %2746 = vmatpush2.msra.mxu0 %v2647
        %2747 = vmatprep.subr.mxu0 %v2646
        %2748 = vmatpush2.msra.mxu0 %v2645
        %2749 = vmatprep.mubr.f32.mxu0 %v2682
        %2750 = vmatmul.mubr.f32.gmra.mxu0 %v2679
        %v2751 = vpop.f32.mrf.mxu0
        %v2752 = vadd.f32 0.0, %v2751
        %v2753 = vpop.f32.mrf.mxu0
        %v2754 = vadd.f32 0.0, %v2753
        %2755 = vdwg.mxu0
        %v2758 = vcombine.low %v2752, %v2754
        %v2760 = vunpack.c.l.s4 1983009808
        %v2761 = vunpack.c.0.s8 %v2760
        %v2762 = vlaneseq
        %v2763 = vshrl.u32 %v2762, 7
        %v2764 = vsub.s32 %v2761, %v2763
        %v2765 = vrot.slane %v2758, %v2764
        %v2767 = vadd.f32 %v2611, %v2765
        %s2768 = scalar_lea.vmem %s251, 4096 [#allocation4]
        %v2769 = vld [vmem:[%s2768] sm:$0xff]
        %v2770 = vld [vmem:[%s2768 + $0x8] sm:$0xff]
        %v2771 = vld [vmem:[%s2768 + $0x10] sm:$0xff]
        %v2772 = vld [vmem:[%s2768 + $0x18] sm:$0xff]
        %v2773 = vld [vmem:[%s2768 + $0x20] sm:$0xff]
        %v2774 = vld [vmem:[%s2768 + $0x28] sm:$0xff]
        %v2775 = vld [vmem:[%s2768 + $0x30] sm:$0xff]
        %v2776 = vld [vmem:[%s2768 + $0x38] sm:$0xff]
        %v2777 = vld [vmem:[%s2768 + $0x40] sm:$0xff]
        %v2778 = vld [vmem:[%s2768 + $0x48] sm:$0xff]
        %v2779 = vld [vmem:[%s2768 + $0x50] sm:$0xff]
        %v2780 = vld [vmem:[%s2768 + $0x58] sm:$0xff]
        %v2781 = vld [vmem:[%s2768 + $0x60] sm:$0xff]
        %v2782 = vld [vmem:[%s2768 + $0x68] sm:$0xff]
        %v2783 = vld [vmem:[%s2768 + $0x70] sm:$0xff]
        %v2784 = vld [vmem:[%s2768 + $0x78] sm:$0xff]
        %v2785 = vld [vmem:[%s2768 + $0x80] sm:$0xff]
        %v2786 = vld [vmem:[%s2768 + $0x88] sm:$0xff]
        %v2787 = vld [vmem:[%s2768 + $0x90] sm:$0xff]
        %v2788 = vld [vmem:[%s2768 + $0x98] sm:$0xff]
        %v2789 = vld [vmem:[%s2768 + $0xa0] sm:$0xff]
        %v2790 = vld [vmem:[%s2768 + $0xa8] sm:$0xff]
        %v2791 = vld [vmem:[%s2768 + $0xb0] sm:$0xff]
        %v2792 = vld [vmem:[%s2768 + $0xb8] sm:$0xff]
        %v2793 = vld [vmem:[%s2768 + $0xc0] sm:$0xff]
        %v2794 = vld [vmem:[%s2768 + $0xc8] sm:$0xff]
        %v2795 = vld [vmem:[%s2768 + $0xd0] sm:$0xff]
        %v2796 = vld [vmem:[%s2768 + $0xd8] sm:$0xff]
        %v2797 = vld [vmem:[%s2768 + $0xe0] sm:$0xff]
        %v2798 = vld [vmem:[%s2768 + $0xe8] sm:$0xff]
        %v2799 = vld [vmem:[%s2768 + $0xf0] sm:$0xff]
        %v2800 = vld [vmem:[%s2768 + $0xf8] sm:$0xff]
        %v2801 = vld [vmem:[%s2768 + $0x100] sm:$0xff]
        %v2802 = vld [vmem:[%s2768 + $0x108] sm:$0xff]
        %v2803 = vld [vmem:[%s2768 + $0x110] sm:$0xff]
        %v2804 = vld [vmem:[%s2768 + $0x118] sm:$0xff]
        %v2805 = vld [vmem:[%s2768 + $0x120] sm:$0xff]
        %v2806 = vld [vmem:[%s2768 + $0x128] sm:$0xff]
        %v2807 = vld [vmem:[%s2768 + $0x130] sm:$0xff]
        %v2808 = vld [vmem:[%s2768 + $0x138] sm:$0xff]
        %v2809 = vld [vmem:[%s2768 + $0x140] sm:$0xff]
        %v2810 = vld [vmem:[%s2768 + $0x148] sm:$0xff]
        %v2811 = vld [vmem:[%s2768 + $0x150] sm:$0xff]
        %v2812 = vld [vmem:[%s2768 + $0x158] sm:$0xff]
        %v2813 = vld [vmem:[%s2768 + $0x160] sm:$0xff]
        %v2814 = vld [vmem:[%s2768 + $0x168] sm:$0xff]
        %v2815 = vld [vmem:[%s2768 + $0x170] sm:$0xff]
        %v2816 = vld [vmem:[%s2768 + $0x178] sm:$0xff]
        %v2817 = vld [vmem:[%s2768 + $0x180] sm:$0xff]
        %v2818 = vld [vmem:[%s2768 + $0x188] sm:$0xff]
        %v2819 = vld [vmem:[%s2768 + $0x190] sm:$0xff]
        %v2820 = vld [vmem:[%s2768 + $0x198] sm:$0xff]
        %v2821 = vld [vmem:[%s2768 + $0x1a0] sm:$0xff]
        %v2822 = vld [vmem:[%s2768 + $0x1a8] sm:$0xff]
        %v2823 = vld [vmem:[%s2768 + $0x1b0] sm:$0xff]
        %v2824 = vld [vmem:[%s2768 + $0x1b8] sm:$0xff]
        %v2825 = vld [vmem:[%s2768 + $0x1c0] sm:$0xff]
        %v2826 = vld [vmem:[%s2768 + $0x1c8] sm:$0xff]
        %v2827 = vld [vmem:[%s2768 + $0x1d0] sm:$0xff]
        %v2828 = vld [vmem:[%s2768 + $0x1d8] sm:$0xff]
        %v2829 = vld [vmem:[%s2768 + $0x1e0] sm:$0xff]
        %v2830 = vld [vmem:[%s2768 + $0x1e8] sm:$0xff]
        %v2831 = vld [vmem:[%s2768 + $0x1f0] sm:$0xff]
        %v2832 = vld [vmem:[%s2768 + $0x1f8] sm:$0xff]
        %v2837 = vrot.slane %v1517, 7
        %v2838 = vsel %vm1589, %v2837, %v1513
        %v2839 = vrot.slane %v1518, 7
        %v2840 = vsel %vm1589, %v2839, %v1514
        %2843 = vmatprep.subr.mxu0 %v2800
        %2844 = vmatpush1.msra.mxu0 %v2799
        %2845 = vmatprep.subr.mxu0 %v2798
        %2846 = vmatpush1.msra.mxu0 %v2797
        %2847 = vmatprep.subr.mxu0 %v2796
        %2848 = vmatpush1.msra.mxu0 %v2795
        %2849 = vmatprep.subr.mxu0 %v2794
        %2850 = vmatpush1.msra.mxu0 %v2793
        %2851 = vmatprep.subr.mxu0 %v2792
        %2852 = vmatpush1.msra.mxu0 %v2791
        %2853 = vmatprep.subr.mxu0 %v2790
        %2854 = vmatpush1.msra.mxu0 %v2789
        %2855 = vmatprep.subr.mxu0 %v2788
        %2856 = vmatpush1.msra.mxu0 %v2787
        %2857 = vmatprep.subr.mxu0 %v2786
        %2858 = vmatpush1.msra.mxu0 %v2785
        %2859 = vmatprep.subr.mxu0 %v2784
        %2860 = vmatpush1.msra.mxu0 %v2783
        %2861 = vmatprep.subr.mxu0 %v2782
        %2862 = vmatpush1.msra.mxu0 %v2781
        %2863 = vmatprep.subr.mxu0 %v2780
        %2864 = vmatpush1.msra.mxu0 %v2779
        %2865 = vmatprep.subr.mxu0 %v2778
        %2866 = vmatpush1.msra.mxu0 %v2777
        %2867 = vmatprep.subr.mxu0 %v2776
        %2868 = vmatpush1.msra.mxu0 %v2775
        %2869 = vmatprep.subr.mxu0 %v2774
        %2870 = vmatpush1.msra.mxu0 %v2773
        %2871 = vmatprep.subr.mxu0 %v2772
        %2872 = vmatpush1.msra.mxu0 %v2771
        %2873 = vmatprep.subr.mxu0 %v2770
        %2874 = vmatpush1.msra.mxu0 %v2769
        %2875 = vmatprep.subr.mxu0 %v2832
        %2876 = vmatpush2.msra.mxu0 %v2831
        %2877 = vmatprep.subr.mxu0 %v2830
        %2878 = vmatpush2.msra.mxu0 %v2829
        %2879 = vmatprep.subr.mxu0 %v2828
        %2880 = vmatpush2.msra.mxu0 %v2827
        %2881 = vmatprep.subr.mxu0 %v2826
        %2882 = vmatpush2.msra.mxu0 %v2825
        %2883 = vmatprep.subr.mxu0 %v2824
        %2884 = vmatpush2.msra.mxu0 %v2823
        %2885 = vmatprep.subr.mxu0 %v2822
        %2886 = vmatpush2.msra.mxu0 %v2821
        %2887 = vmatprep.subr.mxu0 %v2820
        %2888 = vmatpush2.msra.mxu0 %v2819
        %2889 = vmatprep.subr.mxu0 %v2818
        %2890 = vmatpush2.msra.mxu0 %v2817
        %2891 = vmatprep.subr.mxu0 %v2816
        %2892 = vmatpush2.msra.mxu0 %v2815
        %2893 = vmatprep.subr.mxu0 %v2814
        %2894 = vmatpush2.msra.mxu0 %v2813
        %2895 = vmatprep.subr.mxu0 %v2812
        %2896 = vmatpush2.msra.mxu0 %v2811
        %2897 = vmatprep.subr.mxu0 %v2810
        %2898 = vmatpush2.msra.mxu0 %v2809
        %2899 = vmatprep.subr.mxu0 %v2808
        %2900 = vmatpush2.msra.mxu0 %v2807
        %2901 = vmatprep.subr.mxu0 %v2806
        %2902 = vmatpush2.msra.mxu0 %v2805
        %2903 = vmatprep.subr.mxu0 %v2804
        %2904 = vmatpush2.msra.mxu0 %v2803
        %2905 = vmatprep.subr.mxu0 %v2802
        %2906 = vmatpush2.msra.mxu0 %v2801
        %2907 = vmatprep.mubr.f32.mxu0 %v2840
        %2908 = vmatmul.mubr.f32.gmra.mxu0 %v2838
        %v2909 = vpop.f32.mrf.mxu0
        %v2910 = vadd.f32 0.0, %v2909
        %v2911 = vpop.f32.mrf.mxu0
        %v2912 = vadd.f32 0.0, %v2911
        %2913 = vdwg.mxu0
        %v2916 = vcombine.low %v2910, %v2912
        %v2918 = vunpack.c.l.s4 1983009808
        %v2919 = vunpack.c.0.s8 %v2918
        %v2920 = vlaneseq
        %v2921 = vshrl.u32 %v2920, 7
        %v2922 = vsub.s32 %v2919, %v2921
        %v2923 = vrot.slane %v2916, %v2922
        %v2925 = vadd.f32 %v2767, %v2923
        %s2926 = scalar_lea.vmem %s251, 4608 [#allocation4]
        %v2927 = vld [vmem:[%s2926] sm:$0xff]
        %v2928 = vld [vmem:[%s2926 + $0x8] sm:$0xff]
        %v2929 = vld [vmem:[%s2926 + $0x10] sm:$0xff]
        %v2930 = vld [vmem:[%s2926 + $0x18] sm:$0xff]
        %v2931 = vld [vmem:[%s2926 + $0x20] sm:$0xff]
        %v2932 = vld [vmem:[%s2926 + $0x28] sm:$0xff]
        %v2933 = vld [vmem:[%s2926 + $0x30] sm:$0xff]
        %v2934 = vld [vmem:[%s2926 + $0x38] sm:$0xff]
        %v2935 = vld [vmem:[%s2926 + $0x40] sm:$0xff]
        %v2936 = vld [vmem:[%s2926 + $0x48] sm:$0xff]
        %v2937 = vld [vmem:[%s2926 + $0x50] sm:$0xff]
        %v2938 = vld [vmem:[%s2926 + $0x58] sm:$0xff]
        %v2939 = vld [vmem:[%s2926 + $0x60] sm:$0xff]
        %v2940 = vld [vmem:[%s2926 + $0x68] sm:$0xff]
        %v2941 = vld [vmem:[%s2926 + $0x70] sm:$0xff]
        %v2942 = vld [vmem:[%s2926 + $0x78] sm:$0xff]
        %v2943 = vld [vmem:[%s2926 + $0x80] sm:$0xff]
        %v2944 = vld [vmem:[%s2926 + $0x88] sm:$0xff]
        %v2945 = vld [vmem:[%s2926 + $0x90] sm:$0xff]
        %v2946 = vld [vmem:[%s2926 + $0x98] sm:$0xff]
        %v2947 = vld [vmem:[%s2926 + $0xa0] sm:$0xff]
        %v2948 = vld [vmem:[%s2926 + $0xa8] sm:$0xff]
        %v2949 = vld [vmem:[%s2926 + $0xb0] sm:$0xff]
        %v2950 = vld [vmem:[%s2926 + $0xb8] sm:$0xff]
        %v2951 = vld [vmem:[%s2926 + $0xc0] sm:$0xff]
        %v2952 = vld [vmem:[%s2926 + $0xc8] sm:$0xff]
        %v2953 = vld [vmem:[%s2926 + $0xd0] sm:$0xff]
        %v2954 = vld [vmem:[%s2926 + $0xd8] sm:$0xff]
        %v2955 = vld [vmem:[%s2926 + $0xe0] sm:$0xff]
        %v2956 = vld [vmem:[%s2926 + $0xe8] sm:$0xff]
        %v2957 = vld [vmem:[%s2926 + $0xf0] sm:$0xff]
        %v2958 = vld [vmem:[%s2926 + $0xf8] sm:$0xff]
        %v2959 = vld [vmem:[%s2926 + $0x100] sm:$0xff]
        %v2960 = vld [vmem:[%s2926 + $0x108] sm:$0xff]
        %v2961 = vld [vmem:[%s2926 + $0x110] sm:$0xff]
        %v2962 = vld [vmem:[%s2926 + $0x118] sm:$0xff]
        %v2963 = vld [vmem:[%s2926 + $0x120] sm:$0xff]
        %v2964 = vld [vmem:[%s2926 + $0x128] sm:$0xff]
        %v2965 = vld [vmem:[%s2926 + $0x130] sm:$0xff]
        %v2966 = vld [vmem:[%s2926 + $0x138] sm:$0xff]
        %v2967 = vld [vmem:[%s2926 + $0x140] sm:$0xff]
        %v2968 = vld [vmem:[%s2926 + $0x148] sm:$0xff]
        %v2969 = vld [vmem:[%s2926 + $0x150] sm:$0xff]
        %v2970 = vld [vmem:[%s2926 + $0x158] sm:$0xff]
        %v2971 = vld [vmem:[%s2926 + $0x160] sm:$0xff]
        %v2972 = vld [vmem:[%s2926 + $0x168] sm:$0xff]
        %v2973 = vld [vmem:[%s2926 + $0x170] sm:$0xff]
        %v2974 = vld [vmem:[%s2926 + $0x178] sm:$0xff]
        %v2975 = vld [vmem:[%s2926 + $0x180] sm:$0xff]
        %v2976 = vld [vmem:[%s2926 + $0x188] sm:$0xff]
        %v2977 = vld [vmem:[%s2926 + $0x190] sm:$0xff]
        %v2978 = vld [vmem:[%s2926 + $0x198] sm:$0xff]
        %v2979 = vld [vmem:[%s2926 + $0x1a0] sm:$0xff]
        %v2980 = vld [vmem:[%s2926 + $0x1a8] sm:$0xff]
        %v2981 = vld [vmem:[%s2926 + $0x1b0] sm:$0xff]
        %v2982 = vld [vmem:[%s2926 + $0x1b8] sm:$0xff]
        %v2983 = vld [vmem:[%s2926 + $0x1c0] sm:$0xff]
        %v2984 = vld [vmem:[%s2926 + $0x1c8] sm:$0xff]
        %v2985 = vld [vmem:[%s2926 + $0x1d0] sm:$0xff]
        %v2986 = vld [vmem:[%s2926 + $0x1d8] sm:$0xff]
        %v2987 = vld [vmem:[%s2926 + $0x1e0] sm:$0xff]
        %v2988 = vld [vmem:[%s2926 + $0x1e8] sm:$0xff]
        %v2989 = vld [vmem:[%s2926 + $0x1f0] sm:$0xff]
        %v2990 = vld [vmem:[%s2926 + $0x1f8] sm:$0xff]
        %v2991 = vrot.slane %v1513, 1
        %v2992 = vsel %vm1589, %v1517, %v2991
        %v2993 = vrot.slane %v1514, 1
        %v2994 = vsel %vm1589, %v1518, %v2993
        %2997 = vmatprep.subr.mxu0 %v2958
        %2998 = vmatpush1.msra.mxu0 %v2957
        %2999 = vmatprep.subr.mxu0 %v2956
        %3000 = vmatpush1.msra.mxu0 %v2955
        %3001 = vmatprep.subr.mxu0 %v2954
        %3002 = vmatpush1.msra.mxu0 %v2953
        %3003 = vmatprep.subr.mxu0 %v2952
        %3004 = vmatpush1.msra.mxu0 %v2951
        %3005 = vmatprep.subr.mxu0 %v2950
        %3006 = vmatpush1.msra.mxu0 %v2949
        %3007 = vmatprep.subr.mxu0 %v2948
        %3008 = vmatpush1.msra.mxu0 %v2947
        %3009 = vmatprep.subr.mxu0 %v2946
        %3010 = vmatpush1.msra.mxu0 %v2945
        %3011 = vmatprep.subr.mxu0 %v2944
        %3012 = vmatpush1.msra.mxu0 %v2943
        %3013 = vmatprep.subr.mxu0 %v2942
        %3014 = vmatpush1.msra.mxu0 %v2941
        %3015 = vmatprep.subr.mxu0 %v2940
        %3016 = vmatpush1.msra.mxu0 %v2939
        %3017 = vmatprep.subr.mxu0 %v2938
        %3018 = vmatpush1.msra.mxu0 %v2937
        %3019 = vmatprep.subr.mxu0 %v2936
        %3020 = vmatpush1.msra.mxu0 %v2935
        %3021 = vmatprep.subr.mxu0 %v2934
        %3022 = vmatpush1.msra.mxu0 %v2933
        %3023 = vmatprep.subr.mxu0 %v2932
        %3024 = vmatpush1.msra.mxu0 %v2931
        %3025 = vmatprep.subr.mxu0 %v2930
        %3026 = vmatpush1.msra.mxu0 %v2929
        %3027 = vmatprep.subr.mxu0 %v2928
        %3028 = vmatpush1.msra.mxu0 %v2927
        %3029 = vmatprep.subr.mxu0 %v2990
        %3030 = vmatpush2.msra.mxu0 %v2989
        %3031 = vmatprep.subr.mxu0 %v2988
        %3032 = vmatpush2.msra.mxu0 %v2987
        %3033 = vmatprep.subr.mxu0 %v2986
        %3034 = vmatpush2.msra.mxu0 %v2985
        %3035 = vmatprep.subr.mxu0 %v2984
        %3036 = vmatpush2.msra.mxu0 %v2983
        %3037 = vmatprep.subr.mxu0 %v2982
        %3038 = vmatpush2.msra.mxu0 %v2981
        %3039 = vmatprep.subr.mxu0 %v2980
        %3040 = vmatpush2.msra.mxu0 %v2979
        %3041 = vmatprep.subr.mxu0 %v2978
        %3042 = vmatpush2.msra.mxu0 %v2977
        %3043 = vmatprep.subr.mxu0 %v2976
        %3044 = vmatpush2.msra.mxu0 %v2975
        %3045 = vmatprep.subr.mxu0 %v2974
        %3046 = vmatpush2.msra.mxu0 %v2973
        %3047 = vmatprep.subr.mxu0 %v2972
        %3048 = vmatpush2.msra.mxu0 %v2971
        %3049 = vmatprep.subr.mxu0 %v2970
        %3050 = vmatpush2.msra.mxu0 %v2969
        %3051 = vmatprep.subr.mxu0 %v2968
        %3052 = vmatpush2.msra.mxu0 %v2967
        %3053 = vmatprep.subr.mxu0 %v2966
        %3054 = vmatpush2.msra.mxu0 %v2965
        %3055 = vmatprep.subr.mxu0 %v2964
        %3056 = vmatpush2.msra.mxu0 %v2963
        %3057 = vmatprep.subr.mxu0 %v2962
        %3058 = vmatpush2.msra.mxu0 %v2961
        %3059 = vmatprep.subr.mxu0 %v2960
        %3060 = vmatpush2.msra.mxu0 %v2959
        %3061 = vmatprep.mubr.f32.mxu0 %v2994
        %3062 = vmatmul.mubr.f32.gmra.mxu0 %v2992
        %v3063 = vpop.f32.mrf.mxu0
        %v3064 = vadd.f32 0.0, %v3063
        %v3065 = vpop.f32.mrf.mxu0
        %v3066 = vadd.f32 0.0, %v3065
        %3067 = vdwg.mxu0
        %v3070 = vcombine.low %v3064, %v3066
        %v3072 = vunpack.c.l.s4 1983009808
        %v3073 = vunpack.c.0.s8 %v3072
        %v3074 = vlaneseq
        %v3075 = vshrl.u32 %v3074, 7
        %v3076 = vsub.s32 %v3073, %v3075
        %v3077 = vrot.slane %v3070, %v3076
        %v3079 = vadd.f32 %v2925, %v3077
        %s3080 = scalar_lea.vmem %s251, 5120 [#allocation4]
        %v3081 = vld [vmem:[%s3080] sm:$0xff]
        %v3082 = vld [vmem:[%s3080 + $0x8] sm:$0xff]
        %v3083 = vld [vmem:[%s3080 + $0x10] sm:$0xff]
        %v3084 = vld [vmem:[%s3080 + $0x18] sm:$0xff]
        %v3085 = vld [vmem:[%s3080 + $0x20] sm:$0xff]
        %v3086 = vld [vmem:[%s3080 + $0x28] sm:$0xff]
        %v3087 = vld [vmem:[%s3080 + $0x30] sm:$0xff]
        %v3088 = vld [vmem:[%s3080 + $0x38] sm:$0xff]
        %v3089 = vld [vmem:[%s3080 + $0x40] sm:$0xff]
        %v3090 = vld [vmem:[%s3080 + $0x48] sm:$0xff]
        %v3091 = vld [vmem:[%s3080 + $0x50] sm:$0xff]
        %v3092 = vld [vmem:[%s3080 + $0x58] sm:$0xff]
        %v3093 = vld [vmem:[%s3080 + $0x60] sm:$0xff]
        %v3094 = vld [vmem:[%s3080 + $0x68] sm:$0xff]
        %v3095 = vld [vmem:[%s3080 + $0x70] sm:$0xff]
        %v3096 = vld [vmem:[%s3080 + $0x78] sm:$0xff]
        %v3097 = vld [vmem:[%s3080 + $0x80] sm:$0xff]
        %v3098 = vld [vmem:[%s3080 + $0x88] sm:$0xff]
        %v3099 = vld [vmem:[%s3080 + $0x90] sm:$0xff]
        %v3100 = vld [vmem:[%s3080 + $0x98] sm:$0xff]
        %v3101 = vld [vmem:[%s3080 + $0xa0] sm:$0xff]
        %v3102 = vld [vmem:[%s3080 + $0xa8] sm:$0xff]
        %v3103 = vld [vmem:[%s3080 + $0xb0] sm:$0xff]
        %v3104 = vld [vmem:[%s3080 + $0xb8] sm:$0xff]
        %v3105 = vld [vmem:[%s3080 + $0xc0] sm:$0xff]
        %v3106 = vld [vmem:[%s3080 + $0xc8] sm:$0xff]
        %v3107 = vld [vmem:[%s3080 + $0xd0] sm:$0xff]
        %v3108 = vld [vmem:[%s3080 + $0xd8] sm:$0xff]
        %v3109 = vld [vmem:[%s3080 + $0xe0] sm:$0xff]
        %v3110 = vld [vmem:[%s3080 + $0xe8] sm:$0xff]
        %v3111 = vld [vmem:[%s3080 + $0xf0] sm:$0xff]
        %v3112 = vld [vmem:[%s3080 + $0xf8] sm:$0xff]
        %v3113 = vld [vmem:[%s3080 + $0x100] sm:$0xff]
        %v3114 = vld [vmem:[%s3080 + $0x108] sm:$0xff]
        %v3115 = vld [vmem:[%s3080 + $0x110] sm:$0xff]
        %v3116 = vld [vmem:[%s3080 + $0x118] sm:$0xff]
        %v3117 = vld [vmem:[%s3080 + $0x120] sm:$0xff]
        %v3118 = vld [vmem:[%s3080 + $0x128] sm:$0xff]
        %v3119 = vld [vmem:[%s3080 + $0x130] sm:$0xff]
        %v3120 = vld [vmem:[%s3080 + $0x138] sm:$0xff]
        %v3121 = vld [vmem:[%s3080 + $0x140] sm:$0xff]
        %v3122 = vld [vmem:[%s3080 + $0x148] sm:$0xff]
        %v3123 = vld [vmem:[%s3080 + $0x150] sm:$0xff]
        %v3124 = vld [vmem:[%s3080 + $0x158] sm:$0xff]
        %v3125 = vld [vmem:[%s3080 + $0x160] sm:$0xff]
        %v3126 = vld [vmem:[%s3080 + $0x168] sm:$0xff]
        %v3127 = vld [vmem:[%s3080 + $0x170] sm:$0xff]
        %v3128 = vld [vmem:[%s3080 + $0x178] sm:$0xff]
        %v3129 = vld [vmem:[%s3080 + $0x180] sm:$0xff]
        %v3130 = vld [vmem:[%s3080 + $0x188] sm:$0xff]
        %v3131 = vld [vmem:[%s3080 + $0x190] sm:$0xff]
        %v3132 = vld [vmem:[%s3080 + $0x198] sm:$0xff]
        %v3133 = vld [vmem:[%s3080 + $0x1a0] sm:$0xff]
        %v3134 = vld [vmem:[%s3080 + $0x1a8] sm:$0xff]
        %v3135 = vld [vmem:[%s3080 + $0x1b0] sm:$0xff]
        %v3136 = vld [vmem:[%s3080 + $0x1b8] sm:$0xff]
        %v3137 = vld [vmem:[%s3080 + $0x1c0] sm:$0xff]
        %v3138 = vld [vmem:[%s3080 + $0x1c8] sm:$0xff]
        %v3139 = vld [vmem:[%s3080 + $0x1d0] sm:$0xff]
        %v3140 = vld [vmem:[%s3080 + $0x1d8] sm:$0xff]
        %v3141 = vld [vmem:[%s3080 + $0x1e0] sm:$0xff]
        %v3142 = vld [vmem:[%s3080 + $0x1e8] sm:$0xff]
        %v3143 = vld [vmem:[%s3080 + $0x1f0] sm:$0xff]
        %v3144 = vld [vmem:[%s3080 + $0x1f8] sm:$0xff]
        %v3145 = vrot.slane %v1513, 2
        %v3146 = vrot.slane %v1517, 1
        %v3147 = vsel %vm1589, %v3146, %v3145
        %v3148 = vrot.slane %v1514, 2
        %v3149 = vrot.slane %v1518, 1
        %v3150 = vsel %vm1589, %v3149, %v3148
        %3153 = vmatprep.subr.mxu0 %v3112
        %3154 = vmatpush1.msra.mxu0 %v3111
        %3155 = vmatprep.subr.mxu0 %v3110
        %3156 = vmatpush1.msra.mxu0 %v3109
        %3157 = vmatprep.subr.mxu0 %v3108
        %3158 = vmatpush1.msra.mxu0 %v3107
        %3159 = vmatprep.subr.mxu0 %v3106
        %3160 = vmatpush1.msra.mxu0 %v3105
        %3161 = vmatprep.subr.mxu0 %v3104
        %3162 = vmatpush1.msra.mxu0 %v3103
        %3163 = vmatprep.subr.mxu0 %v3102
        %3164 = vmatpush1.msra.mxu0 %v3101
        %3165 = vmatprep.subr.mxu0 %v3100
        %3166 = vmatpush1.msra.mxu0 %v3099
        %3167 = vmatprep.subr.mxu0 %v3098
        %3168 = vmatpush1.msra.mxu0 %v3097
        %3169 = vmatprep.subr.mxu0 %v3096
        %3170 = vmatpush1.msra.mxu0 %v3095
        %3171 = vmatprep.subr.mxu0 %v3094
        %3172 = vmatpush1.msra.mxu0 %v3093
        %3173 = vmatprep.subr.mxu0 %v3092
        %3174 = vmatpush1.msra.mxu0 %v3091
        %3175 = vmatprep.subr.mxu0 %v3090
        %3176 = vmatpush1.msra.mxu0 %v3089
        %3177 = vmatprep.subr.mxu0 %v3088
        %3178 = vmatpush1.msra.mxu0 %v3087
        %3179 = vmatprep.subr.mxu0 %v3086
        %3180 = vmatpush1.msra.mxu0 %v3085
        %3181 = vmatprep.subr.mxu0 %v3084
        %3182 = vmatpush1.msra.mxu0 %v3083
        %3183 = vmatprep.subr.mxu0 %v3082
        %3184 = vmatpush1.msra.mxu0 %v3081
        %3185 = vmatprep.subr.mxu0 %v3144
        %3186 = vmatpush2.msra.mxu0 %v3143
        %3187 = vmatprep.subr.mxu0 %v3142
        %3188 = vmatpush2.msra.mxu0 %v3141
        %3189 = vmatprep.subr.mxu0 %v3140
        %3190 = vmatpush2.msra.mxu0 %v3139
        %3191 = vmatprep.subr.mxu0 %v3138
        %3192 = vmatpush2.msra.mxu0 %v3137
        %3193 = vmatprep.subr.mxu0 %v3136
        %3194 = vmatpush2.msra.mxu0 %v3135
        %3195 = vmatprep.subr.mxu0 %v3134
        %3196 = vmatpush2.msra.mxu0 %v3133
        %3197 = vmatprep.subr.mxu0 %v3132
        %3198 = vmatpush2.msra.mxu0 %v3131
        %3199 = vmatprep.subr.mxu0 %v3130
        %3200 = vmatpush2.msra.mxu0 %v3129
        %3201 = vmatprep.subr.mxu0 %v3128
        %3202 = vmatpush2.msra.mxu0 %v3127
        %3203 = vmatprep.subr.mxu0 %v3126
        %3204 = vmatpush2.msra.mxu0 %v3125
        %3205 = vmatprep.subr.mxu0 %v3124
        %3206 = vmatpush2.msra.mxu0 %v3123
        %3207 = vmatprep.subr.mxu0 %v3122
        %3208 = vmatpush2.msra.mxu0 %v3121
        %3209 = vmatprep.subr.mxu0 %v3120
        %3210 = vmatpush2.msra.mxu0 %v3119
        %3211 = vmatprep.subr.mxu0 %v3118
        %3212 = vmatpush2.msra.mxu0 %v3117
        %3213 = vmatprep.subr.mxu0 %v3116
        %3214 = vmatpush2.msra.mxu0 %v3115
        %3215 = vmatprep.subr.mxu0 %v3114
        %3216 = vmatpush2.msra.mxu0 %v3113
        %3217 = vmatprep.mubr.f32.mxu0 %v3150
        %3218 = vmatmul.mubr.f32.gmra.mxu0 %v3147
        %v3219 = vpop.f32.mrf.mxu0
        %v3220 = vadd.f32 0.0, %v3219
        %v3221 = vpop.f32.mrf.mxu0
        %v3222 = vadd.f32 0.0, %v3221
        %3223 = vdwg.mxu0
        %v3226 = vcombine.low %v3220, %v3222
        %v3228 = vunpack.c.l.s4 1983009808
        %v3229 = vunpack.c.0.s8 %v3228
        %v3230 = vlaneseq
        %v3231 = vshrl.u32 %v3230, 7
        %v3232 = vsub.s32 %v3229, %v3231
        %v3233 = vrot.slane %v3226, %v3232
        %v3235 = vadd.f32 %v3079, %v3233
        %s3236 = scalar_lea.vmem %s251, 5632 [#allocation4]
        %v3237 = vld [vmem:[%s3236] sm:$0xff]
        %v3238 = vld [vmem:[%s3236 + $0x8] sm:$0xff]
        %v3239 = vld [vmem:[%s3236 + $0x10] sm:$0xff]
        %v3240 = vld [vmem:[%s3236 + $0x18] sm:$0xff]
        %v3241 = vld [vmem:[%s3236 + $0x20] sm:$0xff]
        %v3242 = vld [vmem:[%s3236 + $0x28] sm:$0xff]
        %v3243 = vld [vmem:[%s3236 + $0x30] sm:$0xff]
        %v3244 = vld [vmem:[%s3236 + $0x38] sm:$0xff]
        %v3245 = vld [vmem:[%s3236 + $0x40] sm:$0xff]
        %v3246 = vld [vmem:[%s3236 + $0x48] sm:$0xff]
        %v3247 = vld [vmem:[%s3236 + $0x50] sm:$0xff]
        %v3248 = vld [vmem:[%s3236 + $0x58] sm:$0xff]
        %v3249 = vld [vmem:[%s3236 + $0x60] sm:$0xff]
        %v3250 = vld [vmem:[%s3236 + $0x68] sm:$0xff]
        %v3251 = vld [vmem:[%s3236 + $0x70] sm:$0xff]
        %v3252 = vld [vmem:[%s3236 + $0x78] sm:$0xff]
        %v3253 = vld [vmem:[%s3236 + $0x80] sm:$0xff]
        %v3254 = vld [vmem:[%s3236 + $0x88] sm:$0xff]
        %v3255 = vld [vmem:[%s3236 + $0x90] sm:$0xff]
        %v3256 = vld [vmem:[%s3236 + $0x98] sm:$0xff]
        %v3257 = vld [vmem:[%s3236 + $0xa0] sm:$0xff]
        %v3258 = vld [vmem:[%s3236 + $0xa8] sm:$0xff]
        %v3259 = vld [vmem:[%s3236 + $0xb0] sm:$0xff]
        %v3260 = vld [vmem:[%s3236 + $0xb8] sm:$0xff]
        %v3261 = vld [vmem:[%s3236 + $0xc0] sm:$0xff]
        %v3262 = vld [vmem:[%s3236 + $0xc8] sm:$0xff]
        %v3263 = vld [vmem:[%s3236 + $0xd0] sm:$0xff]
        %v3264 = vld [vmem:[%s3236 + $0xd8] sm:$0xff]
        %v3265 = vld [vmem:[%s3236 + $0xe0] sm:$0xff]
        %v3266 = vld [vmem:[%s3236 + $0xe8] sm:$0xff]
        %v3267 = vld [vmem:[%s3236 + $0xf0] sm:$0xff]
        %v3268 = vld [vmem:[%s3236 + $0xf8] sm:$0xff]
        %v3269 = vld [vmem:[%s3236 + $0x100] sm:$0xff]
        %v3270 = vld [vmem:[%s3236 + $0x108] sm:$0xff]
        %v3271 = vld [vmem:[%s3236 + $0x110] sm:$0xff]
        %v3272 = vld [vmem:[%s3236 + $0x118] sm:$0xff]
        %v3273 = vld [vmem:[%s3236 + $0x120] sm:$0xff]
        %v3274 = vld [vmem:[%s3236 + $0x128] sm:$0xff]
        %v3275 = vld [vmem:[%s3236 + $0x130] sm:$0xff]
        %v3276 = vld [vmem:[%s3236 + $0x138] sm:$0xff]
        %v3277 = vld [vmem:[%s3236 + $0x140] sm:$0xff]
        %v3278 = vld [vmem:[%s3236 + $0x148] sm:$0xff]
        %v3279 = vld [vmem:[%s3236 + $0x150] sm:$0xff]
        %v3280 = vld [vmem:[%s3236 + $0x158] sm:$0xff]
        %v3281 = vld [vmem:[%s3236 + $0x160] sm:$0xff]
        %v3282 = vld [vmem:[%s3236 + $0x168] sm:$0xff]
        %v3283 = vld [vmem:[%s3236 + $0x170] sm:$0xff]
        %v3284 = vld [vmem:[%s3236 + $0x178] sm:$0xff]
        %v3285 = vld [vmem:[%s3236 + $0x180] sm:$0xff]
        %v3286 = vld [vmem:[%s3236 + $0x188] sm:$0xff]
        %v3287 = vld [vmem:[%s3236 + $0x190] sm:$0xff]
        %v3288 = vld [vmem:[%s3236 + $0x198] sm:$0xff]
        %v3289 = vld [vmem:[%s3236 + $0x1a0] sm:$0xff]
        %v3290 = vld [vmem:[%s3236 + $0x1a8] sm:$0xff]
        %v3291 = vld [vmem:[%s3236 + $0x1b0] sm:$0xff]
        %v3292 = vld [vmem:[%s3236 + $0x1b8] sm:$0xff]
        %v3293 = vld [vmem:[%s3236 + $0x1c0] sm:$0xff]
        %v3294 = vld [vmem:[%s3236 + $0x1c8] sm:$0xff]
        %v3295 = vld [vmem:[%s3236 + $0x1d0] sm:$0xff]
        %v3296 = vld [vmem:[%s3236 + $0x1d8] sm:$0xff]
        %v3297 = vld [vmem:[%s3236 + $0x1e0] sm:$0xff]
        %v3298 = vld [vmem:[%s3236 + $0x1e8] sm:$0xff]
        %v3299 = vld [vmem:[%s3236 + $0x1f0] sm:$0xff]
        %v3300 = vld [vmem:[%s3236 + $0x1f8] sm:$0xff]
        %v3301 = vrot.slane %v1513, 3
        %v3302 = vrot.slane %v1517, 2
        %v3303 = vsel %vm1589, %v3302, %v3301
        %v3304 = vrot.slane %v1514, 3
        %v3305 = vrot.slane %v1518, 2
        %v3306 = vsel %vm1589, %v3305, %v3304
        %3309 = vmatprep.subr.mxu0 %v3268
        %3310 = vmatpush1.msra.mxu0 %v3267
        %3311 = vmatprep.subr.mxu0 %v3266
        %3312 = vmatpush1.msra.mxu0 %v3265
        %3313 = vmatprep.subr.mxu0 %v3264
        %3314 = vmatpush1.msra.mxu0 %v3263
        %3315 = vmatprep.subr.mxu0 %v3262
        %3316 = vmatpush1.msra.mxu0 %v3261
        %3317 = vmatprep.subr.mxu0 %v3260
        %3318 = vmatpush1.msra.mxu0 %v3259
        %3319 = vmatprep.subr.mxu0 %v3258
        %3320 = vmatpush1.msra.mxu0 %v3257
        %3321 = vmatprep.subr.mxu0 %v3256
        %3322 = vmatpush1.msra.mxu0 %v3255
        %3323 = vmatprep.subr.mxu0 %v3254
        %3324 = vmatpush1.msra.mxu0 %v3253
        %3325 = vmatprep.subr.mxu0 %v3252
        %3326 = vmatpush1.msra.mxu0 %v3251
        %3327 = vmatprep.subr.mxu0 %v3250
        %3328 = vmatpush1.msra.mxu0 %v3249
        %3329 = vmatprep.subr.mxu0 %v3248
        %3330 = vmatpush1.msra.mxu0 %v3247
        %3331 = vmatprep.subr.mxu0 %v3246
        %3332 = vmatpush1.msra.mxu0 %v3245
        %3333 = vmatprep.subr.mxu0 %v3244
        %3334 = vmatpush1.msra.mxu0 %v3243
        %3335 = vmatprep.subr.mxu0 %v3242
        %3336 = vmatpush1.msra.mxu0 %v3241
        %3337 = vmatprep.subr.mxu0 %v3240
        %3338 = vmatpush1.msra.mxu0 %v3239
        %3339 = vmatprep.subr.mxu0 %v3238
        %3340 = vmatpush1.msra.mxu0 %v3237
        %3341 = vmatprep.subr.mxu0 %v3300
        %3342 = vmatpush2.msra.mxu0 %v3299
        %3343 = vmatprep.subr.mxu0 %v3298
        %3344 = vmatpush2.msra.mxu0 %v3297
        %3345 = vmatprep.subr.mxu0 %v3296
        %3346 = vmatpush2.msra.mxu0 %v3295
        %3347 = vmatprep.subr.mxu0 %v3294
        %3348 = vmatpush2.msra.mxu0 %v3293
        %3349 = vmatprep.subr.mxu0 %v3292
        %3350 = vmatpush2.msra.mxu0 %v3291
        %3351 = vmatprep.subr.mxu0 %v3290
        %3352 = vmatpush2.msra.mxu0 %v3289
        %3353 = vmatprep.subr.mxu0 %v3288
        %3354 = vmatpush2.msra.mxu0 %v3287
        %3355 = vmatprep.subr.mxu0 %v3286
        %3356 = vmatpush2.msra.mxu0 %v3285
        %3357 = vmatprep.subr.mxu0 %v3284
        %3358 = vmatpush2.msra.mxu0 %v3283
        %3359 = vmatprep.subr.mxu0 %v3282
        %3360 = vmatpush2.msra.mxu0 %v3281
        %3361 = vmatprep.subr.mxu0 %v3280
        %3362 = vmatpush2.msra.mxu0 %v3279
        %3363 = vmatprep.subr.mxu0 %v3278
        %3364 = vmatpush2.msra.mxu0 %v3277
        %3365 = vmatprep.subr.mxu0 %v3276
        %3366 = vmatpush2.msra.mxu0 %v3275
        %3367 = vmatprep.subr.mxu0 %v3274
        %3368 = vmatpush2.msra.mxu0 %v3273
        %3369 = vmatprep.subr.mxu0 %v3272
        %3370 = vmatpush2.msra.mxu0 %v3271
        %3371 = vmatprep.subr.mxu0 %v3270
        %3372 = vmatpush2.msra.mxu0 %v3269
        %3373 = vmatprep.mubr.f32.mxu0 %v3306
        %3374 = vmatmul.mubr.f32.gmra.mxu0 %v3303
        %v3375 = vpop.f32.mrf.mxu0
        %v3376 = vadd.f32 0.0, %v3375
        %v3377 = vpop.f32.mrf.mxu0
        %v3378 = vadd.f32 0.0, %v3377
        %3379 = vdwg.mxu0
        %v3382 = vcombine.low %v3376, %v3378
        %v3384 = vunpack.c.l.s4 1983009808
        %v3385 = vunpack.c.0.s8 %v3384
        %v3386 = vlaneseq
        %v3387 = vshrl.u32 %v3386, 7
        %v3388 = vsub.s32 %v3385, %v3387
        %v3389 = vrot.slane %v3382, %v3388
        %v3391 = vadd.f32 %v3235, %v3389
        %s3392 = scalar_lea.vmem %s251, 6144 [#allocation4]
        %v3393 = vld [vmem:[%s3392] sm:$0xff]
        %v3394 = vld [vmem:[%s3392 + $0x8] sm:$0xff]
        %v3395 = vld [vmem:[%s3392 + $0x10] sm:$0xff]
        %v3396 = vld [vmem:[%s3392 + $0x18] sm:$0xff]
        %v3397 = vld [vmem:[%s3392 + $0x20] sm:$0xff]
        %v3398 = vld [vmem:[%s3392 + $0x28] sm:$0xff]
        %v3399 = vld [vmem:[%s3392 + $0x30] sm:$0xff]
        %v3400 = vld [vmem:[%s3392 + $0x38] sm:$0xff]
        %v3401 = vld [vmem:[%s3392 + $0x40] sm:$0xff]
        %v3402 = vld [vmem:[%s3392 + $0x48] sm:$0xff]
        %v3403 = vld [vmem:[%s3392 + $0x50] sm:$0xff]
        %v3404 = vld [vmem:[%s3392 + $0x58] sm:$0xff]
        %v3405 = vld [vmem:[%s3392 + $0x60] sm:$0xff]
        %v3406 = vld [vmem:[%s3392 + $0x68] sm:$0xff]
        %v3407 = vld [vmem:[%s3392 + $0x70] sm:$0xff]
        %v3408 = vld [vmem:[%s3392 + $0x78] sm:$0xff]
        %v3409 = vld [vmem:[%s3392 + $0x80] sm:$0xff]
        %v3410 = vld [vmem:[%s3392 + $0x88] sm:$0xff]
        %v3411 = vld [vmem:[%s3392 + $0x90] sm:$0xff]
        %v3412 = vld [vmem:[%s3392 + $0x98] sm:$0xff]
        %v3413 = vld [vmem:[%s3392 + $0xa0] sm:$0xff]
        %v3414 = vld [vmem:[%s3392 + $0xa8] sm:$0xff]
        %v3415 = vld [vmem:[%s3392 + $0xb0] sm:$0xff]
        %v3416 = vld [vmem:[%s3392 + $0xb8] sm:$0xff]
        %v3417 = vld [vmem:[%s3392 + $0xc0] sm:$0xff]
        %v3418 = vld [vmem:[%s3392 + $0xc8] sm:$0xff]
        %v3419 = vld [vmem:[%s3392 + $0xd0] sm:$0xff]
        %v3420 = vld [vmem:[%s3392 + $0xd8] sm:$0xff]
        %v3421 = vld [vmem:[%s3392 + $0xe0] sm:$0xff]
        %v3422 = vld [vmem:[%s3392 + $0xe8] sm:$0xff]
        %v3423 = vld [vmem:[%s3392 + $0xf0] sm:$0xff]
        %v3424 = vld [vmem:[%s3392 + $0xf8] sm:$0xff]
        %v3425 = vld [vmem:[%s3392 + $0x100] sm:$0xff]
        %v3426 = vld [vmem:[%s3392 + $0x108] sm:$0xff]
        %v3427 = vld [vmem:[%s3392 + $0x110] sm:$0xff]
        %v3428 = vld [vmem:[%s3392 + $0x118] sm:$0xff]
        %v3429 = vld [vmem:[%s3392 + $0x120] sm:$0xff]
        %v3430 = vld [vmem:[%s3392 + $0x128] sm:$0xff]
        %v3431 = vld [vmem:[%s3392 + $0x130] sm:$0xff]
        %v3432 = vld [vmem:[%s3392 + $0x138] sm:$0xff]
        %v3433 = vld [vmem:[%s3392 + $0x140] sm:$0xff]
        %v3434 = vld [vmem:[%s3392 + $0x148] sm:$0xff]
        %v3435 = vld [vmem:[%s3392 + $0x150] sm:$0xff]
        %v3436 = vld [vmem:[%s3392 + $0x158] sm:$0xff]
        %v3437 = vld [vmem:[%s3392 + $0x160] sm:$0xff]
        %v3438 = vld [vmem:[%s3392 + $0x168] sm:$0xff]
        %v3439 = vld [vmem:[%s3392 + $0x170] sm:$0xff]
        %v3440 = vld [vmem:[%s3392 + $0x178] sm:$0xff]
        %v3441 = vld [vmem:[%s3392 + $0x180] sm:$0xff]
        %v3442 = vld [vmem:[%s3392 + $0x188] sm:$0xff]
        %v3443 = vld [vmem:[%s3392 + $0x190] sm:$0xff]
        %v3444 = vld [vmem:[%s3392 + $0x198] sm:$0xff]
        %v3445 = vld [vmem:[%s3392 + $0x1a0] sm:$0xff]
        %v3446 = vld [vmem:[%s3392 + $0x1a8] sm:$0xff]
        %v3447 = vld [vmem:[%s3392 + $0x1b0] sm:$0xff]
        %v3448 = vld [vmem:[%s3392 + $0x1b8] sm:$0xff]
        %v3449 = vld [vmem:[%s3392 + $0x1c0] sm:$0xff]
        %v3450 = vld [vmem:[%s3392 + $0x1c8] sm:$0xff]
        %v3451 = vld [vmem:[%s3392 + $0x1d0] sm:$0xff]
        %v3452 = vld [vmem:[%s3392 + $0x1d8] sm:$0xff]
        %v3453 = vld [vmem:[%s3392 + $0x1e0] sm:$0xff]
        %v3454 = vld [vmem:[%s3392 + $0x1e8] sm:$0xff]
        %v3455 = vld [vmem:[%s3392 + $0x1f0] sm:$0xff]
        %v3456 = vld [vmem:[%s3392 + $0x1f8] sm:$0xff]
        %v3457 = vrot.slane %v1513, 4
        %v3458 = vrot.slane %v1517, 3
        %v3459 = vsel %vm1589, %v3458, %v3457
        %v3460 = vrot.slane %v1514, 4
        %v3461 = vrot.slane %v1518, 3
        %v3462 = vsel %vm1589, %v3461, %v3460
        %3465 = vmatprep.subr.mxu0 %v3424
        %3466 = vmatpush1.msra.mxu0 %v3423
        %3467 = vmatprep.subr.mxu0 %v3422
        %3468 = vmatpush1.msra.mxu0 %v3421
        %3469 = vmatprep.subr.mxu0 %v3420
        %3470 = vmatpush1.msra.mxu0 %v3419
        %3471 = vmatprep.subr.mxu0 %v3418
        %3472 = vmatpush1.msra.mxu0 %v3417
        %3473 = vmatprep.subr.mxu0 %v3416
        %3474 = vmatpush1.msra.mxu0 %v3415
        %3475 = vmatprep.subr.mxu0 %v3414
        %3476 = vmatpush1.msra.mxu0 %v3413
        %3477 = vmatprep.subr.mxu0 %v3412
        %3478 = vmatpush1.msra.mxu0 %v3411
        %3479 = vmatprep.subr.mxu0 %v3410
        %3480 = vmatpush1.msra.mxu0 %v3409
        %3481 = vmatprep.subr.mxu0 %v3408
        %3482 = vmatpush1.msra.mxu0 %v3407
        %3483 = vmatprep.subr.mxu0 %v3406
        %3484 = vmatpush1.msra.mxu0 %v3405
        %3485 = vmatprep.subr.mxu0 %v3404
        %3486 = vmatpush1.msra.mxu0 %v3403
        %3487 = vmatprep.subr.mxu0 %v3402
        %3488 = vmatpush1.msra.mxu0 %v3401
        %3489 = vmatprep.subr.mxu0 %v3400
        %3490 = vmatpush1.msra.mxu0 %v3399
        %3491 = vmatprep.subr.mxu0 %v3398
        %3492 = vmatpush1.msra.mxu0 %v3397
        %3493 = vmatprep.subr.mxu0 %v3396
        %3494 = vmatpush1.msra.mxu0 %v3395
        %3495 = vmatprep.subr.mxu0 %v3394
        %3496 = vmatpush1.msra.mxu0 %v3393
        %3497 = vmatprep.subr.mxu0 %v3456
        %3498 = vmatpush2.msra.mxu0 %v3455
        %3499 = vmatprep.subr.mxu0 %v3454
        %3500 = vmatpush2.msra.mxu0 %v3453
        %3501 = vmatprep.subr.mxu0 %v3452
        %3502 = vmatpush2.msra.mxu0 %v3451
        %3503 = vmatprep.subr.mxu0 %v3450
        %3504 = vmatpush2.msra.mxu0 %v3449
        %3505 = vmatprep.subr.mxu0 %v3448
        %3506 = vmatpush2.msra.mxu0 %v3447
        %3507 = vmatprep.subr.mxu0 %v3446
        %3508 = vmatpush2.msra.mxu0 %v3445
        %3509 = vmatprep.subr.mxu0 %v3444
        %3510 = vmatpush2.msra.mxu0 %v3443
        %3511 = vmatprep.subr.mxu0 %v3442
        %3512 = vmatpush2.msra.mxu0 %v3441
        %3513 = vmatprep.subr.mxu0 %v3440
        %3514 = vmatpush2.msra.mxu0 %v3439
        %3515 = vmatprep.subr.mxu0 %v3438
        %3516 = vmatpush2.msra.mxu0 %v3437
        %3517 = vmatprep.subr.mxu0 %v3436
        %3518 = vmatpush2.msra.mxu0 %v3435
        %3519 = vmatprep.subr.mxu0 %v3434
        %3520 = vmatpush2.msra.mxu0 %v3433
        %3521 = vmatprep.subr.mxu0 %v3432
        %3522 = vmatpush2.msra.mxu0 %v3431
        %3523 = vmatprep.subr.mxu0 %v3430
        %3524 = vmatpush2.msra.mxu0 %v3429
        %3525 = vmatprep.subr.mxu0 %v3428
        %3526 = vmatpush2.msra.mxu0 %v3427
        %3527 = vmatprep.subr.mxu0 %v3426
        %3528 = vmatpush2.msra.mxu0 %v3425
        %3529 = vmatprep.mubr.f32.mxu0 %v3462
        %3530 = vmatmul.mubr.f32.gmra.mxu0 %v3459
        %v3531 = vpop.f32.mrf.mxu0
        %v3532 = vadd.f32 0.0, %v3531
        %v3533 = vpop.f32.mrf.mxu0
        %v3534 = vadd.f32 0.0, %v3533
        %3535 = vdwg.mxu0
        %v3538 = vcombine.low %v3532, %v3534
        %v3540 = vunpack.c.l.s4 1983009808
        %v3541 = vunpack.c.0.s8 %v3540
        %v3542 = vlaneseq
        %v3543 = vshrl.u32 %v3542, 7
        %v3544 = vsub.s32 %v3541, %v3543
        %v3545 = vrot.slane %v3538, %v3544
        %v3547 = vadd.f32 %v3391, %v3545
        %s3548 = scalar_lea.vmem %s251, 6656 [#allocation4]
        %v3549 = vld [vmem:[%s3548] sm:$0xff]
        %v3550 = vld [vmem:[%s3548 + $0x8] sm:$0xff]
        %v3551 = vld [vmem:[%s3548 + $0x10] sm:$0xff]
        %v3552 = vld [vmem:[%s3548 + $0x18] sm:$0xff]
        %v3553 = vld [vmem:[%s3548 + $0x20] sm:$0xff]
        %v3554 = vld [vmem:[%s3548 + $0x28] sm:$0xff]
        %v3555 = vld [vmem:[%s3548 + $0x30] sm:$0xff]
        %v3556 = vld [vmem:[%s3548 + $0x38] sm:$0xff]
        %v3557 = vld [vmem:[%s3548 + $0x40] sm:$0xff]
        %v3558 = vld [vmem:[%s3548 + $0x48] sm:$0xff]
        %v3559 = vld [vmem:[%s3548 + $0x50] sm:$0xff]
        %v3560 = vld [vmem:[%s3548 + $0x58] sm:$0xff]
        %v3561 = vld [vmem:[%s3548 + $0x60] sm:$0xff]
        %v3562 = vld [vmem:[%s3548 + $0x68] sm:$0xff]
        %v3563 = vld [vmem:[%s3548 + $0x70] sm:$0xff]
        %v3564 = vld [vmem:[%s3548 + $0x78] sm:$0xff]
        %v3565 = vld [vmem:[%s3548 + $0x80] sm:$0xff]
        %v3566 = vld [vmem:[%s3548 + $0x88] sm:$0xff]
        %v3567 = vld [vmem:[%s3548 + $0x90] sm:$0xff]
        %v3568 = vld [vmem:[%s3548 + $0x98] sm:$0xff]
        %v3569 = vld [vmem:[%s3548 + $0xa0] sm:$0xff]
        %v3570 = vld [vmem:[%s3548 + $0xa8] sm:$0xff]
        %v3571 = vld [vmem:[%s3548 + $0xb0] sm:$0xff]
        %v3572 = vld [vmem:[%s3548 + $0xb8] sm:$0xff]
        %v3573 = vld [vmem:[%s3548 + $0xc0] sm:$0xff]
        %v3574 = vld [vmem:[%s3548 + $0xc8] sm:$0xff]
        %v3575 = vld [vmem:[%s3548 + $0xd0] sm:$0xff]
        %v3576 = vld [vmem:[%s3548 + $0xd8] sm:$0xff]
        %v3577 = vld [vmem:[%s3548 + $0xe0] sm:$0xff]
        %v3578 = vld [vmem:[%s3548 + $0xe8] sm:$0xff]
        %v3579 = vld [vmem:[%s3548 + $0xf0] sm:$0xff]
        %v3580 = vld [vmem:[%s3548 + $0xf8] sm:$0xff]
        %v3581 = vld [vmem:[%s3548 + $0x100] sm:$0xff]
        %v3582 = vld [vmem:[%s3548 + $0x108] sm:$0xff]
        %v3583 = vld [vmem:[%s3548 + $0x110] sm:$0xff]
        %v3584 = vld [vmem:[%s3548 + $0x118] sm:$0xff]
        %v3585 = vld [vmem:[%s3548 + $0x120] sm:$0xff]
        %v3586 = vld [vmem:[%s3548 + $0x128] sm:$0xff]
        %v3587 = vld [vmem:[%s3548 + $0x130] sm:$0xff]
        %v3588 = vld [vmem:[%s3548 + $0x138] sm:$0xff]
        %v3589 = vld [vmem:[%s3548 + $0x140] sm:$0xff]
        %v3590 = vld [vmem:[%s3548 + $0x148] sm:$0xff]
        %v3591 = vld [vmem:[%s3548 + $0x150] sm:$0xff]
        %v3592 = vld [vmem:[%s3548 + $0x158] sm:$0xff]
        %v3593 = vld [vmem:[%s3548 + $0x160] sm:$0xff]
        %v3594 = vld [vmem:[%s3548 + $0x168] sm:$0xff]
        %v3595 = vld [vmem:[%s3548 + $0x170] sm:$0xff]
        %v3596 = vld [vmem:[%s3548 + $0x178] sm:$0xff]
        %v3597 = vld [vmem:[%s3548 + $0x180] sm:$0xff]
        %v3598 = vld [vmem:[%s3548 + $0x188] sm:$0xff]
        %v3599 = vld [vmem:[%s3548 + $0x190] sm:$0xff]
        %v3600 = vld [vmem:[%s3548 + $0x198] sm:$0xff]
        %v3601 = vld [vmem:[%s3548 + $0x1a0] sm:$0xff]
        %v3602 = vld [vmem:[%s3548 + $0x1a8] sm:$0xff]
        %v3603 = vld [vmem:[%s3548 + $0x1b0] sm:$0xff]
        %v3604 = vld [vmem:[%s3548 + $0x1b8] sm:$0xff]
        %v3605 = vld [vmem:[%s3548 + $0x1c0] sm:$0xff]
        %v3606 = vld [vmem:[%s3548 + $0x1c8] sm:$0xff]
        %v3607 = vld [vmem:[%s3548 + $0x1d0] sm:$0xff]
        %v3608 = vld [vmem:[%s3548 + $0x1d8] sm:$0xff]
        %v3609 = vld [vmem:[%s3548 + $0x1e0] sm:$0xff]
        %v3610 = vld [vmem:[%s3548 + $0x1e8] sm:$0xff]
        %v3611 = vld [vmem:[%s3548 + $0x1f0] sm:$0xff]
        %v3612 = vld [vmem:[%s3548 + $0x1f8] sm:$0xff]
        %v3613 = vrot.slane %v1513, 5
        %v3614 = vrot.slane %v1517, 4
        %v3615 = vsel %vm1589, %v3614, %v3613
        %v3616 = vrot.slane %v1514, 5
        %v3617 = vrot.slane %v1518, 4
        %v3618 = vsel %vm1589, %v3617, %v3616
        %3621 = vmatprep.subr.mxu0 %v3580
        %3622 = vmatpush1.msra.mxu0 %v3579
        %3623 = vmatprep.subr.mxu0 %v3578
        %3624 = vmatpush1.msra.mxu0 %v3577
        %3625 = vmatprep.subr.mxu0 %v3576
        %3626 = vmatpush1.msra.mxu0 %v3575
        %3627 = vmatprep.subr.mxu0 %v3574
        %3628 = vmatpush1.msra.mxu0 %v3573
        %3629 = vmatprep.subr.mxu0 %v3572
        %3630 = vmatpush1.msra.mxu0 %v3571
        %3631 = vmatprep.subr.mxu0 %v3570
        %3632 = vmatpush1.msra.mxu0 %v3569
        %3633 = vmatprep.subr.mxu0 %v3568
        %3634 = vmatpush1.msra.mxu0 %v3567
        %3635 = vmatprep.subr.mxu0 %v3566
        %3636 = vmatpush1.msra.mxu0 %v3565
        %3637 = vmatprep.subr.mxu0 %v3564
        %3638 = vmatpush1.msra.mxu0 %v3563
        %3639 = vmatprep.subr.mxu0 %v3562
        %3640 = vmatpush1.msra.mxu0 %v3561
        %3641 = vmatprep.subr.mxu0 %v3560
        %3642 = vmatpush1.msra.mxu0 %v3559
        %3643 = vmatprep.subr.mxu0 %v3558
        %3644 = vmatpush1.msra.mxu0 %v3557
        %3645 = vmatprep.subr.mxu0 %v3556
        %3646 = vmatpush1.msra.mxu0 %v3555
        %3647 = vmatprep.subr.mxu0 %v3554
        %3648 = vmatpush1.msra.mxu0 %v3553
        %3649 = vmatprep.subr.mxu0 %v3552
        %3650 = vmatpush1.msra.mxu0 %v3551
        %3651 = vmatprep.subr.mxu0 %v3550
        %3652 = vmatpush1.msra.mxu0 %v3549
        %3653 = vmatprep.subr.mxu0 %v3612
        %3654 = vmatpush2.msra.mxu0 %v3611
        %3655 = vmatprep.subr.mxu0 %v3610
        %3656 = vmatpush2.msra.mxu0 %v3609
        %3657 = vmatprep.subr.mxu0 %v3608
        %3658 = vmatpush2.msra.mxu0 %v3607
        %3659 = vmatprep.subr.mxu0 %v3606
        %3660 = vmatpush2.msra.mxu0 %v3605
        %3661 = vmatprep.subr.mxu0 %v3604
        %3662 = vmatpush2.msra.mxu0 %v3603
        %3663 = vmatprep.subr.mxu0 %v3602
        %3664 = vmatpush2.msra.mxu0 %v3601
        %3665 = vmatprep.subr.mxu0 %v3600
        %3666 = vmatpush2.msra.mxu0 %v3599
        %3667 = vmatprep.subr.mxu0 %v3598
        %3668 = vmatpush2.msra.mxu0 %v3597
        %3669 = vmatprep.subr.mxu0 %v3596
        %3670 = vmatpush2.msra.mxu0 %v3595
        %3671 = vmatprep.subr.mxu0 %v3594
        %3672 = vmatpush2.msra.mxu0 %v3593
        %3673 = vmatprep.subr.mxu0 %v3592
        %3674 = vmatpush2.msra.mxu0 %v3591
        %3675 = vmatprep.subr.mxu0 %v3590
        %3676 = vmatpush2.msra.mxu0 %v3589
        %3677 = vmatprep.subr.mxu0 %v3588
        %3678 = vmatpush2.msra.mxu0 %v3587
        %3679 = vmatprep.subr.mxu0 %v3586
        %3680 = vmatpush2.msra.mxu0 %v3585
        %3681 = vmatprep.subr.mxu0 %v3584
        %3682 = vmatpush2.msra.mxu0 %v3583
        %3683 = vmatprep.subr.mxu0 %v3582
        %3684 = vmatpush2.msra.mxu0 %v3581
        %3685 = vmatprep.mubr.f32.mxu0 %v3618
        %3686 = vmatmul.mubr.f32.gmra.mxu0 %v3615
        %v3687 = vpop.f32.mrf.mxu0
        %v3688 = vadd.f32 0.0, %v3687
        %v3689 = vpop.f32.mrf.mxu0
        %v3690 = vadd.f32 0.0, %v3689
        %3691 = vdwg.mxu0
        %v3694 = vcombine.low %v3688, %v3690
        %v3696 = vunpack.c.l.s4 1983009808
        %v3697 = vunpack.c.0.s8 %v3696
        %v3698 = vlaneseq
        %v3699 = vshrl.u32 %v3698, 7
        %v3700 = vsub.s32 %v3697, %v3699
        %v3701 = vrot.slane %v3694, %v3700
        %v3703 = vadd.f32 %v3547, %v3701
        %s3704 = scalar_lea.vmem %s251, 7168 [#allocation4]
        %v3705 = vld [vmem:[%s3704] sm:$0xff]
        %v3706 = vld [vmem:[%s3704 + $0x8] sm:$0xff]
        %v3707 = vld [vmem:[%s3704 + $0x10] sm:$0xff]
        %v3708 = vld [vmem:[%s3704 + $0x18] sm:$0xff]
        %v3709 = vld [vmem:[%s3704 + $0x20] sm:$0xff]
        %v3710 = vld [vmem:[%s3704 + $0x28] sm:$0xff]
        %v3711 = vld [vmem:[%s3704 + $0x30] sm:$0xff]
        %v3712 = vld [vmem:[%s3704 + $0x38] sm:$0xff]
        %v3713 = vld [vmem:[%s3704 + $0x40] sm:$0xff]
        %v3714 = vld [vmem:[%s3704 + $0x48] sm:$0xff]
        %v3715 = vld [vmem:[%s3704 + $0x50] sm:$0xff]
        %v3716 = vld [vmem:[%s3704 + $0x58] sm:$0xff]
        %v3717 = vld [vmem:[%s3704 + $0x60] sm:$0xff]
        %v3718 = vld [vmem:[%s3704 + $0x68] sm:$0xff]
        %v3719 = vld [vmem:[%s3704 + $0x70] sm:$0xff]
        %v3720 = vld [vmem:[%s3704 + $0x78] sm:$0xff]
        %v3721 = vld [vmem:[%s3704 + $0x80] sm:$0xff]
        %v3722 = vld [vmem:[%s3704 + $0x88] sm:$0xff]
        %v3723 = vld [vmem:[%s3704 + $0x90] sm:$0xff]
        %v3724 = vld [vmem:[%s3704 + $0x98] sm:$0xff]
        %v3725 = vld [vmem:[%s3704 + $0xa0] sm:$0xff]
        %v3726 = vld [vmem:[%s3704 + $0xa8] sm:$0xff]
        %v3727 = vld [vmem:[%s3704 + $0xb0] sm:$0xff]
        %v3728 = vld [vmem:[%s3704 + $0xb8] sm:$0xff]
        %v3729 = vld [vmem:[%s3704 + $0xc0] sm:$0xff]
        %v3730 = vld [vmem:[%s3704 + $0xc8] sm:$0xff]
        %v3731 = vld [vmem:[%s3704 + $0xd0] sm:$0xff]
        %v3732 = vld [vmem:[%s3704 + $0xd8] sm:$0xff]
        %v3733 = vld [vmem:[%s3704 + $0xe0] sm:$0xff]
        %v3734 = vld [vmem:[%s3704 + $0xe8] sm:$0xff]
        %v3735 = vld [vmem:[%s3704 + $0xf0] sm:$0xff]
        %v3736 = vld [vmem:[%s3704 + $0xf8] sm:$0xff]
        %v3737 = vld [vmem:[%s3704 + $0x100] sm:$0xff]
        %v3738 = vld [vmem:[%s3704 + $0x108] sm:$0xff]
        %v3739 = vld [vmem:[%s3704 + $0x110] sm:$0xff]
        %v3740 = vld [vmem:[%s3704 + $0x118] sm:$0xff]
        %v3741 = vld [vmem:[%s3704 + $0x120] sm:$0xff]
        %v3742 = vld [vmem:[%s3704 + $0x128] sm:$0xff]
        %v3743 = vld [vmem:[%s3704 + $0x130] sm:$0xff]
        %v3744 = vld [vmem:[%s3704 + $0x138] sm:$0xff]
        %v3745 = vld [vmem:[%s3704 + $0x140] sm:$0xff]
        %v3746 = vld [vmem:[%s3704 + $0x148] sm:$0xff]
        %v3747 = vld [vmem:[%s3704 + $0x150] sm:$0xff]
        %v3748 = vld [vmem:[%s3704 + $0x158] sm:$0xff]
        %v3749 = vld [vmem:[%s3704 + $0x160] sm:$0xff]
        %v3750 = vld [vmem:[%s3704 + $0x168] sm:$0xff]
        %v3751 = vld [vmem:[%s3704 + $0x170] sm:$0xff]
        %v3752 = vld [vmem:[%s3704 + $0x178] sm:$0xff]
        %v3753 = vld [vmem:[%s3704 + $0x180] sm:$0xff]
        %v3754 = vld [vmem:[%s3704 + $0x188] sm:$0xff]
        %v3755 = vld [vmem:[%s3704 + $0x190] sm:$0xff]
        %v3756 = vld [vmem:[%s3704 + $0x198] sm:$0xff]
        %v3757 = vld [vmem:[%s3704 + $0x1a0] sm:$0xff]
        %v3758 = vld [vmem:[%s3704 + $0x1a8] sm:$0xff]
        %v3759 = vld [vmem:[%s3704 + $0x1b0] sm:$0xff]
        %v3760 = vld [vmem:[%s3704 + $0x1b8] sm:$0xff]
        %v3761 = vld [vmem:[%s3704 + $0x1c0] sm:$0xff]
        %v3762 = vld [vmem:[%s3704 + $0x1c8] sm:$0xff]
        %v3763 = vld [vmem:[%s3704 + $0x1d0] sm:$0xff]
        %v3764 = vld [vmem:[%s3704 + $0x1d8] sm:$0xff]
        %v3765 = vld [vmem:[%s3704 + $0x1e0] sm:$0xff]
        %v3766 = vld [vmem:[%s3704 + $0x1e8] sm:$0xff]
        %v3767 = vld [vmem:[%s3704 + $0x1f0] sm:$0xff]
        %v3768 = vld [vmem:[%s3704 + $0x1f8] sm:$0xff]
        %v3769 = vrot.slane %v1513, 6
        %v3770 = vrot.slane %v1517, 5
        %v3771 = vsel %vm1589, %v3770, %v3769
        %v3772 = vrot.slane %v1514, 6
        %v3773 = vrot.slane %v1518, 5
        %v3774 = vsel %vm1589, %v3773, %v3772
        %3777 = vmatprep.subr.mxu0 %v3736
        %3778 = vmatpush1.msra.mxu0 %v3735
        %3779 = vmatprep.subr.mxu0 %v3734
        %3780 = vmatpush1.msra.mxu0 %v3733
        %3781 = vmatprep.subr.mxu0 %v3732
        %3782 = vmatpush1.msra.mxu0 %v3731
        %3783 = vmatprep.subr.mxu0 %v3730
        %3784 = vmatpush1.msra.mxu0 %v3729
        %3785 = vmatprep.subr.mxu0 %v3728
        %3786 = vmatpush1.msra.mxu0 %v3727
        %3787 = vmatprep.subr.mxu0 %v3726
        %3788 = vmatpush1.msra.mxu0 %v3725
        %3789 = vmatprep.subr.mxu0 %v3724
        %3790 = vmatpush1.msra.mxu0 %v3723
        %3791 = vmatprep.subr.mxu0 %v3722
        %3792 = vmatpush1.msra.mxu0 %v3721
        %3793 = vmatprep.subr.mxu0 %v3720
        %3794 = vmatpush1.msra.mxu0 %v3719
        %3795 = vmatprep.subr.mxu0 %v3718
        %3796 = vmatpush1.msra.mxu0 %v3717
        %3797 = vmatprep.subr.mxu0 %v3716
        %3798 = vmatpush1.msra.mxu0 %v3715
        %3799 = vmatprep.subr.mxu0 %v3714
        %3800 = vmatpush1.msra.mxu0 %v3713
        %3801 = vmatprep.subr.mxu0 %v3712
        %3802 = vmatpush1.msra.mxu0 %v3711
        %3803 = vmatprep.subr.mxu0 %v3710
        %3804 = vmatpush1.msra.mxu0 %v3709
        %3805 = vmatprep.subr.mxu0 %v3708
        %3806 = vmatpush1.msra.mxu0 %v3707
        %3807 = vmatprep.subr.mxu0 %v3706
        %3808 = vmatpush1.msra.mxu0 %v3705
        %3809 = vmatprep.subr.mxu0 %v3768
        %3810 = vmatpush2.msra.mxu0 %v3767
        %3811 = vmatprep.subr.mxu0 %v3766
        %3812 = vmatpush2.msra.mxu0 %v3765
        %3813 = vmatprep.subr.mxu0 %v3764
        %3814 = vmatpush2.msra.mxu0 %v3763
        %3815 = vmatprep.subr.mxu0 %v3762
        %3816 = vmatpush2.msra.mxu0 %v3761
        %3817 = vmatprep.subr.mxu0 %v3760
        %3818 = vmatpush2.msra.mxu0 %v3759
        %3819 = vmatprep.subr.mxu0 %v3758
        %3820 = vmatpush2.msra.mxu0 %v3757
        %3821 = vmatprep.subr.mxu0 %v3756
        %3822 = vmatpush2.msra.mxu0 %v3755
        %3823 = vmatprep.subr.mxu0 %v3754
        %3824 = vmatpush2.msra.mxu0 %v3753
        %3825 = vmatprep.subr.mxu0 %v3752
        %3826 = vmatpush2.msra.mxu0 %v3751
        %3827 = vmatprep.subr.mxu0 %v3750
        %3828 = vmatpush2.msra.mxu0 %v3749
        %3829 = vmatprep.subr.mxu0 %v3748
        %3830 = vmatpush2.msra.mxu0 %v3747
        %3831 = vmatprep.subr.mxu0 %v3746
        %3832 = vmatpush2.msra.mxu0 %v3745
        %3833 = vmatprep.subr.mxu0 %v3744
        %3834 = vmatpush2.msra.mxu0 %v3743
        %3835 = vmatprep.subr.mxu0 %v3742
        %3836 = vmatpush2.msra.mxu0 %v3741
        %3837 = vmatprep.subr.mxu0 %v3740
        %3838 = vmatpush2.msra.mxu0 %v3739
        %3839 = vmatprep.subr.mxu0 %v3738
        %3840 = vmatpush2.msra.mxu0 %v3737
        %3841 = vmatprep.mubr.f32.mxu0 %v3774
        %3842 = vmatmul.mubr.f32.gmra.mxu0 %v3771
        %v3843 = vpop.f32.mrf.mxu0
        %v3844 = vadd.f32 0.0, %v3843
        %v3845 = vpop.f32.mrf.mxu0
        %v3846 = vadd.f32 0.0, %v3845
        %3847 = vdwg.mxu0
        %v3850 = vcombine.low %v3844, %v3846
        %v3852 = vunpack.c.l.s4 1983009808
        %v3853 = vunpack.c.0.s8 %v3852
        %v3854 = vlaneseq
        %v3855 = vshrl.u32 %v3854, 7
        %v3856 = vsub.s32 %v3853, %v3855
        %v3857 = vrot.slane %v3850, %v3856
        %v3859 = vadd.f32 %v3703, %v3857
        %s3860 = scalar_lea.vmem %s251, 7680 [#allocation4]
        %v3861 = vld [vmem:[%s3860] sm:$0xff]
        %v3862 = vld [vmem:[%s3860 + $0x8] sm:$0xff]
        %v3863 = vld [vmem:[%s3860 + $0x10] sm:$0xff]
        %v3864 = vld [vmem:[%s3860 + $0x18] sm:$0xff]
        %v3865 = vld [vmem:[%s3860 + $0x20] sm:$0xff]
        %v3866 = vld [vmem:[%s3860 + $0x28] sm:$0xff]
        %v3867 = vld [vmem:[%s3860 + $0x30] sm:$0xff]
        %v3868 = vld [vmem:[%s3860 + $0x38] sm:$0xff]
        %v3869 = vld [vmem:[%s3860 + $0x40] sm:$0xff]
        %v3870 = vld [vmem:[%s3860 + $0x48] sm:$0xff]
        %v3871 = vld [vmem:[%s3860 + $0x50] sm:$0xff]
        %v3872 = vld [vmem:[%s3860 + $0x58] sm:$0xff]
        %v3873 = vld [vmem:[%s3860 + $0x60] sm:$0xff]
        %v3874 = vld [vmem:[%s3860 + $0x68] sm:$0xff]
        %v3875 = vld [vmem:[%s3860 + $0x70] sm:$0xff]
        %v3876 = vld [vmem:[%s3860 + $0x78] sm:$0xff]
        %v3877 = vld [vmem:[%s3860 + $0x80] sm:$0xff]
        %v3878 = vld [vmem:[%s3860 + $0x88] sm:$0xff]
        %v3879 = vld [vmem:[%s3860 + $0x90] sm:$0xff]
        %v3880 = vld [vmem:[%s3860 + $0x98] sm:$0xff]
        %v3881 = vld [vmem:[%s3860 + $0xa0] sm:$0xff]
        %v3882 = vld [vmem:[%s3860 + $0xa8] sm:$0xff]
        %v3883 = vld [vmem:[%s3860 + $0xb0] sm:$0xff]
        %v3884 = vld [vmem:[%s3860 + $0xb8] sm:$0xff]
        %v3885 = vld [vmem:[%s3860 + $0xc0] sm:$0xff]
        %v3886 = vld [vmem:[%s3860 + $0xc8] sm:$0xff]
        %v3887 = vld [vmem:[%s3860 + $0xd0] sm:$0xff]
        %v3888 = vld [vmem:[%s3860 + $0xd8] sm:$0xff]
        %v3889 = vld [vmem:[%s3860 + $0xe0] sm:$0xff]
        %v3890 = vld [vmem:[%s3860 + $0xe8] sm:$0xff]
        %v3891 = vld [vmem:[%s3860 + $0xf0] sm:$0xff]
        %v3892 = vld [vmem:[%s3860 + $0xf8] sm:$0xff]
        %v3893 = vld [vmem:[%s3860 + $0x100] sm:$0xff]
        %v3894 = vld [vmem:[%s3860 + $0x108] sm:$0xff]
        %v3895 = vld [vmem:[%s3860 + $0x110] sm:$0xff]
        %v3896 = vld [vmem:[%s3860 + $0x118] sm:$0xff]
        %v3897 = vld [vmem:[%s3860 + $0x120] sm:$0xff]
        %v3898 = vld [vmem:[%s3860 + $0x128] sm:$0xff]
        %v3899 = vld [vmem:[%s3860 + $0x130] sm:$0xff]
        %v3900 = vld [vmem:[%s3860 + $0x138] sm:$0xff]
        %v3901 = vld [vmem:[%s3860 + $0x140] sm:$0xff]
        %v3902 = vld [vmem:[%s3860 + $0x148] sm:$0xff]
        %v3903 = vld [vmem:[%s3860 + $0x150] sm:$0xff]
        %v3904 = vld [vmem:[%s3860 + $0x158] sm:$0xff]
        %v3905 = vld [vmem:[%s3860 + $0x160] sm:$0xff]
        %v3906 = vld [vmem:[%s3860 + $0x168] sm:$0xff]
        %v3907 = vld [vmem:[%s3860 + $0x170] sm:$0xff]
        %v3908 = vld [vmem:[%s3860 + $0x178] sm:$0xff]
        %v3909 = vld [vmem:[%s3860 + $0x180] sm:$0xff]
        %v3910 = vld [vmem:[%s3860 + $0x188] sm:$0xff]
        %v3911 = vld [vmem:[%s3860 + $0x190] sm:$0xff]
        %v3912 = vld [vmem:[%s3860 + $0x198] sm:$0xff]
        %v3913 = vld [vmem:[%s3860 + $0x1a0] sm:$0xff]
        %v3914 = vld [vmem:[%s3860 + $0x1a8] sm:$0xff]
        %v3915 = vld [vmem:[%s3860 + $0x1b0] sm:$0xff]
        %v3916 = vld [vmem:[%s3860 + $0x1b8] sm:$0xff]
        %v3917 = vld [vmem:[%s3860 + $0x1c0] sm:$0xff]
        %v3918 = vld [vmem:[%s3860 + $0x1c8] sm:$0xff]
        %v3919 = vld [vmem:[%s3860 + $0x1d0] sm:$0xff]
        %v3920 = vld [vmem:[%s3860 + $0x1d8] sm:$0xff]
        %v3921 = vld [vmem:[%s3860 + $0x1e0] sm:$0xff]
        %v3922 = vld [vmem:[%s3860 + $0x1e8] sm:$0xff]
        %v3923 = vld [vmem:[%s3860 + $0x1f0] sm:$0xff]
        %v3924 = vld [vmem:[%s3860 + $0x1f8] sm:$0xff]
        %v3925 = vrot.slane %v1513, 7
        %v3926 = vrot.slane %v1517, 6
        %v3927 = vsel %vm1589, %v3926, %v3925
        %v3928 = vrot.slane %v1514, 7
        %v3929 = vrot.slane %v1518, 6
        %v3930 = vsel %vm1589, %v3929, %v3928
        %3933 = vmatprep.subr.mxu0 %v3892
        %3934 = vmatpush1.msra.mxu0 %v3891
        %3935 = vmatprep.subr.mxu0 %v3890
        %3936 = vmatpush1.msra.mxu0 %v3889
        %3937 = vmatprep.subr.mxu0 %v3888
        %3938 = vmatpush1.msra.mxu0 %v3887
        %3939 = vmatprep.subr.mxu0 %v3886
        %3940 = vmatpush1.msra.mxu0 %v3885
        %3941 = vmatprep.subr.mxu0 %v3884
        %3942 = vmatpush1.msra.mxu0 %v3883
        %3943 = vmatprep.subr.mxu0 %v3882
        %3944 = vmatpush1.msra.mxu0 %v3881
        %3945 = vmatprep.subr.mxu0 %v3880
        %3946 = vmatpush1.msra.mxu0 %v3879
        %3947 = vmatprep.subr.mxu0 %v3878
        %3948 = vmatpush1.msra.mxu0 %v3877
        %3949 = vmatprep.subr.mxu0 %v3876
        %3950 = vmatpush1.msra.mxu0 %v3875
        %3951 = vmatprep.subr.mxu0 %v3874
        %3952 = vmatpush1.msra.mxu0 %v3873
        %3953 = vmatprep.subr.mxu0 %v3872
        %3954 = vmatpush1.msra.mxu0 %v3871
        %3955 = vmatprep.subr.mxu0 %v3870
        %3956 = vmatpush1.msra.mxu0 %v3869
        %3957 = vmatprep.subr.mxu0 %v3868
        %3958 = vmatpush1.msra.mxu0 %v3867
        %3959 = vmatprep.subr.mxu0 %v3866
        %3960 = vmatpush1.msra.mxu0 %v3865
        %3961 = vmatprep.subr.mxu0 %v3864
        %3962 = vmatpush1.msra.mxu0 %v3863
        %3963 = vmatprep.subr.mxu0 %v3862
        %3964 = vmatpush1.msra.mxu0 %v3861
        %3965 = vmatprep.subr.mxu0 %v3924
        %3966 = vmatpush2.msra.mxu0 %v3923
        %3967 = vmatprep.subr.mxu0 %v3922
        %3968 = vmatpush2.msra.mxu0 %v3921
        %3969 = vmatprep.subr.mxu0 %v3920
        %3970 = vmatpush2.msra.mxu0 %v3919
        %3971 = vmatprep.subr.mxu0 %v3918
        %3972 = vmatpush2.msra.mxu0 %v3917
        %3973 = vmatprep.subr.mxu0 %v3916
        %3974 = vmatpush2.msra.mxu0 %v3915
        %3975 = vmatprep.subr.mxu0 %v3914
        %3976 = vmatpush2.msra.mxu0 %v3913
        %3977 = vmatprep.subr.mxu0 %v3912
        %3978 = vmatpush2.msra.mxu0 %v3911
        %3979 = vmatprep.subr.mxu0 %v3910
        %3980 = vmatpush2.msra.mxu0 %v3909
        %3981 = vmatprep.subr.mxu0 %v3908
        %3982 = vmatpush2.msra.mxu0 %v3907
        %3983 = vmatprep.subr.mxu0 %v3906
        %3984 = vmatpush2.msra.mxu0 %v3905
        %3985 = vmatprep.subr.mxu0 %v3904
        %3986 = vmatpush2.msra.mxu0 %v3903
        %3987 = vmatprep.subr.mxu0 %v3902
        %3988 = vmatpush2.msra.mxu0 %v3901
        %3989 = vmatprep.subr.mxu0 %v3900
        %3990 = vmatpush2.msra.mxu0 %v3899
        %3991 = vmatprep.subr.mxu0 %v3898
        %3992 = vmatpush2.msra.mxu0 %v3897
        %3993 = vmatprep.subr.mxu0 %v3896
        %3994 = vmatpush2.msra.mxu0 %v3895
        %3995 = vmatprep.subr.mxu0 %v3894
        %3996 = vmatpush2.msra.mxu0 %v3893
        %3997 = vmatprep.mubr.f32.mxu0 %v3930
        %3998 = vmatmul.mubr.f32.gmra.mxu0 %v3927
        %v3999 = vpop.f32.mrf.mxu0
        %v4000 = vadd.f32 0.0, %v3999
        %v4001 = vpop.f32.mrf.mxu0
        %v4002 = vadd.f32 0.0, %v4001
        %4003 = vdwg.mxu0
        %v4006 = vcombine.low %v4000, %v4002
        %v4008 = vunpack.c.l.s4 1983009808
        %v4009 = vunpack.c.0.s8 %v4008
        %v4010 = vlaneseq
        %v4011 = vshrl.u32 %v4010, 7
        %v4012 = vsub.s32 %v4009, %v4011
        %v4013 = vrot.slane %v4006, %v4012
        %v4015 = vadd.f32 %v3859, %v4013
        %4016 = vst [vmem:[#allocation3] sm:$0xf] %v4015
        %p4017 = scmp.eq.s32.totalorder %s24, 3
        // Predicated region
        $region49: #{cnn_forward.1} parent=39 // pred_check
          %p4018 = pneg %p4017
        $region50: #{cnn_forward.1} parent=39 // pred_check_branch
          %4020 = sbr.rel (%p4018) target = $region52
        $region51: #{cnn_forward.1} parent=39 // pred_region
          %v4021 = vld [vmem:[#allocation3] sm:$0xf]
          %v4022 = vld [vmem:[%s291] sm:$0x3]
          %v4024 = vlaneseq
          %v4025 = vshrl.u32 %v4024, 7
          %v4026 = vsub.s32 0, %v4025
          %v4027 = vrot.slane %v4022, %v4026
          %v4028 = vlaneseq
          %v4029 = vshrl.u32 %v4028, 7
          %v4030 = vsub.s32 1, %v4029
          %v4031 = vrot.slane %v4022, %v4030
          %v4032 = vcombine.low %v4027, %v4031
          %v4034 = vunpack.c.l.s4 1983009808
          %v4035 = vunpack.c.0.s8 %v4034
          %v4036 = vlaneseq
          %v4037 = vshrl.u32 %v4036, 7
          %v4038 = vsub.s32 %v4035, %v4037
          %v4039 = vrot.slane %v4032, %v4038
          %v4041 = vadd.f32 %v4021, %v4039
          %vm4042 = vcmp.gt.f32.partialorder %v4041, 0.0
          %v4043 = vmul.f32 %v4041, 0.01
          %v4044 = vsel %vm4042, %v4041, %v4043
          %v4045 = vld [vmem:[%s297] sm:$0xff]
          %v4046 = vld [vmem:[%s297 + $0x8] sm:$0xff]
          %v4047 = vld [vmem:[%s297 + $0x10] sm:$0xff]
          %v4048 = vld [vmem:[%s297 + $0x18] sm:$0xff]
          %v4049 = vld [vmem:[%s297 + $0x20] sm:$0xff]
          %v4050 = vld [vmem:[%s297 + $0x28] sm:$0xff]
          %v4051 = vld [vmem:[%s297 + $0x30] sm:$0xff]
          %v4052 = vld [vmem:[%s297 + $0x38] sm:$0xff]
          %v4053 = vld [vmem:[%s297 + $0x40] sm:$0xff]
          %v4054 = vld [vmem:[%s297 + $0x48] sm:$0xff]
          %v4055 = vld [vmem:[%s297 + $0x50] sm:$0xff]
          %v4056 = vld [vmem:[%s297 + $0x58] sm:$0xff]
          %v4057 = vld [vmem:[%s297 + $0x60] sm:$0xff]
          %v4058 = vld [vmem:[%s297 + $0x68] sm:$0xff]
          %v4059 = vld [vmem:[%s297 + $0x70] sm:$0xff]
          %v4060 = vld [vmem:[%s297 + $0x78] sm:$0xff]
          %v4061 = vld [vmem:[%s297 + $0x80] sm:$0xff]
          %v4062 = vld [vmem:[%s297 + $0x88] sm:$0xff]
          %v4063 = vld [vmem:[%s297 + $0x90] sm:$0xff]
          %v4064 = vld [vmem:[%s297 + $0x98] sm:$0xff]
          %v4065 = vld [vmem:[%s297 + $0xa0] sm:$0xff]
          %v4066 = vld [vmem:[%s297 + $0xa8] sm:$0xff]
          %v4067 = vld [vmem:[%s297 + $0xb0] sm:$0xff]
          %v4068 = vld [vmem:[%s297 + $0xb8] sm:$0xff]
          %v4069 = vld [vmem:[%s297 + $0xc0] sm:$0xff]
          %v4070 = vld [vmem:[%s297 + $0xc8] sm:$0xff]
          %v4071 = vld [vmem:[%s297 + $0xd0] sm:$0xff]
          %v4072 = vld [vmem:[%s297 + $0xd8] sm:$0xff]
          %v4073 = vld [vmem:[%s297 + $0xe0] sm:$0xff]
          %v4074 = vld [vmem:[%s297 + $0xe8] sm:$0xff]
          %v4075 = vld [vmem:[%s297 + $0xf0] sm:$0xff]
          %v4076 = vld [vmem:[%s297 + $0xf8] sm:$0xff]
          %v4079 = vunpack.c.l.s4 1983009808
          %v4080 = vunpack.c.0.s8 %v4079
          %v4081 = vlaneseq
          %v4082 = vshrl.u32 %v4081, 7
          %v4083 = vsub.s32 %v4080, %v4082
          %v4084 = vrot.slane %v4044, %v4083
          %v4085 = vcombine.high %v4084, %v4084
          %4088 = vmatprep.subr.mxu0 0.0
          %4089 = vmatpush1.msra.mxu0 %v4060
          %4090 = vmatprep.subr.mxu0 0.0
          %4091 = vmatpush1.msra.mxu0 %v4059
          %4092 = vmatprep.subr.mxu0 0.0
          %4093 = vmatpush1.msra.mxu0 %v4058
          %4094 = vmatprep.subr.mxu0 0.0
          %4095 = vmatpush1.msra.mxu0 %v4057
          %4096 = vmatprep.subr.mxu0 0.0
          %4097 = vmatpush1.msra.mxu0 %v4056
          %4098 = vmatprep.subr.mxu0 0.0
          %4099 = vmatpush1.msra.mxu0 %v4055
          %4100 = vmatprep.subr.mxu0 0.0
          %4101 = vmatpush1.msra.mxu0 %v4054
          %4102 = vmatprep.subr.mxu0 0.0
          %4103 = vmatpush1.msra.mxu0 %v4053
          %4104 = vmatprep.subr.mxu0 0.0
          %4105 = vmatpush1.msra.mxu0 %v4052
          %4106 = vmatprep.subr.mxu0 0.0
          %4107 = vmatpush1.msra.mxu0 %v4051
          %4108 = vmatprep.subr.mxu0 0.0
          %4109 = vmatpush1.msra.mxu0 %v4050
          %4110 = vmatprep.subr.mxu0 0.0
          %4111 = vmatpush1.msra.mxu0 %v4049
          %4112 = vmatprep.subr.mxu0 0.0
          %4113 = vmatpush1.msra.mxu0 %v4048
          %4114 = vmatprep.subr.mxu0 0.0
          %4115 = vmatpush1.msra.mxu0 %v4047
          %4116 = vmatprep.subr.mxu0 0.0
          %4117 = vmatpush1.msra.mxu0 %v4046
          %4118 = vmatprep.subr.mxu0 0.0
          %4119 = vmatpush1.msra.mxu0 %v4045
          %4120 = vmatprep.subr.mxu0 0.0
          %4121 = vmatpush2.msra.mxu0 %v4076
          %4122 = vmatprep.subr.mxu0 0.0
          %4123 = vmatpush2.msra.mxu0 %v4075
          %4124 = vmatprep.subr.mxu0 0.0
          %4125 = vmatpush2.msra.mxu0 %v4074
          %4126 = vmatprep.subr.mxu0 0.0
          %4127 = vmatpush2.msra.mxu0 %v4073
          %4128 = vmatprep.subr.mxu0 0.0
          %4129 = vmatpush2.msra.mxu0 %v4072
          %4130 = vmatprep.subr.mxu0 0.0
          %4131 = vmatpush2.msra.mxu0 %v4071
          %4132 = vmatprep.subr.mxu0 0.0
          %4133 = vmatpush2.msra.mxu0 %v4070
          %4134 = vmatprep.subr.mxu0 0.0
          %4135 = vmatpush2.msra.mxu0 %v4069
          %4136 = vmatprep.subr.mxu0 0.0
          %4137 = vmatpush2.msra.mxu0 %v4068
          %4138 = vmatprep.subr.mxu0 0.0
          %4139 = vmatpush2.msra.mxu0 %v4067
          %4140 = vmatprep.subr.mxu0 0.0
          %4141 = vmatpush2.msra.mxu0 %v4066
          %4142 = vmatprep.subr.mxu0 0.0
          %4143 = vmatpush2.msra.mxu0 %v4065
          %4144 = vmatprep.subr.mxu0 0.0
          %4145 = vmatpush2.msra.mxu0 %v4064
          %4146 = vmatprep.subr.mxu0 0.0
          %4147 = vmatpush2.msra.mxu0 %v4063
          %4148 = vmatprep.subr.mxu0 0.0
          %4149 = vmatpush2.msra.mxu0 %v4062
          %4150 = vmatprep.subr.mxu0 0.0
          %4151 = vmatpush2.msra.mxu0 %v4061
          %4152 = vmatprep.mubr.f32.mxu0 %v4085
          %4153 = vmatmul.mubr.f32.gmra.mxu0 %v4084
          %v4154 = vpop.f32.mrf.mxu0
          %v4155 = vadd.f32 0.0, %v4154
          %v4156 = vpop.f32.mrf.mxu0
          %4157 = vdwg.mxu0
          %vm4158 = vcmask 74752
          %4159 = vst.msk [vmem:[%s302] sm:$0x3] %vm4158, %v4155
        $region52: #{cnn_forward.1} parent=39 // pred_fallthru
          _
        %p4160 = scmp.lt.s32.totalorder %s23, 1
        %s4161 = scalar_select %p4160, %s23, 1
        %s4162 = smul.addr %s4161, 2
        %s4163 = scalar_lea.vmem %s5, %s4162
        // Predicated region
        $region53: #{cnn_forward.1} parent=39 // pred_check
          %p4164 = pneg %p171
        $region54: #{cnn_forward.1} parent=39 // pred_check_branch
          %4166 = sbr.rel (%p4164) target = $region56
        $region55: #{cnn_forward.1} parent=39 // pred_region
          _
        $region56: #{cnn_forward.1} parent=39 // pred_fallthru
          _
      $region40: #{cnn_forward.1} parent=5 // pred_fallthru
        _
      %p4167 = scmp.le.s32.totalorder 2, %s14
      // Predicated region
      $region57: #{cnn_forward.1} parent=5 // pred_check
        %p4168 = pneg %p4167
      $region58: #{cnn_forward.1} parent=5 // pred_check_branch
        %4170 = sbr.rel (%p4168) target = $region60
      $region59: #{cnn_forward.1} parent=5 // pred_region
        %s4171 = ssub.s32 %s14, 2
        // Predicated region
        $region61: #{cnn_forward.1} parent=59 // pred_check
          %p4172 = pneg %p177
        $region62: #{cnn_forward.1} parent=59 // pred_check_branch
          %4174 = sbr.rel (%p4172) target = $region64
        $region63: #{cnn_forward.1} parent=59 // pred_region
          %p4175 = scmp.lt.s32.totalorder %s25, 1
          %s4176 = scalar_select %p4175, %s25, 1
          %s4177 = smul.addr %s4176, 2
          %s4178 = scalar_lea.vmem %s5, %s4177
        $region64: #{cnn_forward.1} parent=59 // pred_fallthru
          _
      $region60: #{cnn_forward.1} parent=5 // pred_fallthru
        _
    $region6: #{cnn_forward.1} parent=1 // loop_footer
      %s18 = sadd.s32 1, %s14
    $region7: #{cnn_forward.1} parent=1 // loop_footer_branch
      %13 = sbr.rel target = $region3
    $region8: #{cnn_forward.1} parent=1 // loop_exit
      _
    %4179 = vsyncpa [#allocation5], 1
    %s4180 = scalar_lea.sflag [#allocation5], 1
    %4181 = vsyncpa %s4180, 1

</llo_original>
